<compile_context>
chip_gen: v5e
topology: v5e:2x2
jax: 0.10.0
libtpu: 0.0.40
codegen_flags: <defaults>
</compile_context>

<pallas_src>
import functools

import jax
import jax.numpy as jnp
from jax.experimental import pallas as pl
from jax.experimental.pallas import tpu as pltpu


_TK_MAX = 4096   # K (Din) tile cap: streams We1 behind compute, fits v7x VMEM


def _round_up(x, m):
    return ((x + m - 1) // m) * m


def _bm_cap():
    # v6e/v7x MXUs are 256 wide -> prefer 256-row batch tiles; keep 128 on v5e.
    try:
        kind = jax.devices()[0].device_kind.lower()
    except Exception:
        return 256
    if "v5 lite" in kind or "v5e" in kind or "v5litepod" in kind:
        return 128
    return 256


def _vmem_limit_bytes(bm, tk, dh1, dh, dp1, dout, nbuf_w):
    f32, bf16 = 4, 2
    need = (
        2 * bm * tk * f32                                      # x tile (double-buffered, f32)
        + 2 * tk * dh1 * bf16                                  # We1 tile (double-buffered, bf16)
        + nbuf_w * (dh1 * dh + dh * dp1 + dp1 * dout) * bf16   # resident bf16 weights
        + nbuf_w * (dh1 + dh + dp1 + dout) * f32               # resident f32 biases
        + 2 * bm * dout * f32                                  # output tile
        + bm * dh1 * f32                                       # layer-1 accumulator scratch
    )
    # Headroom, floored at the v6e default, capped under v7x physical VMEM.
    return int(min(max(need * 13 // 10 + (4 << 20), 32 << 20), 64 << 20))


# ---------------------------------------------------------------------------
# Single fused kernel, grid = (batch tiles, K tiles over Din):
#   acc += x_tile @ We1_tile                      (bf16 MXU operands, f32 acc)
#   at the last K step:
#     H1  = tanh(acc + be1)        (bm, S*hidden)
#     H   = H1 @ We2 + be2         (bm, S*h_dim)   block-diag encoder heads
#     P1  = tanh(H @ Wp1 + bp1)    (bm, S*hidden)  block-diag posterior layer 1
#     OUT = P1 @ Wp2 + bp2         (bm, Dout_pad)  block-diag posterior heads
# ---------------------------------------------------------------------------
def _fused_s0_kernel(x_ref, we1_ref, be1_ref, we2_ref, be2_ref,
                     wp1_ref, bp1_ref, wp2_ref, bp2_ref, o_ref, acc_ref):
    k = pl.program_id(1)

    @pl.when(k == 0)
    def _():
        acc_ref[...] = jnp.zeros_like(acc_ref)

    acc_ref[...] += jnp.dot(x_ref[...].astype(jnp.bfloat16), we1_ref[...],
                            preferred_element_type=jnp.float32)

    @pl.when(k == pl.num_programs(1) - 1)
    def _():
        # tanh / bias adds stay f32 (no bf16 VPU/EUP on v5e); only MXU operands
        # are cast to bf16, accumulation is f32.
        h1 = jnp.tanh(acc_ref[...] + be1_ref[...])
        h = jnp.dot(h1.astype(jnp.bfloat16), we2_ref[...],
                    preferred_element_type=jnp.float32) + be2_ref[...]
        p1 = jnp.tanh(jnp.dot(h.astype(jnp.bfloat16), wp1_ref[...],
                              preferred_element_type=jnp.float32) + bp1_ref[...])
        out = jnp.dot(p1.astype(jnp.bfloat16), wp2_ref[...],
                      preferred_element_type=jnp.float32) + bp2_ref[...]
        o_ref[...] = out.astype(o_ref.dtype)


@functools.partial(jax.jit, static_argnames=("bm", "single_buffer_weights"))
def fused_s0(x_flat, we1, be1, we2, be2, wp1, bp1, wp2, bp2, *,
             bm, single_buffer_weights):
    """x_flat: (B, Din) f32; packed weights produced by BaseSSM._pack_params."""
    B, Din = x_flat.shape
    din_pad, dh1 = we1.shape      # Din padded to a multiple of tk, S*hidden
    dh = we2.shape[1]             # S*h_dim
    dp1 = wp1.shape[1]            # S*hidden
    dout = wp2.shape[1]           # sum(s_dims) padded to a multiple of 128

    # We1's rows were zero-padded at pack time; match x (no batch padding —
    # ragged batch edge tiles are masked by the pipeline).
    if din_pad != Din:
        x_flat = jnp.pad(x_flat, ((0, 0), (0, din_pad - Din)))
    tk = min(din_pad, _TK_MAX)
    num_k = din_pad // tk

    grid = (pl.cdiv(B, bm), num_k)
    nbuf_w = 1 if single_buffer_weights else 2

    def const_spec(shape):
        zero = (0,) * len(shape)
        if single_buffer_weights:
            # These blocks never change across the grid: single-buffer them to
            # halve their resident VMEM (matters most on v7x's 64 MiB).
            return pl.BlockSpec(shape, lambda i, k: zero,
                                pipeline_mode=pl.Buffered(1))
        return pl.BlockSpec(shape, lambda i, k: zero)

    return pl.pallas_call(
        _fused_s0_kernel,
        out_shape=jax.ShapeDtypeStruct((B, dout), jnp.float32),
        grid_spec=pltpu.PrefetchScalarGridSpec(
            num_scalar_prefetch=0,
            grid=grid,
            in_specs=[
                pl.BlockSpec((bm, tk), lambda i, k: (i, k)),    # x   : (batch, K) tiled
                pl.BlockSpec((tk, dh1), lambda i, k: (k, 0)),   # We1 : streamed over K
                const_spec((1, dh1)),                           # be1
                const_spec((dh1, dh)),                          # We2 (block-diag)
                const_spec((1, dh)),                            # be2
                const_spec((dh, dp1)),                          # Wp1 (h rows, block-diag)
                const_spec((1, dp1)),                           # bp1
                const_spec((dp1, dout)),                        # Wp2 (block-diag, lane-padded)
                const_spec((1, dout)),                          # bp2
            ],
            out_specs=pl.BlockSpec((bm, dout), lambda i, k: (i, 0)),
            scratch_shapes=[pltpu.VMEM((bm, dh1), jnp.float32)],
        ),
        compiler_params=pltpu.CompilerParams(
            dimension_semantics=("parallel", "arbitrary"),
            vmem_limit_bytes=_vmem_limit_bytes(bm, tk, dh1, dh, dp1, dout, nbuf_w),
        ),
    )(x_flat, we1, be1, we2, be2, wp1, bp1, wp2, bp2)


# ---------------------------------------------------------------------------
# Deterministic parameter construction (synthetic weights, no checkpoint)
# ---------------------------------------------------------------------------
def _init_mlp(key, d_in, d_hid, d_out):
    k1, k2 = jax.random.split(key)
    w1 = jax.random.normal(k1, (d_in, d_hid), jnp.float32) * (1.0 / jnp.sqrt(d_in))
    b1 = jnp.zeros((1, d_hid), jnp.float32)
    w2 = jax.random.normal(k2, (d_hid, d_out), jnp.float32) * (1.0 / jnp.sqrt(d_hid))
    b2 = jnp.zeros((1, d_out), jnp.float32)
    return (w1, b1, w2, b2)


class BaseSSM:
    """JAX/Pallas counterpart of `Base` with concrete encoder/posterior mean heads."""

    def __init__(self, key, *, x_dim, h_dim, a_dim, s_dims, hidden=128):
        self.x_dim = x_dim
        self.h_dim = h_dim
        self.a_dim = a_dim
        self.s_dims = list(s_dims)
        self.num_states = len(self.s_dims)
        self.hidden = hidden

        keys = jax.random.split(key, 2 * self.num_states)
        self.encoders = []
        self.posteriors = []
        for i in range(self.num_states):
            # encoder_i : x -> h  (mean head)
            self.encoders.append(_init_mlp(keys[2 * i], x_dim, hidden, h_dim))
            # posterior_i : [s_prev_i, h_i, a, s_0..s_{i-1}] -> s_i  (mean head)
            d_in = self.s_dims[i] + h_dim + a_dim + sum(self.s_dims[:i])
            self.posteriors.append(
                _init_mlp(keys[2 * i + 1], d_in, hidden, self.s_dims[i]))

        self._bm_cap = _bm_cap()
        self._use_buffered = None       # decided on the first kernel call
        self._pack_params()

    def _pack_params(self):
        h_dim = self.h_dim
        # Encoder layer 1: all states share the same x input -> stack along N.
        we1 = jnp.concatenate([e[0] for e in self.encoders], axis=1)       # (Din, S*hidden)
        be1 = jnp.concatenate([e[1] for e in self.encoders], axis=1)       # (1, S*hidden)
        # Encoder mean heads: block-diagonal (off-diagonal zeros contribute nothing).
        we2 = jax.scipy.linalg.block_diag(*[e[2] for e in self.encoders])  # (S*hidden, S*h_dim)
        be2 = jnp.concatenate([e[3] for e in self.encoders], axis=1)       # (1, S*h_dim)
        # Posterior layer 1: in sample_s0 the s_prev / a / s_pad inputs are all zero,
        # so only the `h` rows of W1 matter (input order: [s_prev_i, h_i, a, s_<i]).
        wp1_blocks = [p[0][self.s_dims[i]: self.s_dims[i] + h_dim, :]
                      for i, p in enumerate(self.posteriors)]
        wp1 = jax.scipy.linalg.block_diag(*wp1_blocks)                     # (S*h_dim, S*hidden)
        bp1 = jnp.concatenate([p[1] for p in self.posteriors], axis=1)     # (1, S*hidden)
        # Posterior mean heads: block-diagonal, zero-padded to a lane-dense 128 multiple.
        wp2 = jax.scipy.linalg.block_diag(*[p[2] for p in self.posteriors])
        bp2 = jnp.concatenate([p[3] for p in self.posteriors], axis=1)
        dout = sum(self.s_dims)
        dout_pad = _round_up(dout, 128)
        if dout_pad != dout:
            wp2 = jnp.pad(wp2, ((0, 0), (0, dout_pad - dout)))
            bp2 = jnp.pad(bp2, ((0, 0), (0, dout_pad - dout)))

        # Pad We1's rows so Din is a multiple of the K tile (x is zero-padded to
        # match inside fused_s0 — padded rows/cols contribute nothing).
        din = self.x_dim
        tk = _round_up(din, 128) if din <= _TK_MAX else _TK_MAX
        din_pad = _round_up(din, tk)
        if din_pad != din:
            we1 = jnp.pad(we1, ((0, din_pad - din), (0, 0)))

        # bf16 weights feed the MXU natively and halve HBM->VMEM weight traffic;
        # biases stay f32 so tanh/bias VPU math is f32 on every generation.
        bf16 = jnp.bfloat16
        self._packed = (we1.astype(bf16), be1, we2.astype(bf16), be2,
                        wp1.astype(bf16), bp1, wp2.astype(bf16), bp2)

    def _choose_bm(self, B):
        bm = min(_round_up(B, 8), self._bm_cap)
        # Give the "parallel" batch axis >=2 tiles when B allows so v7x's two
        # TensorCores both get work.
        if B > 8 and pl.cdiv(B, bm) < 2:
            bm = max(8, _round_up(pl.cdiv(B, 2), 8))
        return bm

    def _run_fused(self, x_flat, bm):
        modes = ((True, False) if self._use_buffered is None
                 else (self._use_buffered,))
        last_err = None
        for sb in modes:
            try:
                out = fused_s0(x_flat, *self._packed, bm=bm,
                               single_buffer_weights=sb)
                self._use_buffered = sb
                return out
            except Exception as err:   # pl.Buffered(1) unsupported -> default specs
                last_err = err
        raise last_err

    # Mirrors `_sample_s0`: s_prev and a_list are zeros, means only.
    def sample_s0(self, x0, train=False):
        B = x0.shape[0]
        x_flat = jnp.reshape(x0, (B, -1)).astype(jnp.float32)   # NCHW -> (B, C*H*W)
        out = self._run_fused(x_flat, self._choose_bm(B))        # (B, dout_pad)
        s_t, off = [], 0
        for d in self.s_dims:
            s_t.append(out[:, off:off + d])
            off += d
        return s_t

    # Pure-JAX f32 reference that literally mirrors the PyTorch `_sample_s0`
    # (zero concatenation included) — used only for the correctness check.
    def reference_sample_s0(self, x0):
        B = x0.shape[0]
        x_flat = jnp.reshape(x0, (B, -1)).astype(jnp.float32)
        s_t = []
        for i in range(self.num_states):
            w1, b1, w2, b2 = self.encoders[i]
            h = jnp.tanh(x_flat @ w1 + b1) @ w2 + b2
            s_prev = jnp.zeros((B, self.s_dims[i]), jnp.float32)
            a_list = [jnp.zeros((B, self.a_dim), jnp.float32)] + [
                jnp.zeros((B, d), jnp.float32) for d in self.s_dims[:i]]
            post_in = jnp.concatenate([s_prev, h] + a_list, axis=-1)
            pw1, pb1, pw2, pb2 = self.posteriors[i]
            s_t.append(jnp.tanh(post_in @ pw1 + pb1) @ pw2 + pb2)
        return s_t


# ---------------------------------------------------------------------------
if __name__ == "__main__":
    key = jax.random.PRNGKey(0)
    k_param, k_x = jax.random.split(key)

    # Small shapes consistent with the module: x0 is a video frame (NCHW).
    B, C, H, W = 2, 4, 16, 16
    s_dims = [32, 32]
    a_dim = 8
    h_dim = 64

    model = BaseSSM(
        k_param,
        x_dim=C * H * W,
        h_dim=h_dim,
        a_dim=a_dim,
        s_dims=s_dims,
        hidden=128,
    )

    x0 = jax.random.normal(k_x, (B, C, H, W), jnp.float32)

    s_t = model.sample_s0(x0, train=False)
    s_t = [jax.block_until_ready(s) for s in s_t]

    assert len(s_t) == len(s_dims)
    ref = model.reference_sample_s0(x0)
    for s, r, d in zip(s_t, ref, s_dims):
        assert s.shape == (B, d), (s.shape, (B, d))
        assert bool(jnp.all(jnp.isfinite(s)))
        assert bool(jnp.allclose(s, r, rtol=5e-2, atol=5e-2)), "mismatch vs reference"

    print("KERNEL_OK")
</pallas_src>

<mosaic_0001>
module attributes {stable_mosaic.version = 11 : i64} {
  func.func @_fused_s0_kernel(%arg0: i32, %arg1: i32, %arg2: memref<8x1024xf32, #tpu.memory_space<vmem>>, %arg3: memref<1024x256xbf16, #tpu.memory_space<vmem>>, %arg4: memref<1x256xf32, #tpu.memory_space<vmem>>, %arg5: memref<256x128xbf16, #tpu.memory_space<vmem>>, %arg6: memref<1x128xf32, #tpu.memory_space<vmem>>, %arg7: memref<128x256xbf16, #tpu.memory_space<vmem>>, %arg8: memref<1x256xf32, #tpu.memory_space<vmem>>, %arg9: memref<256x128xbf16, #tpu.memory_space<vmem>>, %arg10: memref<1x128xf32, #tpu.memory_space<vmem>>, %arg11: memref<8x128xf32, #tpu.memory_space<vmem>>, %arg12: memref<8x256xf32, #tpu.memory_space<vmem>>) attributes {dimension_semantics = [#tpu.dimension_semantics<parallel>, #tpu.dimension_semantics<arbitrary>], iteration_bounds = array<i64: 1, 1>, scalar_prefetch = 0 : i64, scratch_operands = 1 : i64, tpu.core_type = #tpu.core_type<tc>, window_params = [{transform_indices = @transform_0, window_bounds = array<i64: 8, 1024>}, {transform_indices = @transform_1, window_bounds = array<i64: 1024, 256>}, {pipeline_mode = #tpu.pipeline_mode<synchronous>, transform_indices = @transform_2, window_bounds = array<i64: 1, 256>}, {pipeline_mode = #tpu.pipeline_mode<synchronous>, transform_indices = @transform_3, window_bounds = array<i64: 256, 128>}, {pipeline_mode = #tpu.pipeline_mode<synchronous>, transform_indices = @transform_4, window_bounds = array<i64: 1, 128>}, {pipeline_mode = #tpu.pipeline_mode<synchronous>, transform_indices = @transform_5, window_bounds = array<i64: 128, 256>}, {pipeline_mode = #tpu.pipeline_mode<synchronous>, transform_indices = @transform_6, window_bounds = array<i64: 1, 256>}, {pipeline_mode = #tpu.pipeline_mode<synchronous>, transform_indices = @transform_7, window_bounds = array<i64: 256, 128>}, {pipeline_mode = #tpu.pipeline_mode<synchronous>, transform_indices = @transform_8, window_bounds = array<i64: 1, 128>}, {transform_indices = @transform_9, window_bounds = array<i64: 8, 128>}]} {
    %c0_i32 = arith.constant 0 : i32
    %0 = arith.cmpi eq, %arg1, %c0_i32 : i32
    %1 = arith.extui %0 : i1 to i32
    %c0_i32_0 = arith.constant 0 : i32
    %2 = arith.cmpi ne, %1, %c0_i32_0 : i32
    scf.if %2 {
      %cst_10 = arith.constant 0.000000e+00 : f32
      %13 = vector.broadcast %cst_10 : f32 to vector<8x256xf32>
      %c0_11 = arith.constant 0 : index
      %c0_12 = arith.constant 0 : index
      %14 = vector.load %arg12[%c0_11, %c0_12] : memref<8x256xf32, #tpu.memory_space<vmem>>, vector<8x256xf32>
      tpu.vector_store %arg12[%c0_11, %c0_12], %13 {strides = array<i32>} : memref<8x256xf32, #tpu.memory_space<vmem>>, vector<8x256xf32>,
    } else {
    }
    %c0 = arith.constant 0 : index
    %c0_1 = arith.constant 0 : index
    %3 = vector.load %arg12[%c0, %c0_1] : memref<8x256xf32, #tpu.memory_space<vmem>>, vector<8x256xf32>
    %c0_2 = arith.constant 0 : index
    %c0_3 = arith.constant 0 : index
    %4 = vector.load %arg2[%c0_2, %c0_3] : memref<8x1024xf32, #tpu.memory_space<vmem>>, vector<8x1024xf32>
    %5 = arith.truncf %4 : vector<8x1024xf32> to vector<8x1024xbf16>
    %c0_4 = arith.constant 0 : index
    %c0_5 = arith.constant 0 : index
    %6 = vector.load %arg3[%c0_4, %c0_5] : memref<1024x256xbf16, #tpu.memory_space<vmem>>, vector<1024x256xbf16>
    %cst = arith.constant dense<0.000000e+00> : vector<8x256xf32>
    %7 = tpu.matmul %5, %6, %cst {dimension_numbers = #tpu.dot_dimension_numbers<[1], [0], [0], [1], [0, 0, 1, 1], [], []>} : vector<8x1024xbf16>, vector<1024x256xbf16>, vector<8x256xf32> -> vector<8x256xf32>
    %8 = arith.addf %3, %7 : vector<8x256xf32>
    %c0_6 = arith.constant 0 : index
    %c0_7 = arith.constant 0 : index
    %9 = vector.load %arg12[%c0_6, %c0_7] : memref<8x256xf32, #tpu.memory_space<vmem>>, vector<8x256xf32>
    tpu.vector_store %arg12[%c0_6, %c0_7], %8 {strides = array<i32>} : memref<8x256xf32, #tpu.memory_space<vmem>>, vector<8x256xf32>,
    %c0_i32_8 = arith.constant 0 : i32
    %10 = arith.cmpi eq, %arg1, %c0_i32_8 : i32
    %11 = arith.extui %10 : i1 to i32
    %c0_i32_9 = arith.constant 0 : i32
    %12 = arith.cmpi ne, %11, %c0_i32_9 : i32
    scf.if %12 {
      %c0_10 = arith.constant 0 : index
      %c0_11 = arith.constant 0 : index
      %13 = vector.load %arg12[%c0_10, %c0_11] : memref<8x256xf32, #tpu.memory_space<vmem>>, vector<8x256xf32>
      %c0_12 = arith.constant 0 : index
      %c0_13 = arith.constant 0 : index
      %14 = vector.load %arg4[%c0_12, %c0_13] : memref<1x256xf32, #tpu.memory_space<vmem>>, vector<1x256xf32>
      %15 = vector.broadcast %14 : vector<1x256xf32> to vector<8x256xf32>
      %16 = arith.addf %13, %15 : vector<8x256xf32>
      %17 = math.tanh %16 : vector<8x256xf32>
      %18 = arith.truncf %17 : vector<8x256xf32> to vector<8x256xbf16>
      %c0_14 = arith.constant 0 : index
      %c0_15 = arith.constant 0 : index
      %19 = vector.load %arg5[%c0_14, %c0_15] : memref<256x128xbf16, #tpu.memory_space<vmem>>, vector<256x128xbf16>
      %cst_16 = arith.constant dense<0.000000e+00> : vector<8x128xf32>
      %20 = tpu.matmul %18, %19, %cst_16 {dimension_numbers = #tpu.dot_dimension_numbers<[1], [0], [0], [1], [0, 0, 1, 1], [], []>} : vector<8x256xbf16>, vector<256x128xbf16>, vector<8x128xf32> -> vector<8x128xf32>
      %c0_17 = arith.constant 0 : index
      %c0_18 = arith.constant 0 : index
      %21 = vector.load %arg6[%c0_17, %c0_18] : memref<1x128xf32, #tpu.memory_space<vmem>>, vector<1x128xf32>
      %22 = vector.broadcast %21 : vector<1x128xf32> to vector<8x128xf32>
      %23 = arith.addf %20, %22 : vector<8x128xf32>
      %24 = arith.truncf %23 : vector<8x128xf32> to vector<8x128xbf16>
      %c0_19 = arith.constant 0 : index
      %c0_20 = arith.constant 0 : index
      %25 = vector.load %arg7[%c0_19, %c0_20] : memref<128x256xbf16, #tpu.memory_space<vmem>>, vector<128x256xbf16>
      %cst_21 = arith.constant dense<0.000000e+00> : vector<8x256xf32>
      %26 = tpu.matmul %24, %25, %cst_21 {dimension_numbers = #tpu.dot_dimension_numbers<[1], [0], [0], [1], [0, 0, 1, 1], [], []>} : vector<8x128xbf16>, vector<128x256xbf16>, vector<8x256xf32> -> vector<8x256xf32>
      %c0_22 = arith.constant 0 : index
      %c0_23 = arith.constant 0 : index
      %27 = vector.load %arg8[%c0_22, %c0_23] : memref<1x256xf32, #tpu.memory_space<vmem>>, vector<1x256xf32>
      %28 = vector.broadcast %27 : vector<1x256xf32> to vector<8x256xf32>
      %29 = arith.addf %26, %28 : vector<8x256xf32>
      %30 = math.tanh %29 : vector<8x256xf32>
      %31 = arith.truncf %30 : vector<8x256xf32> to vector<8x256xbf16>
      %c0_24 = arith.constant 0 : index
      %c0_25 = arith.constant 0 : index
      %32 = vector.load %arg9[%c0_24, %c0_25] : memref<256x128xbf16, #tpu.memory_space<vmem>>, vector<256x128xbf16>
      %cst_26 = arith.constant dense<0.000000e+00> : vector<8x128xf32>
      %33 = tpu.matmul %31, %32, %cst_26 {dimension_numbers = #tpu.dot_dimension_numbers<[1], [0], [0], [1], [0, 0, 1, 1], [], []>} : vector<8x256xbf16>, vector<256x128xbf16>, vector<8x128xf32> -> vector<8x128xf32>
      %c0_27 = arith.constant 0 : index
      %c0_28 = arith.constant 0 : index
      %34 = vector.load %arg10[%c0_27, %c0_28] : memref<1x128xf32, #tpu.memory_space<vmem>>, vector<1x128xf32>
      %35 = vector.broadcast %34 : vector<1x128xf32> to vector<8x128xf32>
      %36 = arith.addf %33, %35 : vector<8x128xf32>
      %c0_29 = arith.constant 0 : index
      %c0_30 = arith.constant 0 : index
      %37 = vector.load %arg11[%c0_29, %c0_30] : memref<8x128xf32, #tpu.memory_space<vmem>>, vector<8x128xf32>
      tpu.vector_store %arg11[%c0_29, %c0_30], %36 {strides = array<i32>} : memref<8x128xf32, #tpu.memory_space<vmem>>, vector<8x128xf32>,
    } else {
    }
    return
  }
  func.func @transform_0(%arg0: i32, %arg1: i32) -> (i32, i32) {
    %c0_i32 = arith.constant 0 : i32
    return %arg0, %arg1 : i32, i32
  }
  func.func @transform_1(%arg0: i32, %arg1: i32) -> (i32, i32) {
    %c0_i32 = arith.constant 0 : i32
    %c0_i32_0 = arith.constant 0 : i32
    return %arg1, %c0_i32 : i32, i32
  }
  func.func @transform_2(%arg0: i32, %arg1: i32) -> (i32, i32) {
    %c0_i32 = arith.constant 0 : i32
    %c0_i32_0 = arith.constant 0 : i32
    %c0_i32_1 = arith.constant 0 : i32
    return %c0_i32, %c0_i32_0 : i32, i32
  }
  func.func @transform_3(%arg0: i32, %arg1: i32) -> (i32, i32) {
    %c0_i32 = arith.constant 0 : i32
    %c0_i32_0 = arith.constant 0 : i32
    %c0_i32_1 = arith.constant 0 : i32
    return %c0_i32, %c0_i32_0 : i32, i32
  }
  func.func @transform_4(%arg0: i32, %arg1: i32) -> (i32, i32) {
    %c0_i32 = arith.constant 0 : i32
    %c0_i32_0 = arith.constant 0 : i32
    %c0_i32_1 = arith.constant 0 : i32
    return %c0_i32, %c0_i32_0 : i32, i32
  }
  func.func @transform_5(%arg0: i32, %arg1: i32) -> (i32, i32) {
    %c0_i32 = arith.constant 0 : i32
    %c0_i32_0 = arith.constant 0 : i32
    %c0_i32_1 = arith.constant 0 : i32
    return %c0_i32, %c0_i32_0 : i32, i32
  }
  func.func @transform_6(%arg0: i32, %arg1: i32) -> (i32, i32) {
    %c0_i32 = arith.constant 0 : i32
    %c0_i32_0 = arith.constant 0 : i32
    %c0_i32_1 = arith.constant 0 : i32
    return %c0_i32, %c0_i32_0 : i32, i32
  }
  func.func @transform_7(%arg0: i32, %arg1: i32) -> (i32, i32) {
    %c0_i32 = arith.constant 0 : i32
    %c0_i32_0 = arith.constant 0 : i32
    %c0_i32_1 = arith.constant 0 : i32
    return %c0_i32, %c0_i32_0 : i32, i32
  }
  func.func @transform_8(%arg0: i32, %arg1: i32) -> (i32, i32) {
    %c0_i32 = arith.constant 0 : i32
    %c0_i32_0 = arith.constant 0 : i32
    %c0_i32_1 = arith.constant 0 : i32
    return %c0_i32, %c0_i32_0 : i32, i32
  }
  func.func @transform_9(%arg0: i32, %arg1: i32) -> (i32, i32) {
    %c0_i32 = arith.constant 0 : i32
    %c0_i32_0 = arith.constant 0 : i32
    return %arg0, %c0_i32 : i32, i32
  }
}

module attributes {stable_mosaic.version = 11 : i64} {
  func.func @_fused_s0_kernel(%arg0: i32, %arg1: i32, %arg2: memref<8x1024xf32, #tpu.memory_space<vmem>>, %arg3: memref<1024x256xbf16, #tpu.memory_space<vmem>>, %arg4: memref<1x256xf32, #tpu.memory_space<vmem>>, %arg5: memref<256x128xbf16, #tpu.memory_space<vmem>>, %arg6: memref<1x128xf32, #tpu.memory_space<vmem>>, %arg7: memref<128x256xbf16, #tpu.memory_space<vmem>>, %arg8: memref<1x256xf32, #tpu.memory_space<vmem>>, %arg9: memref<256x128xbf16, #tpu.memory_space<vmem>>, %arg10: memref<1x128xf32, #tpu.memory_space<vmem>>, %arg11: memref<8x128xf32, #tpu.memory_space<vmem>>, %arg12: memref<8x256xf32, #tpu.memory_space<vmem>>) attributes {dimension_semantics = [#tpu.dimension_semantics<parallel>, #tpu.dimension_semantics<arbitrary>], iteration_bounds = array<i64: 1, 1>, scalar_prefetch = 0 : i64, scratch_operands = 1 : i64, tpu.core_type = #tpu.core_type<tc>, window_params = [{transform_indices = @transform_0, window_bounds = array<i64: 8, 1024>}, {transform_indices = @transform_1, window_bounds = array<i64: 1024, 256>}, {pipeline_mode = #tpu.pipeline_mode<synchronous>, transform_indices = @transform_2, window_bounds = array<i64: 1, 256>}, {pipeline_mode = #tpu.pipeline_mode<synchronous>, transform_indices = @transform_3, window_bounds = array<i64: 256, 128>}, {pipeline_mode = #tpu.pipeline_mode<synchronous>, transform_indices = @transform_4, window_bounds = array<i64: 1, 128>}, {pipeline_mode = #tpu.pipeline_mode<synchronous>, transform_indices = @transform_5, window_bounds = array<i64: 128, 256>}, {pipeline_mode = #tpu.pipeline_mode<synchronous>, transform_indices = @transform_6, window_bounds = array<i64: 1, 256>}, {pipeline_mode = #tpu.pipeline_mode<synchronous>, transform_indices = @transform_7, window_bounds = array<i64: 256, 128>}, {pipeline_mode = #tpu.pipeline_mode<synchronous>, transform_indices = @transform_8, window_bounds = array<i64: 1, 128>}, {transform_indices = @transform_9, window_bounds = array<i64: 8, 128>}]} {
    %c0_i32 = arith.constant 0 : i32
    %0 = arith.cmpi eq, %arg1, %c0_i32 : i32
    %1 = arith.extui %0 : i1 to i32
    %c0_i32_0 = arith.constant 0 : i32
    %2 = arith.cmpi ne, %1, %c0_i32_0 : i32
    scf.if %2 {
      %cst_10 = arith.constant 0.000000e+00 : f32
      %13 = vector.broadcast %cst_10 : f32 to vector<8x256xf32>
      %c0_11 = arith.constant 0 : index
      %c0_12 = arith.constant 0 : index
      %14 = vector.load %arg12[%c0_11, %c0_12] : memref<8x256xf32, #tpu.memory_space<vmem>>, vector<8x256xf32>
      tpu.vector_store %arg12[%c0_11, %c0_12], %13 {strides = array<i32>} : memref<8x256xf32, #tpu.memory_space<vmem>>, vector<8x256xf32>,
    } else {
    }
    %c0 = arith.constant 0 : index
    %c0_1 = arith.constant 0 : index
    %3 = vector.load %arg12[%c0, %c0_1] : memref<8x256xf32, #tpu.memory_space<vmem>>, vector<8x256xf32>
    %c0_2 = arith.constant 0 : index
    %c0_3 = arith.constant 0 : index
    %4 = vector.load %arg2[%c0_2, %c0_3] : memref<8x1024xf32, #tpu.memory_space<vmem>>, vector<8x1024xf32>
    %5 = arith.truncf %4 : vector<8x1024xf32> to vector<8x1024xbf16>
    %c0_4 = arith.constant 0 : index
    %c0_5 = arith.constant 0 : index
    %6 = vector.load %arg3[%c0_4, %c0_5] : memref<1024x256xbf16, #tpu.memory_space<vmem>>, vector<1024x256xbf16>
    %cst = arith.constant dense<0.000000e+00> : vector<8x256xf32>
    %7 = tpu.matmul %5, %6, %cst {dimension_numbers = #tpu.dot_dimension_numbers<[1], [0], [0], [1], [0, 0, 1, 1], [], []>} : vector<8x1024xbf16>, vector<1024x256xbf16>, vector<8x256xf32> -> vector<8x256xf32>
    %8 = arith.addf %3, %7 : vector<8x256xf32>
    %c0_6 = arith.constant 0 : index
    %c0_7 = arith.constant 0 : index
    %9 = vector.load %arg12[%c0_6, %c0_7] : memref<8x256xf32, #tpu.memory_space<vmem>>, vector<8x256xf32>
    tpu.vector_store %arg12[%c0_6, %c0_7], %8 {strides = array<i32>} : memref<8x256xf32, #tpu.memory_space<vmem>>, vector<8x256xf32>,
    %c0_i32_8 = arith.constant 0 : i32
    %10 = arith.cmpi eq, %arg1, %c0_i32_8 : i32
    %11 = arith.extui %10 : i1 to i32
    %c0_i32_9 = arith.constant 0 : i32
    %12 = arith.cmpi ne, %11, %c0_i32_9 : i32
    scf.if %12 {
      %c0_10 = arith.constant 0 : index
      %c0_11 = arith.constant 0 : index
      %13 = vector.load %arg12[%c0_10, %c0_11] : memref<8x256xf32, #tpu.memory_space<vmem>>, vector<8x256xf32>
      %c0_12 = arith.constant 0 : index
      %c0_13 = arith.constant 0 : index
      %14 = vector.load %arg4[%c0_12, %c0_13] : memref<1x256xf32, #tpu.memory_space<vmem>>, vector<1x256xf32>
      %15 = vector.broadcast %14 : vector<1x256xf32> to vector<8x256xf32>
      %16 = arith.addf %13, %15 : vector<8x256xf32>
      %17 = math.tanh %16 : vector<8x256xf32>
      %18 = arith.truncf %17 : vector<8x256xf32> to vector<8x256xbf16>
      %c0_14 = arith.constant 0 : index
      %c0_15 = arith.constant 0 : index
      %19 = vector.load %arg5[%c0_14, %c0_15] : memref<256x128xbf16, #tpu.memory_space<vmem>>, vector<256x128xbf16>
      %cst_16 = arith.constant dense<0.000000e+00> : vector<8x128xf32>
      %20 = tpu.matmul %18, %19, %cst_16 {dimension_numbers = #tpu.dot_dimension_numbers<[1], [0], [0], [1], [0, 0, 1, 1], [], []>} : vector<8x256xbf16>, vector<256x128xbf16>, vector<8x128xf32> -> vector<8x128xf32>
      %c0_17 = arith.constant 0 : index
      %c0_18 = arith.constant 0 : index
      %21 = vector.load %arg6[%c0_17, %c0_18] : memref<1x128xf32, #tpu.memory_space<vmem>>, vector<1x128xf32>
      %22 = vector.broadcast %21 : vector<1x128xf32> to vector<8x128xf32>
      %23 = arith.addf %20, %22 : vector<8x128xf32>
      %24 = arith.truncf %23 : vector<8x128xf32> to vector<8x128xbf16>
      %c0_19 = arith.constant 0 : index
      %c0_20 = arith.constant 0 : index
      %25 = vector.load %arg7[%c0_19, %c0_20] : memref<128x256xbf16, #tpu.memory_space<vmem>>, vector<128x256xbf16>
      %cst_21 = arith.constant dense<0.000000e+00> : vector<8x256xf32>
      %26 = tpu.matmul %24, %25, %cst_21 {dimension_numbers = #tpu.dot_dimension_numbers<[1], [0], [0], [1], [0, 0, 1, 1], [], []>} : vector<8x128xbf16>, vector<128x256xbf16>, vector<8x256xf32> -> vector<8x256xf32>
      %c0_22 = arith.constant 0 : index
      %c0_23 = arith.constant 0 : index
      %27 = vector.load %arg8[%c0_22, %c0_23] : memref<1x256xf32, #tpu.memory_space<vmem>>, vector<1x256xf32>
      %28 = vector.broadcast %27 : vector<1x256xf32> to vector<8x256xf32>
      %29 = arith.addf %26, %28 : vector<8x256xf32>
      %30 = math.tanh %29 : vector<8x256xf32>
      %31 = arith.truncf %30 : vector<8x256xf32> to vector<8x256xbf16>
      %c0_24 = arith.constant 0 : index
      %c0_25 = arith.constant 0 : index
      %32 = vector.load %arg9[%c0_24, %c0_25] : memref<256x128xbf16, #tpu.memory_space<vmem>>, vector<256x128xbf16>
      %cst_26 = arith.constant dense<0.000000e+00> : vector<8x128xf32>
      %33 = tpu.matmul %31, %32, %cst_26 {dimension_numbers = #tpu.dot_dimension_numbers<[1], [0], [0], [1], [0, 0, 1, 1], [], []>} : vector<8x256xbf16>, vector<256x128xbf16>, vector<8x128xf32> -> vector<8x128xf32>
      %c0_27 = arith.constant 0 : index
      %c0_28 = arith.constant 0 : index
      %34 = vector.load %arg10[%c0_27, %c0_28] : memref<1x128xf32, #tpu.memory_space<vmem>>, vector<1x128xf32>
      %35 = vector.broadcast %34 : vector<1x128xf32> to vector<8x128xf32>
      %36 = arith.addf %33, %35 : vector<8x128xf32>
      %c0_29 = arith.constant 0 : index
      %c0_30 = arith.constant 0 : index
      %37 = vector.load %arg11[%c0_29, %c0_30] : memref<8x128xf32, #tpu.memory_space<vmem>>, vector<8x128xf32>
      tpu.vector_store %arg11[%c0_29, %c0_30], %36 {strides = array<i32>} : memref<8x128xf32, #tpu.memory_space<vmem>>, vector<8x128xf32>,
    } else {
    }
    return
  }
  func.func @transform_0(%arg0: i32, %arg1: i32) -> (i32, i32) {
    %c0_i32 = arith.constant 0 : i32
    return %arg0, %arg1 : i32, i32
  }
  func.func @transform_1(%arg0: i32, %arg1: i32) -> (i32, i32) {
    %c0_i32 = arith.constant 0 : i32
    %c0_i32_0 = arith.constant 0 : i32
    return %arg1, %c0_i32 : i32, i32
  }
  func.func @transform_2(%arg0: i32, %arg1: i32) -> (i32, i32) {
    %c0_i32 = arith.constant 0 : i32
    %c0_i32_0 = arith.constant 0 : i32
    %c0_i32_1 = arith.constant 0 : i32
    return %c0_i32, %c0_i32_0 : i32, i32
  }
  func.func @transform_3(%arg0: i32, %arg1: i32) -> (i32, i32) {
    %c0_i32 = arith.constant 0 : i32
    %c0_i32_0 = arith.constant 0 : i32
    %c0_i32_1 = arith.constant 0 : i32
    return %c0_i32, %c0_i32_0 : i32, i32
  }
  func.func @transform_4(%arg0: i32, %arg1: i32) -> (i32, i32) {
    %c0_i32 = arith.constant 0 : i32
    %c0_i32_0 = arith.constant 0 : i32
    %c0_i32_1 = arith.constant 0 : i32
    return %c0_i32, %c0_i32_0 : i32, i32
  }
  func.func @transform_5(%arg0: i32, %arg1: i32) -> (i32, i32) {
    %c0_i32 = arith.constant 0 : i32
    %c0_i32_0 = arith.constant 0 : i32
    %c0_i32_1 = arith.constant 0 : i32
    return %c0_i32, %c0_i32_0 : i32, i32
  }
  func.func @transform_6(%arg0: i32, %arg1: i32) -> (i32, i32) {
    %c0_i32 = arith.constant 0 : i32
    %c0_i32_0 = arith.constant 0 : i32
    %c0_i32_1 = arith.constant 0 : i32
    return %c0_i32, %c0_i32_0 : i32, i32
  }
  func.func @transform_7(%arg0: i32, %arg1: i32) -> (i32, i32) {
    %c0_i32 = arith.constant 0 : i32
    %c0_i32_0 = arith.constant 0 : i32
    %c0_i32_1 = arith.constant 0 : i32
    return %c0_i32, %c0_i32_0 : i32, i32
  }
  func.func @transform_8(%arg0: i32, %arg1: i32) -> (i32, i32) {
    %c0_i32 = arith.constant 0 : i32
    %c0_i32_0 = arith.constant 0 : i32
    %c0_i32_1 = arith.constant 0 : i32
    return %c0_i32, %c0_i32_0 : i32, i32
  }
  func.func @transform_9(%arg0: i32, %arg1: i32) -> (i32, i32) {
    %c0_i32 = arith.constant 0 : i32
    %c0_i32_0 = arith.constant 0 : i32
    return %arg0, %c0_i32 : i32, i32
  }
}

</mosaic_0001>

<llo_original>
// kernel: fused_s0.1
$region0: #{fused_s0.1}
  #allocation0 [shape = 'u32[]', space=smem, size = 0x4, offset = 0x4, fixed_abs, tag = 'smem constant byte address 0x4 - core index']
  #allocation1 [shape = 'u32[72,128]{1,0:T(1,128)}', space=vmem, size = 0x9000, scoped, tag = 'internal scratch']
  #allocation2 [shape = 'f32[8,256]{1,0:T(8,128)}', space=vmem, size = 0x2000, scoped, tag = 'scratch operand']
  %s0 = inlined_call_operand.hbm [shape: f32[2,1024], index: 0, kind: input, shape index: {}]
  %s1 = inlined_call_operand.hbm [shape: bf16[1024,256], index: 1, kind: input, shape index: {}]
  %s2 = inlined_call_operand.hbm [shape: f32[1,256], index: 2, kind: input, shape index: {}]
  %s3 = inlined_call_operand.hbm [shape: bf16[256,128], index: 3, kind: input, shape index: {}]
  %s4 = inlined_call_operand.vmem [shape: f32[1,128], index: 4, kind: input, shape index: {}]
  %s5 = inlined_call_operand.hbm [shape: bf16[128,256], index: 5, kind: input, shape index: {}]
  %s6 = inlined_call_operand.vmem [shape: f32[1,256], index: 6, kind: input, shape index: {}]
  %s7 = inlined_call_operand.hbm [shape: bf16[256,128], index: 7, kind: input, shape index: {}]
  %s8 = inlined_call_operand.vmem [shape: f32[1,128], index: 8, kind: input, shape index: {}]
  %s9 = inlined_call_operand.hbm [shape: f32[2,128], index: 9, kind: output, shape index: {}]
  %s10 = sld [smem:[#allocation0]]
  $region78: #{fused_s0.1} parent=0
    _
  %s12 = ssub.s32 1, %s10
  %s13 = scalar_select 0, %s12, %s10
  $region1: #{fused_s0.1} parent=0
    #allocation3 [shape = 'u8[32768]{0}', space=vmem, size = 0x8000, scoped, tag = 'input window, operand 0, single buffered']
    #allocation4 [shape = 's32[1]{0}', space=sflag, size = 0x4, scoped, tag = 'scoped memory for fused_s0.1']
    #allocation5 [shape = 's32[1]{0}', space=sflag, size = 0x4, scoped, tag = 'scoped memory for fused_s0.1']
    #allocation6 [shape = 'u8[524288]{0}', space=vmem, size = 0x80000, scoped, tag = 'input window, operand 1, single buffered']
    #allocation7 [shape = 's32[1]{0}', space=sflag, size = 0x4, scoped, tag = 'scoped memory for fused_s0.1']
    #allocation8 [shape = 'u8[1024]{0}', space=vmem, size = 0x400, scoped, tag = 'input window, operand 2, single buffered']
    #allocation9 [shape = 'u8[65536]{0}', space=vmem, size = 0x10000, scoped, tag = 'input window, operand 3, single buffered']
    #allocation10 [shape = 's32[1]{0}', space=sflag, size = 0x4, scoped, tag = 'scoped memory for fused_s0.1']
    #allocation11 [shape = 'u8[65536]{0}', space=vmem, size = 0x10000, scoped, tag = 'input window, operand 5, single buffered']
    #allocation12 [shape = 'u8[65536]{0}', space=vmem, size = 0x10000, scoped, tag = 'input window, operand 7, single buffered']
    #allocation13 [shape = 's32[1]{0}', space=sflag, size = 0x4, scoped, tag = 'scoped memory for fused_s0.1']
    #allocation14 [shape = 'u8[4096]{0}', space=vmem, size = 0x1000, scoped, tag = 'output window, operand 0, single buffered']
    %14 = vsyncpa [#allocation4], 0
    %15 = vsyncpa [#allocation7], 0
    %16 = vsyncpa [#allocation10], 0
    %17 = vsyncpa [#allocation13], 0
    %18 = vsyncpa [#allocation5], 0
    // Predicated region
    $region2: #{fused_s0.1} parent=1 // pred_check
      _
    $region3: #{fused_s0.1} parent=1 // pred_check_branch
      %20 = sbr.rel (0) target = $region5
    $region4: #{fused_s0.1} parent=1 // pred_region
      %22 = vsyncadd [#allocation4], 768
      %s23 = sshll.u32 %s0, 4
      %s24 = int_to_ptr.hbm [resolvable:$true] %s23
      %s25 = sshll.u32 [#allocation3], 4
      %s26 = int_to_ptr.vmem [resolvable:$true] %s25
      %31 = dma.hbm_to_vmem [thread:$0]  %s24, 256, %s26, [#allocation4], 256, 256, 16
    $region5: #{fused_s0.1} parent=1 // pred_fallthru
      _
    // Predicated region
    $region6: #{fused_s0.1} parent=1 // pred_check
      _
    $region7: #{fused_s0.1} parent=1 // pred_check_branch
      %33 = sbr.rel (0) target = $region9
    $region8: #{fused_s0.1} parent=1 // pred_region
      %35 = vsyncadd [#allocation7], 0
      %s36 = sshll.u32 %s1, 4
      %s37 = int_to_ptr.hbm [resolvable:$true] %s36
      %s38 = sshll.u32 [#allocation6], 4
      %s39 = int_to_ptr.vmem [resolvable:$true] %s38
      %44 = dma.hbm_to_vmem [thread:$0]  %s37, 16384, %s39, [#allocation7], 128, 128, 8
    $region9: #{fused_s0.1} parent=1 // pred_fallthru
      _
    // Predicated region
    $region10: #{fused_s0.1} parent=1 // pred_check
      _
    $region11: #{fused_s0.1} parent=1 // pred_check_branch
      %46 = sbr.rel (0) target = $region13
    $region12: #{fused_s0.1} parent=1 // pred_region
      %48 = vsyncadd [#allocation7], 0
      %s50 = sshll.u32 %s2, 4
      %s51 = int_to_ptr.hbm [resolvable:$true] %s50
      %s52 = sshll.u32 [#allocation8], 4
      %s53 = int_to_ptr.vmem [resolvable:$true] %s52
      %55 = dma.hbm_to_vmem [thread:$0]  %s51, 32, %s53, [#allocation7]
    $region13: #{fused_s0.1} parent=1 // pred_fallthru
      _
    // Predicated region
    $region14: #{fused_s0.1} parent=1 // pred_check
      _
    $region15: #{fused_s0.1} parent=1 // pred_check_branch
      %57 = sbr.rel (0) target = $region17
    $region16: #{fused_s0.1} parent=1 // pred_region
      %59 = vsyncadd [#allocation10], 0
      %s60 = sshll.u32 %s3, 4
      %s61 = int_to_ptr.hbm [resolvable:$true] %s60
      %s62 = sshll.u32 [#allocation9], 4
      %s63 = int_to_ptr.vmem [resolvable:$true] %s62
      %68 = dma.hbm_to_vmem [thread:$0]  %s61, 2048, %s63, [#allocation10], 64, 64, 4
    $region17: #{fused_s0.1} parent=1 // pred_fallthru
      _
    // Predicated region
    $region18: #{fused_s0.1} parent=1 // pred_check
      _
    $region19: #{fused_s0.1} parent=1 // pred_check_branch
      %70 = sbr.rel (0) target = $region21
    $region20: #{fused_s0.1} parent=1 // pred_region
      _
    $region21: #{fused_s0.1} parent=1 // pred_fallthru
      _
    // Predicated region
    $region22: #{fused_s0.1} parent=1 // pred_check
      _
    $region23: #{fused_s0.1} parent=1 // pred_check_branch
      %72 = sbr.rel (0) target = $region25
    $region24: #{fused_s0.1} parent=1 // pred_region
      %74 = vsyncadd [#allocation10], 0
      %s75 = sshll.u32 %s5, 4
      %s76 = int_to_ptr.hbm [resolvable:$true] %s75
      %s77 = sshll.u32 [#allocation11], 4
      %s78 = int_to_ptr.vmem [resolvable:$true] %s77
      %83 = dma.hbm_to_vmem [thread:$0]  %s76, 2048, %s78, [#allocation10], 128, 128, 8
    $region25: #{fused_s0.1} parent=1 // pred_fallthru
      _
    // Predicated region
    $region26: #{fused_s0.1} parent=1 // pred_check
      _
    $region27: #{fused_s0.1} parent=1 // pred_check_branch
      %85 = sbr.rel (0) target = $region29
    $region28: #{fused_s0.1} parent=1 // pred_region
      _
    $region29: #{fused_s0.1} parent=1 // pred_fallthru
      _
    // Predicated region
    $region30: #{fused_s0.1} parent=1 // pred_check
      _
    $region31: #{fused_s0.1} parent=1 // pred_check_branch
      %87 = sbr.rel (0) target = $region33
    $region32: #{fused_s0.1} parent=1 // pred_region
      %89 = vsyncadd [#allocation13], 0
      %s90 = sshll.u32 %s7, 4
      %s91 = int_to_ptr.hbm [resolvable:$true] %s90
      %s92 = sshll.u32 [#allocation12], 4
      %s93 = int_to_ptr.vmem [resolvable:$true] %s92
      %98 = dma.hbm_to_vmem [thread:$0]  %s91, 2048, %s93, [#allocation13], 64, 64, 4
    $region33: #{fused_s0.1} parent=1 // pred_fallthru
      _
    // Predicated region
    $region34: #{fused_s0.1} parent=1 // pred_check
      _
    $region35: #{fused_s0.1} parent=1 // pred_check_branch
      %100 = sbr.rel (0) target = $region37
    $region36: #{fused_s0.1} parent=1 // pred_region
      _
    $region37: #{fused_s0.1} parent=1 // pred_fallthru
      _
    // Predicated region
    $region38: #{fused_s0.1} parent=1 // pred_check
      _
    $region39: #{fused_s0.1} parent=1 // pred_check_branch
      %102 = sbr.rel (0) target = $region41
    $region40: #{fused_s0.1} parent=1 // pred_region
      %104 = dma.done [#allocation4], 1024
    $region41: #{fused_s0.1} parent=1 // pred_fallthru
      _
    // Predicated region
    $region42: #{fused_s0.1} parent=1 // pred_check
      _
    $region43: #{fused_s0.1} parent=1 // pred_check_branch
      %106 = sbr.rel (0) target = $region45
    $region44: #{fused_s0.1} parent=1 // pred_region
      %108 = dma.done [#allocation7], 16384
    $region45: #{fused_s0.1} parent=1 // pred_fallthru
      _
    // Predicated region
    $region46: #{fused_s0.1} parent=1 // pred_check
      _
    $region47: #{fused_s0.1} parent=1 // pred_check_branch
      %110 = sbr.rel (0) target = $region49
    $region48: #{fused_s0.1} parent=1 // pred_region
      %112 = dma.done [#allocation7], 32
    $region49: #{fused_s0.1} parent=1 // pred_fallthru
      _
    // Predicated region
    $region50: #{fused_s0.1} parent=1 // pred_check
      _
    $region51: #{fused_s0.1} parent=1 // pred_check_branch
      %114 = sbr.rel (0) target = $region53
    $region52: #{fused_s0.1} parent=1 // pred_region
      %116 = dma.done [#allocation10], 2048
    $region53: #{fused_s0.1} parent=1 // pred_fallthru
      _
    // Predicated region
    $region54: #{fused_s0.1} parent=1 // pred_check
      _
    $region55: #{fused_s0.1} parent=1 // pred_check_branch
      %118 = sbr.rel (0) target = $region57
    $region56: #{fused_s0.1} parent=1 // pred_region
      %120 = dma.done [#allocation10], 2048
    $region57: #{fused_s0.1} parent=1 // pred_fallthru
      _
    // Predicated region
    $region58: #{fused_s0.1} parent=1 // pred_check
      _
    $region59: #{fused_s0.1} parent=1 // pred_check_branch
      %122 = sbr.rel (0) target = $region61
    $region60: #{fused_s0.1} parent=1 // pred_region
      %124 = dma.done [#allocation13], 2048
    $region61: #{fused_s0.1} parent=1 // pred_fallthru
      _
    %p125 = scmp.eq.s32.totalorder 0, 0
    // Predicated region
    $region62: #{fused_s0.1} parent=1 // pred_check
      %p126 = pneg %p125
    $region63: #{fused_s0.1} parent=1 // pred_check_branch
      %128 = sbr.rel (%p126) target = $region65
    $region64: #{fused_s0.1} parent=1 // pred_region
      %129 = vst [vmem:[#allocation2] sm:$0xff] 0.0
      %130 = vst [vmem:[#allocation2 + $0x8] sm:$0xff] 0.0
    $region65: #{fused_s0.1} parent=1 // pred_fallthru
      _
    %v131 = vld [vmem:[#allocation2] sm:$0xff]
    %v132 = vld [vmem:[#allocation2 + $0x8] sm:$0xff]
    %v133 = vld [vmem:[#allocation3] sm:$0xff]
    %v134 = vld [vmem:[#allocation3 + $0x8] sm:$0xff]
    %v135 = vld [vmem:[#allocation3 + $0x10] sm:$0xff]
    %v136 = vld [vmem:[#allocation3 + $0x18] sm:$0xff]
    %v137 = vld [vmem:[#allocation3 + $0x20] sm:$0xff]
    %v138 = vld [vmem:[#allocation3 + $0x28] sm:$0xff]
    %v139 = vld [vmem:[#allocation3 + $0x30] sm:$0xff]
    %v140 = vld [vmem:[#allocation3 + $0x38] sm:$0xff]
    %149 = vst [vmem:[#allocation1] ss:$4 sm:$0xff] %v133
    %s150 = scalar_lea.vmem [#allocation1], 1
    %151 = vst [vmem:[%s150] ss:$4 sm:$0xff] %v135
    %s152 = scalar_lea.vmem [#allocation1], 2
    %153 = vst [vmem:[%s152] ss:$4 sm:$0xff] %v137
    %s154 = scalar_lea.vmem [#allocation1], 3
    %155 = vst [vmem:[%s154] ss:$4 sm:$0xff] %v139
    %s156 = scalar_lea.vmem [#allocation1], 32
    %157 = vst [vmem:[%s156] ss:$4 sm:$0xff] %v134
    %s158 = scalar_lea.vmem [#allocation1], 33
    %159 = vst [vmem:[%s158] ss:$4 sm:$0xff] %v136
    %s160 = scalar_lea.vmem [#allocation1], 34
    %161 = vst [vmem:[%s160] ss:$4 sm:$0xff] %v138
    %s162 = scalar_lea.vmem [#allocation1], 35
    %163 = vst [vmem:[%s162] ss:$4 sm:$0xff] %v140
    %v164 = vld.sshfl [vmem:[#allocation1] sm:$0xff pattern:$0x73625140]
    %v165 = vld.sshfl [vmem:[#allocation1 + $0x8] sm:$0xff pattern:$0x73625140]
    %v166 = vld.sshfl [vmem:[#allocation1 + $0x10] sm:$0xff pattern:$0x73625140]
    %v167 = vld.sshfl [vmem:[#allocation1 + $0x18] sm:$0xff pattern:$0x73625140]
    %v168 = vld.sshfl [vmem:[#allocation1 + $0x20] sm:$0xff pattern:$0x73625140]
    %v169 = vld.sshfl [vmem:[#allocation1 + $0x28] sm:$0xff pattern:$0x73625140]
    %v170 = vld.sshfl [vmem:[#allocation1 + $0x30] sm:$0xff pattern:$0x73625140]
    %v171 = vld.sshfl [vmem:[#allocation1 + $0x38] sm:$0xff pattern:$0x73625140]
    %v180 = vpack.c.bf16 %v164, %v164
    %v181 = vpack.c.bf16 %v165, %v165
    %v182 = vpack.c.bf16 %v166, %v166
    %v183 = vpack.c.bf16 %v167, %v167
    %v184 = vpack.c.bf16 %v168, %v168
    %v185 = vpack.c.bf16 %v169, %v169
    %v186 = vpack.c.bf16 %v170, %v170
    %v187 = vpack.c.bf16 %v171, %v171
    %v188 = vld [vmem:[#allocation6] sm:$0xff]
    %v189 = vld [vmem:[#allocation6 + $0x8] sm:$0xff]
    %v190 = vld [vmem:[#allocation6 + $0x10] sm:$0xff]
    %v191 = vld [vmem:[#allocation6 + $0x18] sm:$0xff]
    %v192 = vld [vmem:[#allocation6 + $0x20] sm:$0xff]
    %v193 = vld [vmem:[#allocation6 + $0x28] sm:$0xff]
    %v194 = vld [vmem:[#allocation6 + $0x30] sm:$0xff]
    %v195 = vld [vmem:[#allocation6 + $0x38] sm:$0xff]
    %v196 = vld [vmem:[#allocation6 + $0x40] sm:$0xff]
    %v197 = vld [vmem:[#allocation6 + $0x48] sm:$0xff]
    %v198 = vld [vmem:[#allocation6 + $0x50] sm:$0xff]
    %v199 = vld [vmem:[#allocation6 + $0x58] sm:$0xff]
    %v200 = vld [vmem:[#allocation6 + $0x60] sm:$0xff]
    %v201 = vld [vmem:[#allocation6 + $0x68] sm:$0xff]
    %v202 = vld [vmem:[#allocation6 + $0x70] sm:$0xff]
    %v203 = vld [vmem:[#allocation6 + $0x78] sm:$0xff]
    %v204 = vld [vmem:[#allocation6 + $0x80] sm:$0xff]
    %v205 = vld [vmem:[#allocation6 + $0x88] sm:$0xff]
    %v206 = vld [vmem:[#allocation6 + $0x90] sm:$0xff]
    %v207 = vld [vmem:[#allocation6 + $0x98] sm:$0xff]
    %v208 = vld [vmem:[#allocation6 + $0xa0] sm:$0xff]
    %v209 = vld [vmem:[#allocation6 + $0xa8] sm:$0xff]
    %v210 = vld [vmem:[#allocation6 + $0xb0] sm:$0xff]
    %v211 = vld [vmem:[#allocation6 + $0xb8] sm:$0xff]
    %v212 = vld [vmem:[#allocation6 + $0xc0] sm:$0xff]
    %v213 = vld [vmem:[#allocation6 + $0xc8] sm:$0xff]
    %v214 = vld [vmem:[#allocation6 + $0xd0] sm:$0xff]
    %v215 = vld [vmem:[#allocation6 + $0xd8] sm:$0xff]
    %v216 = vld [vmem:[#allocation6 + $0xe0] sm:$0xff]
    %v217 = vld [vmem:[#allocation6 + $0xe8] sm:$0xff]
    %v218 = vld [vmem:[#allocation6 + $0xf0] sm:$0xff]
    %v219 = vld [vmem:[#allocation6 + $0xf8] sm:$0xff]
    %v220 = vld [vmem:[#allocation6 + $0x100] sm:$0xff]
    %v221 = vld [vmem:[#allocation6 + $0x108] sm:$0xff]
    %v222 = vld [vmem:[#allocation6 + $0x110] sm:$0xff]
    %v223 = vld [vmem:[#allocation6 + $0x118] sm:$0xff]
    %v224 = vld [vmem:[#allocation6 + $0x120] sm:$0xff]
    %v225 = vld [vmem:[#allocation6 + $0x128] sm:$0xff]
    %v226 = vld [vmem:[#allocation6 + $0x130] sm:$0xff]
    %v227 = vld [vmem:[#allocation6 + $0x138] sm:$0xff]
    %v228 = vld [vmem:[#allocation6 + $0x140] sm:$0xff]
    %v229 = vld [vmem:[#allocation6 + $0x148] sm:$0xff]
    %v230 = vld [vmem:[#allocation6 + $0x150] sm:$0xff]
    %v231 = vld [vmem:[#allocation6 + $0x158] sm:$0xff]
    %v232 = vld [vmem:[#allocation6 + $0x160] sm:$0xff]
    %v233 = vld [vmem:[#allocation6 + $0x168] sm:$0xff]
    %v234 = vld [vmem:[#allocation6 + $0x170] sm:$0xff]
    %v235 = vld [vmem:[#allocation6 + $0x178] sm:$0xff]
    %v236 = vld [vmem:[#allocation6 + $0x180] sm:$0xff]
    %v237 = vld [vmem:[#allocation6 + $0x188] sm:$0xff]
    %v238 = vld [vmem:[#allocation6 + $0x190] sm:$0xff]
    %v239 = vld [vmem:[#allocation6 + $0x198] sm:$0xff]
    %v240 = vld [vmem:[#allocation6 + $0x1a0] sm:$0xff]
    %v241 = vld [vmem:[#allocation6 + $0x1a8] sm:$0xff]
    %v242 = vld [vmem:[#allocation6 + $0x1b0] sm:$0xff]
    %v243 = vld [vmem:[#allocation6 + $0x1b8] sm:$0xff]
    %v244 = vld [vmem:[#allocation6 + $0x1c0] sm:$0xff]
    %v245 = vld [vmem:[#allocation6 + $0x1c8] sm:$0xff]
    %v246 = vld [vmem:[#allocation6 + $0x1d0] sm:$0xff]
    %v247 = vld [vmem:[#allocation6 + $0x1d8] sm:$0xff]
    %v248 = vld [vmem:[#allocation6 + $0x1e0] sm:$0xff]
    %v249 = vld [vmem:[#allocation6 + $0x1e8] sm:$0xff]
    %v250 = vld [vmem:[#allocation6 + $0x1f0] sm:$0xff]
    %v251 = vld [vmem:[#allocation6 + $0x1f8] sm:$0xff]
    %v252 = vld [vmem:[#allocation6 + $0x200] sm:$0xff]
    %v253 = vld [vmem:[#allocation6 + $0x208] sm:$0xff]
    %v254 = vld [vmem:[#allocation6 + $0x210] sm:$0xff]
    %v255 = vld [vmem:[#allocation6 + $0x218] sm:$0xff]
    %v256 = vld [vmem:[#allocation6 + $0x220] sm:$0xff]
    %v257 = vld [vmem:[#allocation6 + $0x228] sm:$0xff]
    %v258 = vld [vmem:[#allocation6 + $0x230] sm:$0xff]
    %v259 = vld [vmem:[#allocation6 + $0x238] sm:$0xff]
    %v260 = vld [vmem:[#allocation6 + $0x240] sm:$0xff]
    %v261 = vld [vmem:[#allocation6 + $0x248] sm:$0xff]
    %v262 = vld [vmem:[#allocation6 + $0x250] sm:$0xff]
    %v263 = vld [vmem:[#allocation6 + $0x258] sm:$0xff]
    %v264 = vld [vmem:[#allocation6 + $0x260] sm:$0xff]
    %v265 = vld [vmem:[#allocation6 + $0x268] sm:$0xff]
    %v266 = vld [vmem:[#allocation6 + $0x270] sm:$0xff]
    %v267 = vld [vmem:[#allocation6 + $0x278] sm:$0xff]
    %v268 = vld [vmem:[#allocation6 + $0x280] sm:$0xff]
    %v269 = vld [vmem:[#allocation6 + $0x288] sm:$0xff]
    %v270 = vld [vmem:[#allocation6 + $0x290] sm:$0xff]
    %v271 = vld [vmem:[#allocation6 + $0x298] sm:$0xff]
    %v272 = vld [vmem:[#allocation6 + $0x2a0] sm:$0xff]
    %v273 = vld [vmem:[#allocation6 + $0x2a8] sm:$0xff]
    %v274 = vld [vmem:[#allocation6 + $0x2b0] sm:$0xff]
    %v275 = vld [vmem:[#allocation6 + $0x2b8] sm:$0xff]
    %v276 = vld [vmem:[#allocation6 + $0x2c0] sm:$0xff]
    %v277 = vld [vmem:[#allocation6 + $0x2c8] sm:$0xff]
    %v278 = vld [vmem:[#allocation6 + $0x2d0] sm:$0xff]
    %v279 = vld [vmem:[#allocation6 + $0x2d8] sm:$0xff]
    %v280 = vld [vmem:[#allocation6 + $0x2e0] sm:$0xff]
    %v281 = vld [vmem:[#allocation6 + $0x2e8] sm:$0xff]
    %v282 = vld [vmem:[#allocation6 + $0x2f0] sm:$0xff]
    %v283 = vld [vmem:[#allocation6 + $0x2f8] sm:$0xff]
    %v284 = vld [vmem:[#allocation6 + $0x300] sm:$0xff]
    %v285 = vld [vmem:[#allocation6 + $0x308] sm:$0xff]
    %v286 = vld [vmem:[#allocation6 + $0x310] sm:$0xff]
    %v287 = vld [vmem:[#allocation6 + $0x318] sm:$0xff]
    %v288 = vld [vmem:[#allocation6 + $0x320] sm:$0xff]
    %v289 = vld [vmem:[#allocation6 + $0x328] sm:$0xff]
    %v290 = vld [vmem:[#allocation6 + $0x330] sm:$0xff]
    %v291 = vld [vmem:[#allocation6 + $0x338] sm:$0xff]
    %v292 = vld [vmem:[#allocation6 + $0x340] sm:$0xff]
    %v293 = vld [vmem:[#allocation6 + $0x348] sm:$0xff]
    %v294 = vld [vmem:[#allocation6 + $0x350] sm:$0xff]
    %v295 = vld [vmem:[#allocation6 + $0x358] sm:$0xff]
    %v296 = vld [vmem:[#allocation6 + $0x360] sm:$0xff]
    %v297 = vld [vmem:[#allocation6 + $0x368] sm:$0xff]
    %v298 = vld [vmem:[#allocation6 + $0x370] sm:$0xff]
    %v299 = vld [vmem:[#allocation6 + $0x378] sm:$0xff]
    %v300 = vld [vmem:[#allocation6 + $0x380] sm:$0xff]
    %v301 = vld [vmem:[#allocation6 + $0x388] sm:$0xff]
    %v302 = vld [vmem:[#allocation6 + $0x390] sm:$0xff]
    %v303 = vld [vmem:[#allocation6 + $0x398] sm:$0xff]
    %v304 = vld [vmem:[#allocation6 + $0x3a0] sm:$0xff]
    %v305 = vld [vmem:[#allocation6 + $0x3a8] sm:$0xff]
    %v306 = vld [vmem:[#allocation6 + $0x3b0] sm:$0xff]
    %v307 = vld [vmem:[#allocation6 + $0x3b8] sm:$0xff]
    %v308 = vld [vmem:[#allocation6 + $0x3c0] sm:$0xff]
    %v309 = vld [vmem:[#allocation6 + $0x3c8] sm:$0xff]
    %v310 = vld [vmem:[#allocation6 + $0x3d0] sm:$0xff]
    %v311 = vld [vmem:[#allocation6 + $0x3d8] sm:$0xff]
    %v312 = vld [vmem:[#allocation6 + $0x3e0] sm:$0xff]
    %v313 = vld [vmem:[#allocation6 + $0x3e8] sm:$0xff]
    %v314 = vld [vmem:[#allocation6 + $0x3f0] sm:$0xff]
    %v315 = vld [vmem:[#allocation6 + $0x3f8] sm:$0xff]
    %v444 = vunpack.c.l.b16 %v188
    %v445 = vunpack.c.h.b16 %v188
    %v446 = vunpack.c.l.b16 %v189
    %v447 = vunpack.c.h.b16 %v189
    %v448 = vunpack.c.l.b16 %v190
    %v449 = vunpack.c.h.b16 %v190
    %v450 = vunpack.c.l.b16 %v191
    %v451 = vunpack.c.h.b16 %v191
    %v452 = vunpack.c.l.b16 %v192
    %v453 = vunpack.c.h.b16 %v192
    %v454 = vunpack.c.l.b16 %v193
    %v455 = vunpack.c.h.b16 %v193
    %v456 = vunpack.c.l.b16 %v194
    %v457 = vunpack.c.h.b16 %v194
    %v458 = vunpack.c.l.b16 %v195
    %v459 = vunpack.c.h.b16 %v195
    %v460 = vunpack.c.l.b16 %v196
    %v461 = vunpack.c.h.b16 %v196
    %v462 = vunpack.c.l.b16 %v197
    %v463 = vunpack.c.h.b16 %v197
    %v464 = vunpack.c.l.b16 %v198
    %v465 = vunpack.c.h.b16 %v198
    %v466 = vunpack.c.l.b16 %v199
    %v467 = vunpack.c.h.b16 %v199
    %v468 = vunpack.c.l.b16 %v200
    %v469 = vunpack.c.h.b16 %v200
    %v470 = vunpack.c.l.b16 %v201
    %v471 = vunpack.c.h.b16 %v201
    %v472 = vunpack.c.l.b16 %v202
    %v473 = vunpack.c.h.b16 %v202
    %v474 = vunpack.c.l.b16 %v203
    %v475 = vunpack.c.h.b16 %v203
    %v476 = vunpack.c.l.b16 %v204
    %v477 = vunpack.c.h.b16 %v204
    %v478 = vunpack.c.l.b16 %v205
    %v479 = vunpack.c.h.b16 %v205
    %v480 = vunpack.c.l.b16 %v206
    %v481 = vunpack.c.h.b16 %v206
    %v482 = vunpack.c.l.b16 %v207
    %v483 = vunpack.c.h.b16 %v207
    %v484 = vunpack.c.l.b16 %v208
    %v485 = vunpack.c.h.b16 %v208
    %v486 = vunpack.c.l.b16 %v209
    %v487 = vunpack.c.h.b16 %v209
    %v488 = vunpack.c.l.b16 %v210
    %v489 = vunpack.c.h.b16 %v210
    %v490 = vunpack.c.l.b16 %v211
    %v491 = vunpack.c.h.b16 %v211
    %v492 = vunpack.c.l.b16 %v212
    %v493 = vunpack.c.h.b16 %v212
    %v494 = vunpack.c.l.b16 %v213
    %v495 = vunpack.c.h.b16 %v213
    %v496 = vunpack.c.l.b16 %v214
    %v497 = vunpack.c.h.b16 %v214
    %v498 = vunpack.c.l.b16 %v215
    %v499 = vunpack.c.h.b16 %v215
    %v500 = vunpack.c.l.b16 %v216
    %v501 = vunpack.c.h.b16 %v216
    %v502 = vunpack.c.l.b16 %v217
    %v503 = vunpack.c.h.b16 %v217
    %v504 = vunpack.c.l.b16 %v218
    %v505 = vunpack.c.h.b16 %v218
    %v506 = vunpack.c.l.b16 %v219
    %v507 = vunpack.c.h.b16 %v219
    %v508 = vunpack.c.l.b16 %v220
    %v509 = vunpack.c.h.b16 %v220
    %v510 = vunpack.c.l.b16 %v221
    %v511 = vunpack.c.h.b16 %v221
    %v512 = vunpack.c.l.b16 %v222
    %v513 = vunpack.c.h.b16 %v222
    %v514 = vunpack.c.l.b16 %v223
    %v515 = vunpack.c.h.b16 %v223
    %v516 = vunpack.c.l.b16 %v224
    %v517 = vunpack.c.h.b16 %v224
    %v518 = vunpack.c.l.b16 %v225
    %v519 = vunpack.c.h.b16 %v225
    %v520 = vunpack.c.l.b16 %v226
    %v521 = vunpack.c.h.b16 %v226
    %v522 = vunpack.c.l.b16 %v227
    %v523 = vunpack.c.h.b16 %v227
    %v524 = vunpack.c.l.b16 %v228
    %v525 = vunpack.c.h.b16 %v228
    %v526 = vunpack.c.l.b16 %v229
    %v527 = vunpack.c.h.b16 %v229
    %v528 = vunpack.c.l.b16 %v230
    %v529 = vunpack.c.h.b16 %v230
    %v530 = vunpack.c.l.b16 %v231
    %v531 = vunpack.c.h.b16 %v231
    %v532 = vunpack.c.l.b16 %v232
    %v533 = vunpack.c.h.b16 %v232
    %v534 = vunpack.c.l.b16 %v233
    %v535 = vunpack.c.h.b16 %v233
    %v536 = vunpack.c.l.b16 %v234
    %v537 = vunpack.c.h.b16 %v234
    %v538 = vunpack.c.l.b16 %v235
    %v539 = vunpack.c.h.b16 %v235
    %v540 = vunpack.c.l.b16 %v236
    %v541 = vunpack.c.h.b16 %v236
    %v542 = vunpack.c.l.b16 %v237
    %v543 = vunpack.c.h.b16 %v237
    %v544 = vunpack.c.l.b16 %v238
    %v545 = vunpack.c.h.b16 %v238
    %v546 = vunpack.c.l.b16 %v239
    %v547 = vunpack.c.h.b16 %v239
    %v548 = vunpack.c.l.b16 %v240
    %v549 = vunpack.c.h.b16 %v240
    %v550 = vunpack.c.l.b16 %v241
    %v551 = vunpack.c.h.b16 %v241
    %v552 = vunpack.c.l.b16 %v242
    %v553 = vunpack.c.h.b16 %v242
    %v554 = vunpack.c.l.b16 %v243
    %v555 = vunpack.c.h.b16 %v243
    %v556 = vunpack.c.l.b16 %v244
    %v557 = vunpack.c.h.b16 %v244
    %v558 = vunpack.c.l.b16 %v245
    %v559 = vunpack.c.h.b16 %v245
    %v560 = vunpack.c.l.b16 %v246
    %v561 = vunpack.c.h.b16 %v246
    %v562 = vunpack.c.l.b16 %v247
    %v563 = vunpack.c.h.b16 %v247
    %v564 = vunpack.c.l.b16 %v248
    %v565 = vunpack.c.h.b16 %v248
    %v566 = vunpack.c.l.b16 %v249
    %v567 = vunpack.c.h.b16 %v249
    %v568 = vunpack.c.l.b16 %v250
    %v569 = vunpack.c.h.b16 %v250
    %v570 = vunpack.c.l.b16 %v251
    %v571 = vunpack.c.h.b16 %v251
    %v572 = vunpack.c.l.b16 %v252
    %v573 = vunpack.c.h.b16 %v252
    %v574 = vunpack.c.l.b16 %v253
    %v575 = vunpack.c.h.b16 %v253
    %v576 = vunpack.c.l.b16 %v254
    %v577 = vunpack.c.h.b16 %v254
    %v578 = vunpack.c.l.b16 %v255
    %v579 = vunpack.c.h.b16 %v255
    %v580 = vunpack.c.l.b16 %v256
    %v581 = vunpack.c.h.b16 %v256
    %v582 = vunpack.c.l.b16 %v257
    %v583 = vunpack.c.h.b16 %v257
    %v584 = vunpack.c.l.b16 %v258
    %v585 = vunpack.c.h.b16 %v258
    %v586 = vunpack.c.l.b16 %v259
    %v587 = vunpack.c.h.b16 %v259
    %v588 = vunpack.c.l.b16 %v260
    %v589 = vunpack.c.h.b16 %v260
    %v590 = vunpack.c.l.b16 %v261
    %v591 = vunpack.c.h.b16 %v261
    %v592 = vunpack.c.l.b16 %v262
    %v593 = vunpack.c.h.b16 %v262
    %v594 = vunpack.c.l.b16 %v263
    %v595 = vunpack.c.h.b16 %v263
    %v596 = vunpack.c.l.b16 %v264
    %v597 = vunpack.c.h.b16 %v264
    %v598 = vunpack.c.l.b16 %v265
    %v599 = vunpack.c.h.b16 %v265
    %v600 = vunpack.c.l.b16 %v266
    %v601 = vunpack.c.h.b16 %v266
    %v602 = vunpack.c.l.b16 %v267
    %v603 = vunpack.c.h.b16 %v267
    %v604 = vunpack.c.l.b16 %v268
    %v605 = vunpack.c.h.b16 %v268
    %v606 = vunpack.c.l.b16 %v269
    %v607 = vunpack.c.h.b16 %v269
    %v608 = vunpack.c.l.b16 %v270
    %v609 = vunpack.c.h.b16 %v270
    %v610 = vunpack.c.l.b16 %v271
    %v611 = vunpack.c.h.b16 %v271
    %v612 = vunpack.c.l.b16 %v272
    %v613 = vunpack.c.h.b16 %v272
    %v614 = vunpack.c.l.b16 %v273
    %v615 = vunpack.c.h.b16 %v273
    %v616 = vunpack.c.l.b16 %v274
    %v617 = vunpack.c.h.b16 %v274
    %v618 = vunpack.c.l.b16 %v275
    %v619 = vunpack.c.h.b16 %v275
    %v620 = vunpack.c.l.b16 %v276
    %v621 = vunpack.c.h.b16 %v276
    %v622 = vunpack.c.l.b16 %v277
    %v623 = vunpack.c.h.b16 %v277
    %v624 = vunpack.c.l.b16 %v278
    %v625 = vunpack.c.h.b16 %v278
    %v626 = vunpack.c.l.b16 %v279
    %v627 = vunpack.c.h.b16 %v279
    %v628 = vunpack.c.l.b16 %v280
    %v629 = vunpack.c.h.b16 %v280
    %v630 = vunpack.c.l.b16 %v281
    %v631 = vunpack.c.h.b16 %v281
    %v632 = vunpack.c.l.b16 %v282
    %v633 = vunpack.c.h.b16 %v282
    %v634 = vunpack.c.l.b16 %v283
    %v635 = vunpack.c.h.b16 %v283
    %v636 = vunpack.c.l.b16 %v284
    %v637 = vunpack.c.h.b16 %v284
    %v638 = vunpack.c.l.b16 %v285
    %v639 = vunpack.c.h.b16 %v285
    %v640 = vunpack.c.l.b16 %v286
    %v641 = vunpack.c.h.b16 %v286
    %v642 = vunpack.c.l.b16 %v287
    %v643 = vunpack.c.h.b16 %v287
    %v644 = vunpack.c.l.b16 %v288
    %v645 = vunpack.c.h.b16 %v288
    %v646 = vunpack.c.l.b16 %v289
    %v647 = vunpack.c.h.b16 %v289
    %v648 = vunpack.c.l.b16 %v290
    %v649 = vunpack.c.h.b16 %v290
    %v650 = vunpack.c.l.b16 %v291
    %v651 = vunpack.c.h.b16 %v291
    %v652 = vunpack.c.l.b16 %v292
    %v653 = vunpack.c.h.b16 %v292
    %v654 = vunpack.c.l.b16 %v293
    %v655 = vunpack.c.h.b16 %v293
    %v656 = vunpack.c.l.b16 %v294
    %v657 = vunpack.c.h.b16 %v294
    %v658 = vunpack.c.l.b16 %v295
    %v659 = vunpack.c.h.b16 %v295
    %v660 = vunpack.c.l.b16 %v296
    %v661 = vunpack.c.h.b16 %v296
    %v662 = vunpack.c.l.b16 %v297
    %v663 = vunpack.c.h.b16 %v297
    %v664 = vunpack.c.l.b16 %v298
    %v665 = vunpack.c.h.b16 %v298
    %v666 = vunpack.c.l.b16 %v299
    %v667 = vunpack.c.h.b16 %v299
    %v668 = vunpack.c.l.b16 %v300
    %v669 = vunpack.c.h.b16 %v300
    %v670 = vunpack.c.l.b16 %v301
    %v671 = vunpack.c.h.b16 %v301
    %v672 = vunpack.c.l.b16 %v302
    %v673 = vunpack.c.h.b16 %v302
    %v674 = vunpack.c.l.b16 %v303
    %v675 = vunpack.c.h.b16 %v303
    %v676 = vunpack.c.l.b16 %v304
    %v677 = vunpack.c.h.b16 %v304
    %v678 = vunpack.c.l.b16 %v305
    %v679 = vunpack.c.h.b16 %v305
    %v680 = vunpack.c.l.b16 %v306
    %v681 = vunpack.c.h.b16 %v306
    %v682 = vunpack.c.l.b16 %v307
    %v683 = vunpack.c.h.b16 %v307
    %v684 = vunpack.c.l.b16 %v308
    %v685 = vunpack.c.h.b16 %v308
    %v686 = vunpack.c.l.b16 %v309
    %v687 = vunpack.c.h.b16 %v309
    %v688 = vunpack.c.l.b16 %v310
    %v689 = vunpack.c.h.b16 %v310
    %v690 = vunpack.c.l.b16 %v311
    %v691 = vunpack.c.h.b16 %v311
    %v692 = vunpack.c.l.b16 %v312
    %v693 = vunpack.c.h.b16 %v312
    %v694 = vunpack.c.l.b16 %v313
    %v695 = vunpack.c.h.b16 %v313
    %v696 = vunpack.c.l.b16 %v314
    %v697 = vunpack.c.h.b16 %v314
    %v698 = vunpack.c.l.b16 %v315
    %v699 = vunpack.c.h.b16 %v315
    %v700 = vpack.c.b16 %v446, %v444
    %v701 = vpack.c.b16 %v447, %v445
    %v702 = vpack.c.b16 %v450, %v448
    %v703 = vpack.c.b16 %v451, %v449
    %v704 = vpack.c.b16 %v454, %v452
    %v705 = vpack.c.b16 %v455, %v453
    %v706 = vpack.c.b16 %v458, %v456
    %v707 = vpack.c.b16 %v459, %v457
    %v708 = vpack.c.b16 %v462, %v460
    %v709 = vpack.c.b16 %v463, %v461
    %v710 = vpack.c.b16 %v466, %v464
    %v711 = vpack.c.b16 %v467, %v465
    %v712 = vpack.c.b16 %v470, %v468
    %v713 = vpack.c.b16 %v471, %v469
    %v714 = vpack.c.b16 %v474, %v472
    %v715 = vpack.c.b16 %v475, %v473
    %v716 = vpack.c.b16 %v478, %v476
    %v717 = vpack.c.b16 %v479, %v477
    %v718 = vpack.c.b16 %v482, %v480
    %v719 = vpack.c.b16 %v483, %v481
    %v720 = vpack.c.b16 %v486, %v484
    %v721 = vpack.c.b16 %v487, %v485
    %v722 = vpack.c.b16 %v490, %v488
    %v723 = vpack.c.b16 %v491, %v489
    %v724 = vpack.c.b16 %v494, %v492
    %v725 = vpack.c.b16 %v495, %v493
    %v726 = vpack.c.b16 %v498, %v496
    %v727 = vpack.c.b16 %v499, %v497
    %v728 = vpack.c.b16 %v502, %v500
    %v729 = vpack.c.b16 %v503, %v501
    %v730 = vpack.c.b16 %v506, %v504
    %v731 = vpack.c.b16 %v507, %v505
    %v732 = vpack.c.b16 %v510, %v508
    %v733 = vpack.c.b16 %v511, %v509
    %v734 = vpack.c.b16 %v514, %v512
    %v735 = vpack.c.b16 %v515, %v513
    %v736 = vpack.c.b16 %v518, %v516
    %v737 = vpack.c.b16 %v519, %v517
    %v738 = vpack.c.b16 %v522, %v520
    %v739 = vpack.c.b16 %v523, %v521
    %v740 = vpack.c.b16 %v526, %v524
    %v741 = vpack.c.b16 %v527, %v525
    %v742 = vpack.c.b16 %v530, %v528
    %v743 = vpack.c.b16 %v531, %v529
    %v744 = vpack.c.b16 %v534, %v532
    %v745 = vpack.c.b16 %v535, %v533
    %v746 = vpack.c.b16 %v538, %v536
    %v747 = vpack.c.b16 %v539, %v537
    %v748 = vpack.c.b16 %v542, %v540
    %v749 = vpack.c.b16 %v543, %v541
    %v750 = vpack.c.b16 %v546, %v544
    %v751 = vpack.c.b16 %v547, %v545
    %v752 = vpack.c.b16 %v550, %v548
    %v753 = vpack.c.b16 %v551, %v549
    %v754 = vpack.c.b16 %v554, %v552
    %v755 = vpack.c.b16 %v555, %v553
    %v756 = vpack.c.b16 %v558, %v556
    %v757 = vpack.c.b16 %v559, %v557
    %v758 = vpack.c.b16 %v562, %v560
    %v759 = vpack.c.b16 %v563, %v561
    %v760 = vpack.c.b16 %v566, %v564
    %v761 = vpack.c.b16 %v567, %v565
    %v762 = vpack.c.b16 %v570, %v568
    %v763 = vpack.c.b16 %v571, %v569
    %v764 = vpack.c.b16 %v574, %v572
    %v765 = vpack.c.b16 %v575, %v573
    %v766 = vpack.c.b16 %v578, %v576
    %v767 = vpack.c.b16 %v579, %v577
    %v768 = vpack.c.b16 %v582, %v580
    %v769 = vpack.c.b16 %v583, %v581
    %v770 = vpack.c.b16 %v586, %v584
    %v771 = vpack.c.b16 %v587, %v585
    %v772 = vpack.c.b16 %v590, %v588
    %v773 = vpack.c.b16 %v591, %v589
    %v774 = vpack.c.b16 %v594, %v592
    %v775 = vpack.c.b16 %v595, %v593
    %v776 = vpack.c.b16 %v598, %v596
    %v777 = vpack.c.b16 %v599, %v597
    %v778 = vpack.c.b16 %v602, %v600
    %v779 = vpack.c.b16 %v603, %v601
    %v780 = vpack.c.b16 %v606, %v604
    %v781 = vpack.c.b16 %v607, %v605
    %v782 = vpack.c.b16 %v610, %v608
    %v783 = vpack.c.b16 %v611, %v609
    %v784 = vpack.c.b16 %v614, %v612
    %v785 = vpack.c.b16 %v615, %v613
    %v786 = vpack.c.b16 %v618, %v616
    %v787 = vpack.c.b16 %v619, %v617
    %v788 = vpack.c.b16 %v622, %v620
    %v789 = vpack.c.b16 %v623, %v621
    %v790 = vpack.c.b16 %v626, %v624
    %v791 = vpack.c.b16 %v627, %v625
    %v792 = vpack.c.b16 %v630, %v628
    %v793 = vpack.c.b16 %v631, %v629
    %v794 = vpack.c.b16 %v634, %v632
    %v795 = vpack.c.b16 %v635, %v633
    %v796 = vpack.c.b16 %v638, %v636
    %v797 = vpack.c.b16 %v639, %v637
    %v798 = vpack.c.b16 %v642, %v640
    %v799 = vpack.c.b16 %v643, %v641
    %v800 = vpack.c.b16 %v646, %v644
    %v801 = vpack.c.b16 %v647, %v645
    %v802 = vpack.c.b16 %v650, %v648
    %v803 = vpack.c.b16 %v651, %v649
    %v804 = vpack.c.b16 %v654, %v652
    %v805 = vpack.c.b16 %v655, %v653
    %v806 = vpack.c.b16 %v658, %v656
    %v807 = vpack.c.b16 %v659, %v657
    %v808 = vpack.c.b16 %v662, %v660
    %v809 = vpack.c.b16 %v663, %v661
    %v810 = vpack.c.b16 %v666, %v664
    %v811 = vpack.c.b16 %v667, %v665
    %v812 = vpack.c.b16 %v670, %v668
    %v813 = vpack.c.b16 %v671, %v669
    %v814 = vpack.c.b16 %v674, %v672
    %v815 = vpack.c.b16 %v675, %v673
    %v816 = vpack.c.b16 %v678, %v676
    %v817 = vpack.c.b16 %v679, %v677
    %v818 = vpack.c.b16 %v682, %v680
    %v819 = vpack.c.b16 %v683, %v681
    %v820 = vpack.c.b16 %v686, %v684
    %v821 = vpack.c.b16 %v687, %v685
    %v822 = vpack.c.b16 %v690, %v688
    %v823 = vpack.c.b16 %v691, %v689
    %v824 = vpack.c.b16 %v694, %v692
    %v825 = vpack.c.b16 %v695, %v693
    %v826 = vpack.c.b16 %v698, %v696
    %v827 = vpack.c.b16 %v699, %v697
    %956 = vmatpush.bf16.msra.mxu0 %v714
    %957 = vmatpush.bf16.msra.mxu0 %v712
    %958 = vmatpush.bf16.msra.mxu0 %v710
    %959 = vmatpush.bf16.msra.mxu0 %v708
    %960 = vmatpush.bf16.msra.mxu0 %v706
    %961 = vmatpush.bf16.msra.mxu0 %v704
    %962 = vmatpush.bf16.msra.mxu0 %v702
    %963 = vmatpush.bf16.msra.mxu0 %v700
    %964 = vmatmul.bf16.gmra.mxu0 %v180
    %v965 = vpop.f32.mrf.mxu0
    %v966 = vadd.f32 0.0, %v965
    %v967 = vpop.f32.mrf.mxu0
    %968 = vdwg.mxu0
    %969 = vmatpush.bf16.msra.mxu0 %v730
    %970 = vmatpush.bf16.msra.mxu0 %v728
    %971 = vmatpush.bf16.msra.mxu0 %v726
    %972 = vmatpush.bf16.msra.mxu0 %v724
    %973 = vmatpush.bf16.msra.mxu0 %v722
    %974 = vmatpush.bf16.msra.mxu0 %v720
    %975 = vmatpush.bf16.msra.mxu0 %v718
    %976 = vmatpush.bf16.msra.mxu0 %v716
    %977 = vmatmul.bf16.gmra.mxu0 %v181
    %v978 = vpop.f32.mrf.mxu0
    %v979 = vadd.f32 %v966, %v978
    %v980 = vpop.f32.mrf.mxu0
    %981 = vdwg.mxu0
    %982 = vmatpush.bf16.msra.mxu0 %v746
    %983 = vmatpush.bf16.msra.mxu0 %v744
    %984 = vmatpush.bf16.msra.mxu0 %v742
    %985 = vmatpush.bf16.msra.mxu0 %v740
    %986 = vmatpush.bf16.msra.mxu0 %v738
    %987 = vmatpush.bf16.msra.mxu0 %v736
    %988 = vmatpush.bf16.msra.mxu0 %v734
    %989 = vmatpush.bf16.msra.mxu0 %v732
    %990 = vmatmul.bf16.gmra.mxu0 %v182
    %v991 = vpop.f32.mrf.mxu0
    %v992 = vadd.f32 %v979, %v991
    %v993 = vpop.f32.mrf.mxu0
    %994 = vdwg.mxu0
    %995 = vmatpush.bf16.msra.mxu0 %v762
    %996 = vmatpush.bf16.msra.mxu0 %v760
    %997 = vmatpush.bf16.msra.mxu0 %v758
    %998 = vmatpush.bf16.msra.mxu0 %v756
    %999 = vmatpush.bf16.msra.mxu0 %v754
    %1000 = vmatpush.bf16.msra.mxu0 %v752
    %1001 = vmatpush.bf16.msra.mxu0 %v750
    %1002 = vmatpush.bf16.msra.mxu0 %v748
    %1003 = vmatmul.bf16.gmra.mxu0 %v183
    %v1004 = vpop.f32.mrf.mxu0
    %v1005 = vadd.f32 %v992, %v1004
    %v1006 = vpop.f32.mrf.mxu0
    %1007 = vdwg.mxu0
    %1008 = vmatpush.bf16.msra.mxu0 %v778
    %1009 = vmatpush.bf16.msra.mxu0 %v776
    %1010 = vmatpush.bf16.msra.mxu0 %v774
    %1011 = vmatpush.bf16.msra.mxu0 %v772
    %1012 = vmatpush.bf16.msra.mxu0 %v770
    %1013 = vmatpush.bf16.msra.mxu0 %v768
    %1014 = vmatpush.bf16.msra.mxu0 %v766
    %1015 = vmatpush.bf16.msra.mxu0 %v764
    %1016 = vmatmul.bf16.gmra.mxu0 %v184
    %v1017 = vpop.f32.mrf.mxu0
    %v1018 = vadd.f32 %v1005, %v1017
    %v1019 = vpop.f32.mrf.mxu0
    %1020 = vdwg.mxu0
    %1021 = vmatpush.bf16.msra.mxu0 %v794
    %1022 = vmatpush.bf16.msra.mxu0 %v792
    %1023 = vmatpush.bf16.msra.mxu0 %v790
    %1024 = vmatpush.bf16.msra.mxu0 %v788
    %1025 = vmatpush.bf16.msra.mxu0 %v786
    %1026 = vmatpush.bf16.msra.mxu0 %v784
    %1027 = vmatpush.bf16.msra.mxu0 %v782
    %1028 = vmatpush.bf16.msra.mxu0 %v780
    %1029 = vmatmul.bf16.gmra.mxu0 %v185
    %v1030 = vpop.f32.mrf.mxu0
    %v1031 = vadd.f32 %v1018, %v1030
    %v1032 = vpop.f32.mrf.mxu0
    %1033 = vdwg.mxu0
    %1034 = vmatpush.bf16.msra.mxu0 %v810
    %1035 = vmatpush.bf16.msra.mxu0 %v808
    %1036 = vmatpush.bf16.msra.mxu0 %v806
    %1037 = vmatpush.bf16.msra.mxu0 %v804
    %1038 = vmatpush.bf16.msra.mxu0 %v802
    %1039 = vmatpush.bf16.msra.mxu0 %v800
    %1040 = vmatpush.bf16.msra.mxu0 %v798
    %1041 = vmatpush.bf16.msra.mxu0 %v796
    %1042 = vmatmul.bf16.gmra.mxu0 %v186
    %v1043 = vpop.f32.mrf.mxu0
    %v1044 = vadd.f32 %v1031, %v1043
    %v1045 = vpop.f32.mrf.mxu0
    %1046 = vdwg.mxu0
    %1047 = vmatpush.bf16.msra.mxu0 %v826
    %1048 = vmatpush.bf16.msra.mxu0 %v824
    %1049 = vmatpush.bf16.msra.mxu0 %v822
    %1050 = vmatpush.bf16.msra.mxu0 %v820
    %1051 = vmatpush.bf16.msra.mxu0 %v818
    %1052 = vmatpush.bf16.msra.mxu0 %v816
    %1053 = vmatpush.bf16.msra.mxu0 %v814
    %1054 = vmatpush.bf16.msra.mxu0 %v812
    %1055 = vmatmul.bf16.gmra.mxu0 %v187
    %v1056 = vpop.f32.mrf.mxu0
    %v1057 = vadd.f32 %v1044, %v1056
    %v1058 = vpop.f32.mrf.mxu0
    %1059 = vdwg.mxu0
    %1060 = vmatpush.bf16.msra.mxu0 %v715
    %1061 = vmatpush.bf16.msra.mxu0 %v713
    %1062 = vmatpush.bf16.msra.mxu0 %v711
    %1063 = vmatpush.bf16.msra.mxu0 %v709
    %1064 = vmatpush.bf16.msra.mxu0 %v707
    %1065 = vmatpush.bf16.msra.mxu0 %v705
    %1066 = vmatpush.bf16.msra.mxu0 %v703
    %1067 = vmatpush.bf16.msra.mxu0 %v701
    %1068 = vmatmul.bf16.gmra.mxu0 %v180
    %v1069 = vpop.f32.mrf.mxu0
    %v1070 = vadd.f32 0.0, %v1069
    %v1071 = vpop.f32.mrf.mxu0
    %1072 = vdwg.mxu0
    %1073 = vmatpush.bf16.msra.mxu0 %v731
    %1074 = vmatpush.bf16.msra.mxu0 %v729
    %1075 = vmatpush.bf16.msra.mxu0 %v727
    %1076 = vmatpush.bf16.msra.mxu0 %v725
    %1077 = vmatpush.bf16.msra.mxu0 %v723
    %1078 = vmatpush.bf16.msra.mxu0 %v721
    %1079 = vmatpush.bf16.msra.mxu0 %v719
    %1080 = vmatpush.bf16.msra.mxu0 %v717
    %1081 = vmatmul.bf16.gmra.mxu0 %v181
    %v1082 = vpop.f32.mrf.mxu0
    %v1083 = vadd.f32 %v1070, %v1082
    %v1084 = vpop.f32.mrf.mxu0
    %1085 = vdwg.mxu0
    %1086 = vmatpush.bf16.msra.mxu0 %v747
    %1087 = vmatpush.bf16.msra.mxu0 %v745
    %1088 = vmatpush.bf16.msra.mxu0 %v743
    %1089 = vmatpush.bf16.msra.mxu0 %v741
    %1090 = vmatpush.bf16.msra.mxu0 %v739
    %1091 = vmatpush.bf16.msra.mxu0 %v737
    %1092 = vmatpush.bf16.msra.mxu0 %v735
    %1093 = vmatpush.bf16.msra.mxu0 %v733
    %1094 = vmatmul.bf16.gmra.mxu0 %v182
    %v1095 = vpop.f32.mrf.mxu0
    %v1096 = vadd.f32 %v1083, %v1095
    %v1097 = vpop.f32.mrf.mxu0
    %1098 = vdwg.mxu0
    %1099 = vmatpush.bf16.msra.mxu0 %v763
    %1100 = vmatpush.bf16.msra.mxu0 %v761
    %1101 = vmatpush.bf16.msra.mxu0 %v759
    %1102 = vmatpush.bf16.msra.mxu0 %v757
    %1103 = vmatpush.bf16.msra.mxu0 %v755
    %1104 = vmatpush.bf16.msra.mxu0 %v753
    %1105 = vmatpush.bf16.msra.mxu0 %v751
    %1106 = vmatpush.bf16.msra.mxu0 %v749
    %1107 = vmatmul.bf16.gmra.mxu0 %v183
    %v1108 = vpop.f32.mrf.mxu0
    %v1109 = vadd.f32 %v1096, %v1108
    %v1110 = vpop.f32.mrf.mxu0
    %1111 = vdwg.mxu0
    %1112 = vmatpush.bf16.msra.mxu0 %v779
    %1113 = vmatpush.bf16.msra.mxu0 %v777
    %1114 = vmatpush.bf16.msra.mxu0 %v775
    %1115 = vmatpush.bf16.msra.mxu0 %v773
    %1116 = vmatpush.bf16.msra.mxu0 %v771
    %1117 = vmatpush.bf16.msra.mxu0 %v769
    %1118 = vmatpush.bf16.msra.mxu0 %v767
    %1119 = vmatpush.bf16.msra.mxu0 %v765
    %1120 = vmatmul.bf16.gmra.mxu0 %v184
    %v1121 = vpop.f32.mrf.mxu0
    %v1122 = vadd.f32 %v1109, %v1121
    %v1123 = vpop.f32.mrf.mxu0
    %1124 = vdwg.mxu0
    %1125 = vmatpush.bf16.msra.mxu0 %v795
    %1126 = vmatpush.bf16.msra.mxu0 %v793
    %1127 = vmatpush.bf16.msra.mxu0 %v791
    %1128 = vmatpush.bf16.msra.mxu0 %v789
    %1129 = vmatpush.bf16.msra.mxu0 %v787
    %1130 = vmatpush.bf16.msra.mxu0 %v785
    %1131 = vmatpush.bf16.msra.mxu0 %v783
    %1132 = vmatpush.bf16.msra.mxu0 %v781
    %1133 = vmatmul.bf16.gmra.mxu0 %v185
    %v1134 = vpop.f32.mrf.mxu0
    %v1135 = vadd.f32 %v1122, %v1134
    %v1136 = vpop.f32.mrf.mxu0
    %1137 = vdwg.mxu0
    %1138 = vmatpush.bf16.msra.mxu0 %v811
    %1139 = vmatpush.bf16.msra.mxu0 %v809
    %1140 = vmatpush.bf16.msra.mxu0 %v807
    %1141 = vmatpush.bf16.msra.mxu0 %v805
    %1142 = vmatpush.bf16.msra.mxu0 %v803
    %1143 = vmatpush.bf16.msra.mxu0 %v801
    %1144 = vmatpush.bf16.msra.mxu0 %v799
    %1145 = vmatpush.bf16.msra.mxu0 %v797
    %1146 = vmatmul.bf16.gmra.mxu0 %v186
    %v1147 = vpop.f32.mrf.mxu0
    %v1148 = vadd.f32 %v1135, %v1147
    %v1149 = vpop.f32.mrf.mxu0
    %1150 = vdwg.mxu0
    %1151 = vmatpush.bf16.msra.mxu0 %v827
    %1152 = vmatpush.bf16.msra.mxu0 %v825
    %1153 = vmatpush.bf16.msra.mxu0 %v823
    %1154 = vmatpush.bf16.msra.mxu0 %v821
    %1155 = vmatpush.bf16.msra.mxu0 %v819
    %1156 = vmatpush.bf16.msra.mxu0 %v817
    %1157 = vmatpush.bf16.msra.mxu0 %v815
    %1158 = vmatpush.bf16.msra.mxu0 %v813
    %1159 = vmatmul.bf16.gmra.mxu0 %v187
    %v1160 = vpop.f32.mrf.mxu0
    %v1161 = vadd.f32 %v1148, %v1160
    %v1162 = vpop.f32.mrf.mxu0
    %1163 = vdwg.mxu0
    %v1164 = vadd.f32 %v131, %v1057
    %v1165 = vadd.f32 %v132, %v1161
    %1166 = vst [vmem:[#allocation2] sm:$0xff] %v1164
    %1167 = vst [vmem:[#allocation2 + $0x8] sm:$0xff] %v1165
    // Predicated region
    $region66: #{fused_s0.1} parent=1 // pred_check
      %p1168 = pneg %p125
    $region67: #{fused_s0.1} parent=1 // pred_check_branch
      %1170 = sbr.rel (%p1168) target = $region69
    $region68: #{fused_s0.1} parent=1 // pred_region
      %v1171 = vld [vmem:[#allocation2] sm:$0xff]
      %v1172 = vld [vmem:[#allocation2 + $0x8] sm:$0xff]
      %v1173 = vld [vmem:[#allocation8] sm:$0x3]
      %v1175 = vperm.slane %v1173, 0
      %v1176 = vperm.slane %v1173, 1
      %v1179 = vadd.f32 %v1171, %v1175
      %v1180 = vadd.f32 %v1172, %v1176
      %v1181 = vtanh.pop %v1179
      %v1182 = vtanh.pop %v1180
      %v1183 = vpack.c.bf16 %v1181, %v1181
      %v1184 = vpack.c.bf16 %v1182, %v1182
      %v1185 = vld [vmem:[#allocation9] sm:$0xf]
      %v1186 = vld [vmem:[#allocation9 + $0x4] sm:$0xf]
      %v1187 = vld [vmem:[#allocation9 + $0x8] sm:$0xf]
      %v1188 = vld [vmem:[#allocation9 + $0xc] sm:$0xf]
      %v1189 = vld [vmem:[#allocation9 + $0x10] sm:$0xf]
      %v1190 = vld [vmem:[#allocation9 + $0x14] sm:$0xf]
      %v1191 = vld [vmem:[#allocation9 + $0x18] sm:$0xf]
      %v1192 = vld [vmem:[#allocation9 + $0x1c] sm:$0xf]
      %v1193 = vld [vmem:[#allocation9 + $0x20] sm:$0xf]
      %v1194 = vld [vmem:[#allocation9 + $0x24] sm:$0xf]
      %v1195 = vld [vmem:[#allocation9 + $0x28] sm:$0xf]
      %v1196 = vld [vmem:[#allocation9 + $0x2c] sm:$0xf]
      %v1197 = vld [vmem:[#allocation9 + $0x30] sm:$0xf]
      %v1198 = vld [vmem:[#allocation9 + $0x34] sm:$0xf]
      %v1199 = vld [vmem:[#allocation9 + $0x38] sm:$0xf]
      %v1200 = vld [vmem:[#allocation9 + $0x3c] sm:$0xf]
      %v1201 = vld [vmem:[#allocation9 + $0x40] sm:$0xf]
      %v1202 = vld [vmem:[#allocation9 + $0x44] sm:$0xf]
      %v1203 = vld [vmem:[#allocation9 + $0x48] sm:$0xf]
      %v1204 = vld [vmem:[#allocation9 + $0x4c] sm:$0xf]
      %v1205 = vld [vmem:[#allocation9 + $0x50] sm:$0xf]
      %v1206 = vld [vmem:[#allocation9 + $0x54] sm:$0xf]
      %v1207 = vld [vmem:[#allocation9 + $0x58] sm:$0xf]
      %v1208 = vld [vmem:[#allocation9 + $0x5c] sm:$0xf]
      %v1209 = vld [vmem:[#allocation9 + $0x60] sm:$0xf]
      %v1210 = vld [vmem:[#allocation9 + $0x64] sm:$0xf]
      %v1211 = vld [vmem:[#allocation9 + $0x68] sm:$0xf]
      %v1212 = vld [vmem:[#allocation9 + $0x6c] sm:$0xf]
      %v1213 = vld [vmem:[#allocation9 + $0x70] sm:$0xf]
      %v1214 = vld [vmem:[#allocation9 + $0x74] sm:$0xf]
      %v1215 = vld [vmem:[#allocation9 + $0x78] sm:$0xf]
      %v1216 = vld [vmem:[#allocation9 + $0x7c] sm:$0xf]
      %v1217 = vld [vmem:[%s4] sm:$0x1]
      %v1219 = vperm.slane %v1217, 0
      %v1253 = vunpack.c.l.b16 %v1185
      %v1254 = vunpack.c.l.b16 %v1186
      %v1255 = vunpack.c.l.b16 %v1187
      %v1256 = vunpack.c.l.b16 %v1188
      %v1257 = vunpack.c.l.b16 %v1189
      %v1258 = vunpack.c.l.b16 %v1190
      %v1259 = vunpack.c.l.b16 %v1191
      %v1260 = vunpack.c.l.b16 %v1192
      %v1261 = vunpack.c.l.b16 %v1193
      %v1262 = vunpack.c.l.b16 %v1194
      %v1263 = vunpack.c.l.b16 %v1195
      %v1264 = vunpack.c.l.b16 %v1196
      %v1265 = vunpack.c.l.b16 %v1197
      %v1266 = vunpack.c.l.b16 %v1198
      %v1267 = vunpack.c.l.b16 %v1199
      %v1268 = vunpack.c.l.b16 %v1200
      %v1269 = vunpack.c.l.b16 %v1201
      %v1270 = vunpack.c.l.b16 %v1202
      %v1271 = vunpack.c.l.b16 %v1203
      %v1272 = vunpack.c.l.b16 %v1204
      %v1273 = vunpack.c.l.b16 %v1205
      %v1274 = vunpack.c.l.b16 %v1206
      %v1275 = vunpack.c.l.b16 %v1207
      %v1276 = vunpack.c.l.b16 %v1208
      %v1277 = vunpack.c.l.b16 %v1209
      %v1278 = vunpack.c.l.b16 %v1210
      %v1279 = vunpack.c.l.b16 %v1211
      %v1280 = vunpack.c.l.b16 %v1212
      %v1281 = vunpack.c.l.b16 %v1213
      %v1282 = vunpack.c.l.b16 %v1214
      %v1283 = vunpack.c.l.b16 %v1215
      %v1284 = vunpack.c.l.b16 %v1216
      %v1285 = vpack.c.b16 %v1254, %v1253
      %v1286 = vpack.c.b16 %v1256, %v1255
      %v1287 = vpack.c.b16 %v1258, %v1257
      %v1288 = vpack.c.b16 %v1260, %v1259
      %v1289 = vpack.c.b16 %v1262, %v1261
      %v1290 = vpack.c.b16 %v1264, %v1263
      %v1291 = vpack.c.b16 %v1266, %v1265
      %v1292 = vpack.c.b16 %v1268, %v1267
      %v1293 = vpack.c.b16 %v1270, %v1269
      %v1294 = vpack.c.b16 %v1272, %v1271
      %v1295 = vpack.c.b16 %v1274, %v1273
      %v1296 = vpack.c.b16 %v1276, %v1275
      %v1297 = vpack.c.b16 %v1278, %v1277
      %v1298 = vpack.c.b16 %v1280, %v1279
      %v1299 = vpack.c.b16 %v1282, %v1281
      %v1300 = vpack.c.b16 %v1284, %v1283
      %1317 = vmatpush.bf16.msra.mxu0 %v1292
      %1318 = vmatpush.bf16.msra.mxu0 %v1291
      %1319 = vmatpush.bf16.msra.mxu0 %v1290
      %1320 = vmatpush.bf16.msra.mxu0 %v1289
      %1321 = vmatpush.bf16.msra.mxu0 %v1288
      %1322 = vmatpush.bf16.msra.mxu0 %v1287
      %1323 = vmatpush.bf16.msra.mxu0 %v1286
      %1324 = vmatpush.bf16.msra.mxu0 %v1285
      %1325 = vmatmul.bf16.gmra.mxu0 %v1183
      %v1326 = vpop.f32.mrf.mxu0
      %v1327 = vadd.f32 %v1219, %v1326
      %v1328 = vpop.f32.mrf.mxu0
      %1329 = vdwg.mxu0
      %1330 = vmatpush.bf16.msra.mxu0 %v1300
      %1331 = vmatpush.bf16.msra.mxu0 %v1299
      %1332 = vmatpush.bf16.msra.mxu0 %v1298
      %1333 = vmatpush.bf16.msra.mxu0 %v1297
      %1334 = vmatpush.bf16.msra.mxu0 %v1296
      %1335 = vmatpush.bf16.msra.mxu0 %v1295
      %1336 = vmatpush.bf16.msra.mxu0 %v1294
      %1337 = vmatpush.bf16.msra.mxu0 %v1293
      %1338 = vmatmul.bf16.gmra.mxu0 %v1184
      %v1339 = vpop.f32.mrf.mxu0
      %v1340 = vadd.f32 %v1327, %v1339
      %v1341 = vpop.f32.mrf.mxu0
      %1342 = vdwg.mxu0
      %v1343 = vpack.c.bf16 %v1340, %v1340
      %v1344 = vld [vmem:[#allocation11] sm:$0xff]
      %v1345 = vld [vmem:[#allocation11 + $0x8] sm:$0xff]
      %v1346 = vld [vmem:[#allocation11 + $0x10] sm:$0xff]
      %v1347 = vld [vmem:[#allocation11 + $0x18] sm:$0xff]
      %v1348 = vld [vmem:[#allocation11 + $0x20] sm:$0xff]
      %v1349 = vld [vmem:[#allocation11 + $0x28] sm:$0xff]
      %v1350 = vld [vmem:[#allocation11 + $0x30] sm:$0xff]
      %v1351 = vld [vmem:[#allocation11 + $0x38] sm:$0xff]
      %v1352 = vld [vmem:[#allocation11 + $0x40] sm:$0xff]
      %v1353 = vld [vmem:[#allocation11 + $0x48] sm:$0xff]
      %v1354 = vld [vmem:[#allocation11 + $0x50] sm:$0xff]
      %v1355 = vld [vmem:[#allocation11 + $0x58] sm:$0xff]
      %v1356 = vld [vmem:[#allocation11 + $0x60] sm:$0xff]
      %v1357 = vld [vmem:[#allocation11 + $0x68] sm:$0xff]
      %v1358 = vld [vmem:[#allocation11 + $0x70] sm:$0xff]
      %v1359 = vld [vmem:[#allocation11 + $0x78] sm:$0xff]
      %v1360 = vld [vmem:[%s6] sm:$0x3]
      %v1362 = vperm.slane %v1360, 0
      %v1363 = vperm.slane %v1360, 1
      %v1382 = vunpack.c.l.b16 %v1344
      %v1383 = vunpack.c.h.b16 %v1344
      %v1384 = vunpack.c.l.b16 %v1345
      %v1385 = vunpack.c.h.b16 %v1345
      %v1386 = vunpack.c.l.b16 %v1346
      %v1387 = vunpack.c.h.b16 %v1346
      %v1388 = vunpack.c.l.b16 %v1347
      %v1389 = vunpack.c.h.b16 %v1347
      %v1390 = vunpack.c.l.b16 %v1348
      %v1391 = vunpack.c.h.b16 %v1348
      %v1392 = vunpack.c.l.b16 %v1349
      %v1393 = vunpack.c.h.b16 %v1349
      %v1394 = vunpack.c.l.b16 %v1350
      %v1395 = vunpack.c.h.b16 %v1350
      %v1396 = vunpack.c.l.b16 %v1351
      %v1397 = vunpack.c.h.b16 %v1351
      %v1398 = vunpack.c.l.b16 %v1352
      %v1399 = vunpack.c.h.b16 %v1352
      %v1400 = vunpack.c.l.b16 %v1353
      %v1401 = vunpack.c.h.b16 %v1353
      %v1402 = vunpack.c.l.b16 %v1354
      %v1403 = vunpack.c.h.b16 %v1354
      %v1404 = vunpack.c.l.b16 %v1355
      %v1405 = vunpack.c.h.b16 %v1355
      %v1406 = vunpack.c.l.b16 %v1356
      %v1407 = vunpack.c.h.b16 %v1356
      %v1408 = vunpack.c.l.b16 %v1357
      %v1409 = vunpack.c.h.b16 %v1357
      %v1410 = vunpack.c.l.b16 %v1358
      %v1411 = vunpack.c.h.b16 %v1358
      %v1412 = vunpack.c.l.b16 %v1359
      %v1413 = vunpack.c.h.b16 %v1359
      %v1414 = vpack.c.b16 %v1384, %v1382
      %v1415 = vpack.c.b16 %v1385, %v1383
      %v1416 = vpack.c.b16 %v1388, %v1386
      %v1417 = vpack.c.b16 %v1389, %v1387
      %v1418 = vpack.c.b16 %v1392, %v1390
      %v1419 = vpack.c.b16 %v1393, %v1391
      %v1420 = vpack.c.b16 %v1396, %v1394
      %v1421 = vpack.c.b16 %v1397, %v1395
      %v1422 = vpack.c.b16 %v1400, %v1398
      %v1423 = vpack.c.b16 %v1401, %v1399
      %v1424 = vpack.c.b16 %v1404, %v1402
      %v1425 = vpack.c.b16 %v1405, %v1403
      %v1426 = vpack.c.b16 %v1408, %v1406
      %v1427 = vpack.c.b16 %v1409, %v1407
      %v1428 = vpack.c.b16 %v1412, %v1410
      %v1429 = vpack.c.b16 %v1413, %v1411
      %1446 = vmatpush.bf16.msra.mxu0 %v1428
      %1447 = vmatpush.bf16.msra.mxu0 %v1426
      %1448 = vmatpush.bf16.msra.mxu0 %v1424
      %1449 = vmatpush.bf16.msra.mxu0 %v1422
      %1450 = vmatpush.bf16.msra.mxu0 %v1420
      %1451 = vmatpush.bf16.msra.mxu0 %v1418
      %1452 = vmatpush.bf16.msra.mxu0 %v1416
      %1453 = vmatpush.bf16.msra.mxu0 %v1414
      %1454 = vmatmul.bf16.gmra.mxu0 %v1343
      %v1455 = vpop.f32.mrf.mxu0
      %v1456 = vadd.f32 %v1362, %v1455
      %v1457 = vpop.f32.mrf.mxu0
      %1458 = vdwg.mxu0
      %1459 = vmatpush.bf16.msra.mxu0 %v1429
      %1460 = vmatpush.bf16.msra.mxu0 %v1427
      %1461 = vmatpush.bf16.msra.mxu0 %v1425
      %1462 = vmatpush.bf16.msra.mxu0 %v1423
      %1463 = vmatpush.bf16.msra.mxu0 %v1421
      %1464 = vmatpush.bf16.msra.mxu0 %v1419
      %1465 = vmatpush.bf16.msra.mxu0 %v1417
      %1466 = vmatpush.bf16.msra.mxu0 %v1415
      %1467 = vmatmul.bf16.gmra.mxu0 %v1343
      %v1468 = vpop.f32.mrf.mxu0
      %v1469 = vadd.f32 %v1363, %v1468
      %v1470 = vpop.f32.mrf.mxu0
      %1471 = vdwg.mxu0
      %v1472 = vtanh.pop %v1456
      %v1473 = vtanh.pop %v1469
      %v1474 = vpack.c.bf16 %v1472, %v1472
      %v1475 = vpack.c.bf16 %v1473, %v1473
      %v1476 = vld [vmem:[#allocation12] sm:$0xf]
      %v1477 = vld [vmem:[#allocation12 + $0x4] sm:$0xf]
      %v1478 = vld [vmem:[#allocation12 + $0x8] sm:$0xf]
      %v1479 = vld [vmem:[#allocation12 + $0xc] sm:$0xf]
      %v1480 = vld [vmem:[#allocation12 + $0x10] sm:$0xf]
      %v1481 = vld [vmem:[#allocation12 + $0x14] sm:$0xf]
      %v1482 = vld [vmem:[#allocation12 + $0x18] sm:$0xf]
      %v1483 = vld [vmem:[#allocation12 + $0x1c] sm:$0xf]
      %v1484 = vld [vmem:[#allocation12 + $0x20] sm:$0xf]
      %v1485 = vld [vmem:[#allocation12 + $0x24] sm:$0xf]
      %v1486 = vld [vmem:[#allocation12 + $0x28] sm:$0xf]
      %v1487 = vld [vmem:[#allocation12 + $0x2c] sm:$0xf]
      %v1488 = vld [vmem:[#allocation12 + $0x30] sm:$0xf]
      %v1489 = vld [vmem:[#allocation12 + $0x34] sm:$0xf]
      %v1490 = vld [vmem:[#allocation12 + $0x38] sm:$0xf]
      %v1491 = vld [vmem:[#allocation12 + $0x3c] sm:$0xf]
      %v1492 = vld [vmem:[#allocation12 + $0x40] sm:$0xf]
      %v1493 = vld [vmem:[#allocation12 + $0x44] sm:$0xf]
      %v1494 = vld [vmem:[#allocation12 + $0x48] sm:$0xf]
      %v1495 = vld [vmem:[#allocation12 + $0x4c] sm:$0xf]
      %v1496 = vld [vmem:[#allocation12 + $0x50] sm:$0xf]
      %v1497 = vld [vmem:[#allocation12 + $0x54] sm:$0xf]
      %v1498 = vld [vmem:[#allocation12 + $0x58] sm:$0xf]
      %v1499 = vld [vmem:[#allocation12 + $0x5c] sm:$0xf]
      %v1500 = vld [vmem:[#allocation12 + $0x60] sm:$0xf]
      %v1501 = vld [vmem:[#allocation12 + $0x64] sm:$0xf]
      %v1502 = vld [vmem:[#allocation12 + $0x68] sm:$0xf]
      %v1503 = vld [vmem:[#allocation12 + $0x6c] sm:$0xf]
      %v1504 = vld [vmem:[#allocation12 + $0x70] sm:$0xf]
      %v1505 = vld [vmem:[#allocation12 + $0x74] sm:$0xf]
      %v1506 = vld [vmem:[#allocation12 + $0x78] sm:$0xf]
      %v1507 = vld [vmem:[#allocation12 + $0x7c] sm:$0xf]
      %v1508 = vld [vmem:[%s8] sm:$0x1]
      %v1510 = vperm.slane %v1508, 0
      %v1544 = vunpack.c.l.b16 %v1476
      %v1545 = vunpack.c.l.b16 %v1477
      %v1546 = vunpack.c.l.b16 %v1478
      %v1547 = vunpack.c.l.b16 %v1479
      %v1548 = vunpack.c.l.b16 %v1480
      %v1549 = vunpack.c.l.b16 %v1481
      %v1550 = vunpack.c.l.b16 %v1482
      %v1551 = vunpack.c.l.b16 %v1483
      %v1552 = vunpack.c.l.b16 %v1484
      %v1553 = vunpack.c.l.b16 %v1485
      %v1554 = vunpack.c.l.b16 %v1486
      %v1555 = vunpack.c.l.b16 %v1487
      %v1556 = vunpack.c.l.b16 %v1488
      %v1557 = vunpack.c.l.b16 %v1489
      %v1558 = vunpack.c.l.b16 %v1490
      %v1559 = vunpack.c.l.b16 %v1491
      %v1560 = vunpack.c.l.b16 %v1492
      %v1561 = vunpack.c.l.b16 %v1493
      %v1562 = vunpack.c.l.b16 %v1494
      %v1563 = vunpack.c.l.b16 %v1495
      %v1564 = vunpack.c.l.b16 %v1496
      %v1565 = vunpack.c.l.b16 %v1497
      %v1566 = vunpack.c.l.b16 %v1498
      %v1567 = vunpack.c.l.b16 %v1499
      %v1568 = vunpack.c.l.b16 %v1500
      %v1569 = vunpack.c.l.b16 %v1501
      %v1570 = vunpack.c.l.b16 %v1502
      %v1571 = vunpack.c.l.b16 %v1503
      %v1572 = vunpack.c.l.b16 %v1504
      %v1573 = vunpack.c.l.b16 %v1505
      %v1574 = vunpack.c.l.b16 %v1506
      %v1575 = vunpack.c.l.b16 %v1507
      %v1576 = vpack.c.b16 %v1545, %v1544
      %v1577 = vpack.c.b16 %v1547, %v1546
      %v1578 = vpack.c.b16 %v1549, %v1548
      %v1579 = vpack.c.b16 %v1551, %v1550
      %v1580 = vpack.c.b16 %v1553, %v1552
      %v1581 = vpack.c.b16 %v1555, %v1554
      %v1582 = vpack.c.b16 %v1557, %v1556
      %v1583 = vpack.c.b16 %v1559, %v1558
      %v1584 = vpack.c.b16 %v1561, %v1560
      %v1585 = vpack.c.b16 %v1563, %v1562
      %v1586 = vpack.c.b16 %v1565, %v1564
      %v1587 = vpack.c.b16 %v1567, %v1566
      %v1588 = vpack.c.b16 %v1569, %v1568
      %v1589 = vpack.c.b16 %v1571, %v1570
      %v1590 = vpack.c.b16 %v1573, %v1572
      %v1591 = vpack.c.b16 %v1575, %v1574
      %1608 = vmatpush.bf16.msra.mxu0 %v1583
      %1609 = vmatpush.bf16.msra.mxu0 %v1582
      %1610 = vmatpush.bf16.msra.mxu0 %v1581
      %1611 = vmatpush.bf16.msra.mxu0 %v1580
      %1612 = vmatpush.bf16.msra.mxu0 %v1579
      %1613 = vmatpush.bf16.msra.mxu0 %v1578
      %1614 = vmatpush.bf16.msra.mxu0 %v1577
      %1615 = vmatpush.bf16.msra.mxu0 %v1576
      %1616 = vmatmul.bf16.gmra.mxu0 %v1474
      %v1617 = vpop.f32.mrf.mxu0
      %v1618 = vadd.f32 %v1510, %v1617
      %v1619 = vpop.f32.mrf.mxu0
      %1620 = vdwg.mxu0
      %1621 = vmatpush.bf16.msra.mxu0 %v1591
      %1622 = vmatpush.bf16.msra.mxu0 %v1590
      %1623 = vmatpush.bf16.msra.mxu0 %v1589
      %1624 = vmatpush.bf16.msra.mxu0 %v1588
      %1625 = vmatpush.bf16.msra.mxu0 %v1587
      %1626 = vmatpush.bf16.msra.mxu0 %v1586
      %1627 = vmatpush.bf16.msra.mxu0 %v1585
      %1628 = vmatpush.bf16.msra.mxu0 %v1584
      %1629 = vmatmul.bf16.gmra.mxu0 %v1475
      %v1630 = vpop.f32.mrf.mxu0
      %v1631 = vadd.f32 %v1618, %v1630
      %v1632 = vpop.f32.mrf.mxu0
      %1633 = vdwg.mxu0
      %1634 = vst [vmem:[#allocation14] sm:$0xff] %v1631
    $region69: #{fused_s0.1} parent=1 // pred_fallthru
      _
    // Predicated region
    $region70: #{fused_s0.1} parent=1 // pred_check
      _
    $region71: #{fused_s0.1} parent=1 // pred_check_branch
      %1636 = sbr.rel (0) target = $region73
    $region72: #{fused_s0.1} parent=1 // pred_region
      %1638 = vsyncadd [#allocation5], 96
      %s1639 = sshll.u32 [#allocation14], 4
      %s1640 = int_to_ptr.vmem [resolvable:$true] %s1639
      %s1641 = sshll.u32 %s9, 4
      %s1642 = int_to_ptr.hbm [resolvable:$true] %s1641
      %1647 = dma.vmem_to_hbm [thread:$0]  %s1640, 32, %s1642, [#allocation5], 32, 32, 2
    $region73: #{fused_s0.1} parent=1 // pred_fallthru
      _
    // Predicated region
    $region74: #{fused_s0.1} parent=1 // pred_check
      _
    $region75: #{fused_s0.1} parent=1 // pred_check_branch
      %1649 = sbr.rel (0) target = $region77
    $region76: #{fused_s0.1} parent=1 // pred_region
      %1651 = dma.done [#allocation5], 128
    $region77: #{fused_s0.1} parent=1 // pred_fallthru
      _
    %1652 = vsyncpa [#allocation4], 1
    %1653 = vsyncpa [#allocation7], 1
    %1654 = vsyncpa [#allocation10], 1
    %1655 = vsyncpa [#allocation13], 1
    %1656 = vsyncpa [#allocation5], 1

// kernel: fused_s0.1
$region0: #{fused_s0.1}
  #allocation0 [shape = 'u32[]', space=smem, size = 0x4, offset = 0x4, fixed_abs, tag = 'smem constant byte address 0x4 - core index']
  #allocation1 [shape = 'u32[72,128]{1,0:T(1,128)}', space=vmem, size = 0x9000, scoped, tag = 'internal scratch']
  #allocation2 [shape = 'f32[8,256]{1,0:T(8,128)}', space=vmem, size = 0x2000, scoped, tag = 'scratch operand']
  %s0 = inlined_call_operand.hbm [shape: f32[2,1024], index: 0, kind: input, shape index: {}]
  %s1 = inlined_call_operand.hbm [shape: bf16[1024,256], index: 1, kind: input, shape index: {}]
  %s2 = inlined_call_operand.hbm [shape: f32[1,256], index: 2, kind: input, shape index: {}]
  %s3 = inlined_call_operand.hbm [shape: bf16[256,128], index: 3, kind: input, shape index: {}]
  %s4 = inlined_call_operand.vmem [shape: f32[1,128], index: 4, kind: input, shape index: {}]
  %s5 = inlined_call_operand.hbm [shape: bf16[128,256], index: 5, kind: input, shape index: {}]
  %s6 = inlined_call_operand.vmem [shape: f32[1,256], index: 6, kind: input, shape index: {}]
  %s7 = inlined_call_operand.hbm [shape: bf16[256,128], index: 7, kind: input, shape index: {}]
  %s8 = inlined_call_operand.vmem [shape: f32[1,128], index: 8, kind: input, shape index: {}]
  %s9 = inlined_call_operand.hbm [shape: f32[2,128], index: 9, kind: output, shape index: {}]
  %s10 = sld [smem:[#allocation0]]
  $region78: #{fused_s0.1} parent=0
    _
  %s12 = ssub.s32 1, %s10
  %s13 = scalar_select 0, %s12, %s10
  $region1: #{fused_s0.1} parent=0
    #allocation3 [shape = 'u8[32768]{0}', space=vmem, size = 0x8000, scoped, tag = 'input window, operand 0, single buffered']
    #allocation4 [shape = 's32[1]{0}', space=sflag, size = 0x4, scoped, tag = 'scoped memory for fused_s0.1']
    #allocation5 [shape = 's32[1]{0}', space=sflag, size = 0x4, scoped, tag = 'scoped memory for fused_s0.1']
    #allocation6 [shape = 'u8[524288]{0}', space=vmem, size = 0x80000, scoped, tag = 'input window, operand 1, single buffered']
    #allocation7 [shape = 's32[1]{0}', space=sflag, size = 0x4, scoped, tag = 'scoped memory for fused_s0.1']
    #allocation8 [shape = 'u8[1024]{0}', space=vmem, size = 0x400, scoped, tag = 'input window, operand 2, single buffered']
    #allocation9 [shape = 'u8[65536]{0}', space=vmem, size = 0x10000, scoped, tag = 'input window, operand 3, single buffered']
    #allocation10 [shape = 's32[1]{0}', space=sflag, size = 0x4, scoped, tag = 'scoped memory for fused_s0.1']
    #allocation11 [shape = 'u8[65536]{0}', space=vmem, size = 0x10000, scoped, tag = 'input window, operand 5, single buffered']
    #allocation12 [shape = 'u8[65536]{0}', space=vmem, size = 0x10000, scoped, tag = 'input window, operand 7, single buffered']
    #allocation13 [shape = 's32[1]{0}', space=sflag, size = 0x4, scoped, tag = 'scoped memory for fused_s0.1']
    #allocation14 [shape = 'u8[4096]{0}', space=vmem, size = 0x1000, scoped, tag = 'output window, operand 0, single buffered']
    %14 = vsyncpa [#allocation4], 0
    %15 = vsyncpa [#allocation7], 0
    %16 = vsyncpa [#allocation10], 0
    %17 = vsyncpa [#allocation13], 0
    %18 = vsyncpa [#allocation5], 0
    // Predicated region
    $region2: #{fused_s0.1} parent=1 // pred_check
      _
    $region3: #{fused_s0.1} parent=1 // pred_check_branch
      %20 = sbr.rel (0) target = $region5
    $region4: #{fused_s0.1} parent=1 // pred_region
      %22 = vsyncadd [#allocation4], 768
      %s23 = sshll.u32 %s0, 4
      %s24 = int_to_ptr.hbm [resolvable:$true] %s23
      %s25 = sshll.u32 [#allocation3], 4
      %s26 = int_to_ptr.vmem [resolvable:$true] %s25
      %31 = dma.hbm_to_vmem [thread:$0]  %s24, 256, %s26, [#allocation4], 256, 256, 16
    $region5: #{fused_s0.1} parent=1 // pred_fallthru
      _
    // Predicated region
    $region6: #{fused_s0.1} parent=1 // pred_check
      _
    $region7: #{fused_s0.1} parent=1 // pred_check_branch
      %33 = sbr.rel (0) target = $region9
    $region8: #{fused_s0.1} parent=1 // pred_region
      %35 = vsyncadd [#allocation7], 0
      %s36 = sshll.u32 %s1, 4
      %s37 = int_to_ptr.hbm [resolvable:$true] %s36
      %s38 = sshll.u32 [#allocation6], 4
      %s39 = int_to_ptr.vmem [resolvable:$true] %s38
      %44 = dma.hbm_to_vmem [thread:$0]  %s37, 16384, %s39, [#allocation7], 128, 128, 8
    $region9: #{fused_s0.1} parent=1 // pred_fallthru
      _
    // Predicated region
    $region10: #{fused_s0.1} parent=1 // pred_check
      _
    $region11: #{fused_s0.1} parent=1 // pred_check_branch
      %46 = sbr.rel (0) target = $region13
    $region12: #{fused_s0.1} parent=1 // pred_region
      %48 = vsyncadd [#allocation7], 0
      %s50 = sshll.u32 %s2, 4
      %s51 = int_to_ptr.hbm [resolvable:$true] %s50
      %s52 = sshll.u32 [#allocation8], 4
      %s53 = int_to_ptr.vmem [resolvable:$true] %s52
      %55 = dma.hbm_to_vmem [thread:$0]  %s51, 32, %s53, [#allocation7]
    $region13: #{fused_s0.1} parent=1 // pred_fallthru
      _
    // Predicated region
    $region14: #{fused_s0.1} parent=1 // pred_check
      _
    $region15: #{fused_s0.1} parent=1 // pred_check_branch
      %57 = sbr.rel (0) target = $region17
    $region16: #{fused_s0.1} parent=1 // pred_region
      %59 = vsyncadd [#allocation10], 0
      %s60 = sshll.u32 %s3, 4
      %s61 = int_to_ptr.hbm [resolvable:$true] %s60
      %s62 = sshll.u32 [#allocation9], 4
      %s63 = int_to_ptr.vmem [resolvable:$true] %s62
      %68 = dma.hbm_to_vmem [thread:$0]  %s61, 2048, %s63, [#allocation10], 64, 64, 4
    $region17: #{fused_s0.1} parent=1 // pred_fallthru
      _
    // Predicated region
    $region18: #{fused_s0.1} parent=1 // pred_check
      _
    $region19: #{fused_s0.1} parent=1 // pred_check_branch
      %70 = sbr.rel (0) target = $region21
    $region20: #{fused_s0.1} parent=1 // pred_region
      _
    $region21: #{fused_s0.1} parent=1 // pred_fallthru
      _
    // Predicated region
    $region22: #{fused_s0.1} parent=1 // pred_check
      _
    $region23: #{fused_s0.1} parent=1 // pred_check_branch
      %72 = sbr.rel (0) target = $region25
    $region24: #{fused_s0.1} parent=1 // pred_region
      %74 = vsyncadd [#allocation10], 0
      %s75 = sshll.u32 %s5, 4
      %s76 = int_to_ptr.hbm [resolvable:$true] %s75
      %s77 = sshll.u32 [#allocation11], 4
      %s78 = int_to_ptr.vmem [resolvable:$true] %s77
      %83 = dma.hbm_to_vmem [thread:$0]  %s76, 2048, %s78, [#allocation10], 128, 128, 8
    $region25: #{fused_s0.1} parent=1 // pred_fallthru
      _
    // Predicated region
    $region26: #{fused_s0.1} parent=1 // pred_check
      _
    $region27: #{fused_s0.1} parent=1 // pred_check_branch
      %85 = sbr.rel (0) target = $region29
    $region28: #{fused_s0.1} parent=1 // pred_region
      _
    $region29: #{fused_s0.1} parent=1 // pred_fallthru
      _
    // Predicated region
    $region30: #{fused_s0.1} parent=1 // pred_check
      _
    $region31: #{fused_s0.1} parent=1 // pred_check_branch
      %87 = sbr.rel (0) target = $region33
    $region32: #{fused_s0.1} parent=1 // pred_region
      %89 = vsyncadd [#allocation13], 0
      %s90 = sshll.u32 %s7, 4
      %s91 = int_to_ptr.hbm [resolvable:$true] %s90
      %s92 = sshll.u32 [#allocation12], 4
      %s93 = int_to_ptr.vmem [resolvable:$true] %s92
      %98 = dma.hbm_to_vmem [thread:$0]  %s91, 2048, %s93, [#allocation13], 64, 64, 4
    $region33: #{fused_s0.1} parent=1 // pred_fallthru
      _
    // Predicated region
    $region34: #{fused_s0.1} parent=1 // pred_check
      _
    $region35: #{fused_s0.1} parent=1 // pred_check_branch
      %100 = sbr.rel (0) target = $region37
    $region36: #{fused_s0.1} parent=1 // pred_region
      _
    $region37: #{fused_s0.1} parent=1 // pred_fallthru
      _
    // Predicated region
    $region38: #{fused_s0.1} parent=1 // pred_check
      _
    $region39: #{fused_s0.1} parent=1 // pred_check_branch
      %102 = sbr.rel (0) target = $region41
    $region40: #{fused_s0.1} parent=1 // pred_region
      %104 = dma.done [#allocation4], 1024
    $region41: #{fused_s0.1} parent=1 // pred_fallthru
      _
    // Predicated region
    $region42: #{fused_s0.1} parent=1 // pred_check
      _
    $region43: #{fused_s0.1} parent=1 // pred_check_branch
      %106 = sbr.rel (0) target = $region45
    $region44: #{fused_s0.1} parent=1 // pred_region
      %108 = dma.done [#allocation7], 16384
    $region45: #{fused_s0.1} parent=1 // pred_fallthru
      _
    // Predicated region
    $region46: #{fused_s0.1} parent=1 // pred_check
      _
    $region47: #{fused_s0.1} parent=1 // pred_check_branch
      %110 = sbr.rel (0) target = $region49
    $region48: #{fused_s0.1} parent=1 // pred_region
      %112 = dma.done [#allocation7], 32
    $region49: #{fused_s0.1} parent=1 // pred_fallthru
      _
    // Predicated region
    $region50: #{fused_s0.1} parent=1 // pred_check
      _
    $region51: #{fused_s0.1} parent=1 // pred_check_branch
      %114 = sbr.rel (0) target = $region53
    $region52: #{fused_s0.1} parent=1 // pred_region
      %116 = dma.done [#allocation10], 2048
    $region53: #{fused_s0.1} parent=1 // pred_fallthru
      _
    // Predicated region
    $region54: #{fused_s0.1} parent=1 // pred_check
      _
    $region55: #{fused_s0.1} parent=1 // pred_check_branch
      %118 = sbr.rel (0) target = $region57
    $region56: #{fused_s0.1} parent=1 // pred_region
      %120 = dma.done [#allocation10], 2048
    $region57: #{fused_s0.1} parent=1 // pred_fallthru
      _
    // Predicated region
    $region58: #{fused_s0.1} parent=1 // pred_check
      _
    $region59: #{fused_s0.1} parent=1 // pred_check_branch
      %122 = sbr.rel (0) target = $region61
    $region60: #{fused_s0.1} parent=1 // pred_region
      %124 = dma.done [#allocation13], 2048
    $region61: #{fused_s0.1} parent=1 // pred_fallthru
      _
    %p125 = scmp.eq.s32.totalorder 0, 0
    // Predicated region
    $region62: #{fused_s0.1} parent=1 // pred_check
      %p126 = pneg %p125
    $region63: #{fused_s0.1} parent=1 // pred_check_branch
      %128 = sbr.rel (%p126) target = $region65
    $region64: #{fused_s0.1} parent=1 // pred_region
      %129 = vst [vmem:[#allocation2] sm:$0xff] 0.0
      %130 = vst [vmem:[#allocation2 + $0x8] sm:$0xff] 0.0
    $region65: #{fused_s0.1} parent=1 // pred_fallthru
      _
    %v131 = vld [vmem:[#allocation2] sm:$0xff]
    %v132 = vld [vmem:[#allocation2 + $0x8] sm:$0xff]
    %v133 = vld [vmem:[#allocation3] sm:$0xff]
    %v134 = vld [vmem:[#allocation3 + $0x8] sm:$0xff]
    %v135 = vld [vmem:[#allocation3 + $0x10] sm:$0xff]
    %v136 = vld [vmem:[#allocation3 + $0x18] sm:$0xff]
    %v137 = vld [vmem:[#allocation3 + $0x20] sm:$0xff]
    %v138 = vld [vmem:[#allocation3 + $0x28] sm:$0xff]
    %v139 = vld [vmem:[#allocation3 + $0x30] sm:$0xff]
    %v140 = vld [vmem:[#allocation3 + $0x38] sm:$0xff]
    %149 = vst [vmem:[#allocation1] ss:$4 sm:$0xff] %v133
    %s150 = scalar_lea.vmem [#allocation1], 1
    %151 = vst [vmem:[%s150] ss:$4 sm:$0xff] %v135
    %s152 = scalar_lea.vmem [#allocation1], 2
    %153 = vst [vmem:[%s152] ss:$4 sm:$0xff] %v137
    %s154 = scalar_lea.vmem [#allocation1], 3
    %155 = vst [vmem:[%s154] ss:$4 sm:$0xff] %v139
    %s156 = scalar_lea.vmem [#allocation1], 32
    %157 = vst [vmem:[%s156] ss:$4 sm:$0xff] %v134
    %s158 = scalar_lea.vmem [#allocation1], 33
    %159 = vst [vmem:[%s158] ss:$4 sm:$0xff] %v136
    %s160 = scalar_lea.vmem [#allocation1], 34
    %161 = vst [vmem:[%s160] ss:$4 sm:$0xff] %v138
    %s162 = scalar_lea.vmem [#allocation1], 35
    %163 = vst [vmem:[%s162] ss:$4 sm:$0xff] %v140
    %v164 = vld.sshfl [vmem:[#allocation1] sm:$0xff pattern:$0x73625140]
    %v165 = vld.sshfl [vmem:[#allocation1 + $0x8] sm:$0xff pattern:$0x73625140]
    %v166 = vld.sshfl [vmem:[#allocation1 + $0x10] sm:$0xff pattern:$0x73625140]
    %v167 = vld.sshfl [vmem:[#allocation1 + $0x18] sm:$0xff pattern:$0x73625140]
    %v168 = vld.sshfl [vmem:[#allocation1 + $0x20] sm:$0xff pattern:$0x73625140]
    %v169 = vld.sshfl [vmem:[#allocation1 + $0x28] sm:$0xff pattern:$0x73625140]
    %v170 = vld.sshfl [vmem:[#allocation1 + $0x30] sm:$0xff pattern:$0x73625140]
    %v171 = vld.sshfl [vmem:[#allocation1 + $0x38] sm:$0xff pattern:$0x73625140]
    %v180 = vpack.c.bf16 %v164, %v164
    %v181 = vpack.c.bf16 %v165, %v165
    %v182 = vpack.c.bf16 %v166, %v166
    %v183 = vpack.c.bf16 %v167, %v167
    %v184 = vpack.c.bf16 %v168, %v168
    %v185 = vpack.c.bf16 %v169, %v169
    %v186 = vpack.c.bf16 %v170, %v170
    %v187 = vpack.c.bf16 %v171, %v171
    %v188 = vld [vmem:[#allocation6] sm:$0xff]
    %v189 = vld [vmem:[#allocation6 + $0x8] sm:$0xff]
    %v190 = vld [vmem:[#allocation6 + $0x10] sm:$0xff]
    %v191 = vld [vmem:[#allocation6 + $0x18] sm:$0xff]
    %v192 = vld [vmem:[#allocation6 + $0x20] sm:$0xff]
    %v193 = vld [vmem:[#allocation6 + $0x28] sm:$0xff]
    %v194 = vld [vmem:[#allocation6 + $0x30] sm:$0xff]
    %v195 = vld [vmem:[#allocation6 + $0x38] sm:$0xff]
    %v196 = vld [vmem:[#allocation6 + $0x40] sm:$0xff]
    %v197 = vld [vmem:[#allocation6 + $0x48] sm:$0xff]
    %v198 = vld [vmem:[#allocation6 + $0x50] sm:$0xff]
    %v199 = vld [vmem:[#allocation6 + $0x58] sm:$0xff]
    %v200 = vld [vmem:[#allocation6 + $0x60] sm:$0xff]
    %v201 = vld [vmem:[#allocation6 + $0x68] sm:$0xff]
    %v202 = vld [vmem:[#allocation6 + $0x70] sm:$0xff]
    %v203 = vld [vmem:[#allocation6 + $0x78] sm:$0xff]
    %v204 = vld [vmem:[#allocation6 + $0x80] sm:$0xff]
    %v205 = vld [vmem:[#allocation6 + $0x88] sm:$0xff]
    %v206 = vld [vmem:[#allocation6 + $0x90] sm:$0xff]
    %v207 = vld [vmem:[#allocation6 + $0x98] sm:$0xff]
    %v208 = vld [vmem:[#allocation6 + $0xa0] sm:$0xff]
    %v209 = vld [vmem:[#allocation6 + $0xa8] sm:$0xff]
    %v210 = vld [vmem:[#allocation6 + $0xb0] sm:$0xff]
    %v211 = vld [vmem:[#allocation6 + $0xb8] sm:$0xff]
    %v212 = vld [vmem:[#allocation6 + $0xc0] sm:$0xff]
    %v213 = vld [vmem:[#allocation6 + $0xc8] sm:$0xff]
    %v214 = vld [vmem:[#allocation6 + $0xd0] sm:$0xff]
    %v215 = vld [vmem:[#allocation6 + $0xd8] sm:$0xff]
    %v216 = vld [vmem:[#allocation6 + $0xe0] sm:$0xff]
    %v217 = vld [vmem:[#allocation6 + $0xe8] sm:$0xff]
    %v218 = vld [vmem:[#allocation6 + $0xf0] sm:$0xff]
    %v219 = vld [vmem:[#allocation6 + $0xf8] sm:$0xff]
    %v220 = vld [vmem:[#allocation6 + $0x100] sm:$0xff]
    %v221 = vld [vmem:[#allocation6 + $0x108] sm:$0xff]
    %v222 = vld [vmem:[#allocation6 + $0x110] sm:$0xff]
    %v223 = vld [vmem:[#allocation6 + $0x118] sm:$0xff]
    %v224 = vld [vmem:[#allocation6 + $0x120] sm:$0xff]
    %v225 = vld [vmem:[#allocation6 + $0x128] sm:$0xff]
    %v226 = vld [vmem:[#allocation6 + $0x130] sm:$0xff]
    %v227 = vld [vmem:[#allocation6 + $0x138] sm:$0xff]
    %v228 = vld [vmem:[#allocation6 + $0x140] sm:$0xff]
    %v229 = vld [vmem:[#allocation6 + $0x148] sm:$0xff]
    %v230 = vld [vmem:[#allocation6 + $0x150] sm:$0xff]
    %v231 = vld [vmem:[#allocation6 + $0x158] sm:$0xff]
    %v232 = vld [vmem:[#allocation6 + $0x160] sm:$0xff]
    %v233 = vld [vmem:[#allocation6 + $0x168] sm:$0xff]
    %v234 = vld [vmem:[#allocation6 + $0x170] sm:$0xff]
    %v235 = vld [vmem:[#allocation6 + $0x178] sm:$0xff]
    %v236 = vld [vmem:[#allocation6 + $0x180] sm:$0xff]
    %v237 = vld [vmem:[#allocation6 + $0x188] sm:$0xff]
    %v238 = vld [vmem:[#allocation6 + $0x190] sm:$0xff]
    %v239 = vld [vmem:[#allocation6 + $0x198] sm:$0xff]
    %v240 = vld [vmem:[#allocation6 + $0x1a0] sm:$0xff]
    %v241 = vld [vmem:[#allocation6 + $0x1a8] sm:$0xff]
    %v242 = vld [vmem:[#allocation6 + $0x1b0] sm:$0xff]
    %v243 = vld [vmem:[#allocation6 + $0x1b8] sm:$0xff]
    %v244 = vld [vmem:[#allocation6 + $0x1c0] sm:$0xff]
    %v245 = vld [vmem:[#allocation6 + $0x1c8] sm:$0xff]
    %v246 = vld [vmem:[#allocation6 + $0x1d0] sm:$0xff]
    %v247 = vld [vmem:[#allocation6 + $0x1d8] sm:$0xff]
    %v248 = vld [vmem:[#allocation6 + $0x1e0] sm:$0xff]
    %v249 = vld [vmem:[#allocation6 + $0x1e8] sm:$0xff]
    %v250 = vld [vmem:[#allocation6 + $0x1f0] sm:$0xff]
    %v251 = vld [vmem:[#allocation6 + $0x1f8] sm:$0xff]
    %v252 = vld [vmem:[#allocation6 + $0x200] sm:$0xff]
    %v253 = vld [vmem:[#allocation6 + $0x208] sm:$0xff]
    %v254 = vld [vmem:[#allocation6 + $0x210] sm:$0xff]
    %v255 = vld [vmem:[#allocation6 + $0x218] sm:$0xff]
    %v256 = vld [vmem:[#allocation6 + $0x220] sm:$0xff]
    %v257 = vld [vmem:[#allocation6 + $0x228] sm:$0xff]
    %v258 = vld [vmem:[#allocation6 + $0x230] sm:$0xff]
    %v259 = vld [vmem:[#allocation6 + $0x238] sm:$0xff]
    %v260 = vld [vmem:[#allocation6 + $0x240] sm:$0xff]
    %v261 = vld [vmem:[#allocation6 + $0x248] sm:$0xff]
    %v262 = vld [vmem:[#allocation6 + $0x250] sm:$0xff]
    %v263 = vld [vmem:[#allocation6 + $0x258] sm:$0xff]
    %v264 = vld [vmem:[#allocation6 + $0x260] sm:$0xff]
    %v265 = vld [vmem:[#allocation6 + $0x268] sm:$0xff]
    %v266 = vld [vmem:[#allocation6 + $0x270] sm:$0xff]
    %v267 = vld [vmem:[#allocation6 + $0x278] sm:$0xff]
    %v268 = vld [vmem:[#allocation6 + $0x280] sm:$0xff]
    %v269 = vld [vmem:[#allocation6 + $0x288] sm:$0xff]
    %v270 = vld [vmem:[#allocation6 + $0x290] sm:$0xff]
    %v271 = vld [vmem:[#allocation6 + $0x298] sm:$0xff]
    %v272 = vld [vmem:[#allocation6 + $0x2a0] sm:$0xff]
    %v273 = vld [vmem:[#allocation6 + $0x2a8] sm:$0xff]
    %v274 = vld [vmem:[#allocation6 + $0x2b0] sm:$0xff]
    %v275 = vld [vmem:[#allocation6 + $0x2b8] sm:$0xff]
    %v276 = vld [vmem:[#allocation6 + $0x2c0] sm:$0xff]
    %v277 = vld [vmem:[#allocation6 + $0x2c8] sm:$0xff]
    %v278 = vld [vmem:[#allocation6 + $0x2d0] sm:$0xff]
    %v279 = vld [vmem:[#allocation6 + $0x2d8] sm:$0xff]
    %v280 = vld [vmem:[#allocation6 + $0x2e0] sm:$0xff]
    %v281 = vld [vmem:[#allocation6 + $0x2e8] sm:$0xff]
    %v282 = vld [vmem:[#allocation6 + $0x2f0] sm:$0xff]
    %v283 = vld [vmem:[#allocation6 + $0x2f8] sm:$0xff]
    %v284 = vld [vmem:[#allocation6 + $0x300] sm:$0xff]
    %v285 = vld [vmem:[#allocation6 + $0x308] sm:$0xff]
    %v286 = vld [vmem:[#allocation6 + $0x310] sm:$0xff]
    %v287 = vld [vmem:[#allocation6 + $0x318] sm:$0xff]
    %v288 = vld [vmem:[#allocation6 + $0x320] sm:$0xff]
    %v289 = vld [vmem:[#allocation6 + $0x328] sm:$0xff]
    %v290 = vld [vmem:[#allocation6 + $0x330] sm:$0xff]
    %v291 = vld [vmem:[#allocation6 + $0x338] sm:$0xff]
    %v292 = vld [vmem:[#allocation6 + $0x340] sm:$0xff]
    %v293 = vld [vmem:[#allocation6 + $0x348] sm:$0xff]
    %v294 = vld [vmem:[#allocation6 + $0x350] sm:$0xff]
    %v295 = vld [vmem:[#allocation6 + $0x358] sm:$0xff]
    %v296 = vld [vmem:[#allocation6 + $0x360] sm:$0xff]
    %v297 = vld [vmem:[#allocation6 + $0x368] sm:$0xff]
    %v298 = vld [vmem:[#allocation6 + $0x370] sm:$0xff]
    %v299 = vld [vmem:[#allocation6 + $0x378] sm:$0xff]
    %v300 = vld [vmem:[#allocation6 + $0x380] sm:$0xff]
    %v301 = vld [vmem:[#allocation6 + $0x388] sm:$0xff]
    %v302 = vld [vmem:[#allocation6 + $0x390] sm:$0xff]
    %v303 = vld [vmem:[#allocation6 + $0x398] sm:$0xff]
    %v304 = vld [vmem:[#allocation6 + $0x3a0] sm:$0xff]
    %v305 = vld [vmem:[#allocation6 + $0x3a8] sm:$0xff]
    %v306 = vld [vmem:[#allocation6 + $0x3b0] sm:$0xff]
    %v307 = vld [vmem:[#allocation6 + $0x3b8] sm:$0xff]
    %v308 = vld [vmem:[#allocation6 + $0x3c0] sm:$0xff]
    %v309 = vld [vmem:[#allocation6 + $0x3c8] sm:$0xff]
    %v310 = vld [vmem:[#allocation6 + $0x3d0] sm:$0xff]
    %v311 = vld [vmem:[#allocation6 + $0x3d8] sm:$0xff]
    %v312 = vld [vmem:[#allocation6 + $0x3e0] sm:$0xff]
    %v313 = vld [vmem:[#allocation6 + $0x3e8] sm:$0xff]
    %v314 = vld [vmem:[#allocation6 + $0x3f0] sm:$0xff]
    %v315 = vld [vmem:[#allocation6 + $0x3f8] sm:$0xff]
    %v444 = vunpack.c.l.b16 %v188
    %v445 = vunpack.c.h.b16 %v188
    %v446 = vunpack.c.l.b16 %v189
    %v447 = vunpack.c.h.b16 %v189
    %v448 = vunpack.c.l.b16 %v190
    %v449 = vunpack.c.h.b16 %v190
    %v450 = vunpack.c.l.b16 %v191
    %v451 = vunpack.c.h.b16 %v191
    %v452 = vunpack.c.l.b16 %v192
    %v453 = vunpack.c.h.b16 %v192
    %v454 = vunpack.c.l.b16 %v193
    %v455 = vunpack.c.h.b16 %v193
    %v456 = vunpack.c.l.b16 %v194
    %v457 = vunpack.c.h.b16 %v194
    %v458 = vunpack.c.l.b16 %v195
    %v459 = vunpack.c.h.b16 %v195
    %v460 = vunpack.c.l.b16 %v196
    %v461 = vunpack.c.h.b16 %v196
    %v462 = vunpack.c.l.b16 %v197
    %v463 = vunpack.c.h.b16 %v197
    %v464 = vunpack.c.l.b16 %v198
    %v465 = vunpack.c.h.b16 %v198
    %v466 = vunpack.c.l.b16 %v199
    %v467 = vunpack.c.h.b16 %v199
    %v468 = vunpack.c.l.b16 %v200
    %v469 = vunpack.c.h.b16 %v200
    %v470 = vunpack.c.l.b16 %v201
    %v471 = vunpack.c.h.b16 %v201
    %v472 = vunpack.c.l.b16 %v202
    %v473 = vunpack.c.h.b16 %v202
    %v474 = vunpack.c.l.b16 %v203
    %v475 = vunpack.c.h.b16 %v203
    %v476 = vunpack.c.l.b16 %v204
    %v477 = vunpack.c.h.b16 %v204
    %v478 = vunpack.c.l.b16 %v205
    %v479 = vunpack.c.h.b16 %v205
    %v480 = vunpack.c.l.b16 %v206
    %v481 = vunpack.c.h.b16 %v206
    %v482 = vunpack.c.l.b16 %v207
    %v483 = vunpack.c.h.b16 %v207
    %v484 = vunpack.c.l.b16 %v208
    %v485 = vunpack.c.h.b16 %v208
    %v486 = vunpack.c.l.b16 %v209
    %v487 = vunpack.c.h.b16 %v209
    %v488 = vunpack.c.l.b16 %v210
    %v489 = vunpack.c.h.b16 %v210
    %v490 = vunpack.c.l.b16 %v211
    %v491 = vunpack.c.h.b16 %v211
    %v492 = vunpack.c.l.b16 %v212
    %v493 = vunpack.c.h.b16 %v212
    %v494 = vunpack.c.l.b16 %v213
    %v495 = vunpack.c.h.b16 %v213
    %v496 = vunpack.c.l.b16 %v214
    %v497 = vunpack.c.h.b16 %v214
    %v498 = vunpack.c.l.b16 %v215
    %v499 = vunpack.c.h.b16 %v215
    %v500 = vunpack.c.l.b16 %v216
    %v501 = vunpack.c.h.b16 %v216
    %v502 = vunpack.c.l.b16 %v217
    %v503 = vunpack.c.h.b16 %v217
    %v504 = vunpack.c.l.b16 %v218
    %v505 = vunpack.c.h.b16 %v218
    %v506 = vunpack.c.l.b16 %v219
    %v507 = vunpack.c.h.b16 %v219
    %v508 = vunpack.c.l.b16 %v220
    %v509 = vunpack.c.h.b16 %v220
    %v510 = vunpack.c.l.b16 %v221
    %v511 = vunpack.c.h.b16 %v221
    %v512 = vunpack.c.l.b16 %v222
    %v513 = vunpack.c.h.b16 %v222
    %v514 = vunpack.c.l.b16 %v223
    %v515 = vunpack.c.h.b16 %v223
    %v516 = vunpack.c.l.b16 %v224
    %v517 = vunpack.c.h.b16 %v224
    %v518 = vunpack.c.l.b16 %v225
    %v519 = vunpack.c.h.b16 %v225
    %v520 = vunpack.c.l.b16 %v226
    %v521 = vunpack.c.h.b16 %v226
    %v522 = vunpack.c.l.b16 %v227
    %v523 = vunpack.c.h.b16 %v227
    %v524 = vunpack.c.l.b16 %v228
    %v525 = vunpack.c.h.b16 %v228
    %v526 = vunpack.c.l.b16 %v229
    %v527 = vunpack.c.h.b16 %v229
    %v528 = vunpack.c.l.b16 %v230
    %v529 = vunpack.c.h.b16 %v230
    %v530 = vunpack.c.l.b16 %v231
    %v531 = vunpack.c.h.b16 %v231
    %v532 = vunpack.c.l.b16 %v232
    %v533 = vunpack.c.h.b16 %v232
    %v534 = vunpack.c.l.b16 %v233
    %v535 = vunpack.c.h.b16 %v233
    %v536 = vunpack.c.l.b16 %v234
    %v537 = vunpack.c.h.b16 %v234
    %v538 = vunpack.c.l.b16 %v235
    %v539 = vunpack.c.h.b16 %v235
    %v540 = vunpack.c.l.b16 %v236
    %v541 = vunpack.c.h.b16 %v236
    %v542 = vunpack.c.l.b16 %v237
    %v543 = vunpack.c.h.b16 %v237
    %v544 = vunpack.c.l.b16 %v238
    %v545 = vunpack.c.h.b16 %v238
    %v546 = vunpack.c.l.b16 %v239
    %v547 = vunpack.c.h.b16 %v239
    %v548 = vunpack.c.l.b16 %v240
    %v549 = vunpack.c.h.b16 %v240
    %v550 = vunpack.c.l.b16 %v241
    %v551 = vunpack.c.h.b16 %v241
    %v552 = vunpack.c.l.b16 %v242
    %v553 = vunpack.c.h.b16 %v242
    %v554 = vunpack.c.l.b16 %v243
    %v555 = vunpack.c.h.b16 %v243
    %v556 = vunpack.c.l.b16 %v244
    %v557 = vunpack.c.h.b16 %v244
    %v558 = vunpack.c.l.b16 %v245
    %v559 = vunpack.c.h.b16 %v245
    %v560 = vunpack.c.l.b16 %v246
    %v561 = vunpack.c.h.b16 %v246
    %v562 = vunpack.c.l.b16 %v247
    %v563 = vunpack.c.h.b16 %v247
    %v564 = vunpack.c.l.b16 %v248
    %v565 = vunpack.c.h.b16 %v248
    %v566 = vunpack.c.l.b16 %v249
    %v567 = vunpack.c.h.b16 %v249
    %v568 = vunpack.c.l.b16 %v250
    %v569 = vunpack.c.h.b16 %v250
    %v570 = vunpack.c.l.b16 %v251
    %v571 = vunpack.c.h.b16 %v251
    %v572 = vunpack.c.l.b16 %v252
    %v573 = vunpack.c.h.b16 %v252
    %v574 = vunpack.c.l.b16 %v253
    %v575 = vunpack.c.h.b16 %v253
    %v576 = vunpack.c.l.b16 %v254
    %v577 = vunpack.c.h.b16 %v254
    %v578 = vunpack.c.l.b16 %v255
    %v579 = vunpack.c.h.b16 %v255
    %v580 = vunpack.c.l.b16 %v256
    %v581 = vunpack.c.h.b16 %v256
    %v582 = vunpack.c.l.b16 %v257
    %v583 = vunpack.c.h.b16 %v257
    %v584 = vunpack.c.l.b16 %v258
    %v585 = vunpack.c.h.b16 %v258
    %v586 = vunpack.c.l.b16 %v259
    %v587 = vunpack.c.h.b16 %v259
    %v588 = vunpack.c.l.b16 %v260
    %v589 = vunpack.c.h.b16 %v260
    %v590 = vunpack.c.l.b16 %v261
    %v591 = vunpack.c.h.b16 %v261
    %v592 = vunpack.c.l.b16 %v262
    %v593 = vunpack.c.h.b16 %v262
    %v594 = vunpack.c.l.b16 %v263
    %v595 = vunpack.c.h.b16 %v263
    %v596 = vunpack.c.l.b16 %v264
    %v597 = vunpack.c.h.b16 %v264
    %v598 = vunpack.c.l.b16 %v265
    %v599 = vunpack.c.h.b16 %v265
    %v600 = vunpack.c.l.b16 %v266
    %v601 = vunpack.c.h.b16 %v266
    %v602 = vunpack.c.l.b16 %v267
    %v603 = vunpack.c.h.b16 %v267
    %v604 = vunpack.c.l.b16 %v268
    %v605 = vunpack.c.h.b16 %v268
    %v606 = vunpack.c.l.b16 %v269
    %v607 = vunpack.c.h.b16 %v269
    %v608 = vunpack.c.l.b16 %v270
    %v609 = vunpack.c.h.b16 %v270
    %v610 = vunpack.c.l.b16 %v271
    %v611 = vunpack.c.h.b16 %v271
    %v612 = vunpack.c.l.b16 %v272
    %v613 = vunpack.c.h.b16 %v272
    %v614 = vunpack.c.l.b16 %v273
    %v615 = vunpack.c.h.b16 %v273
    %v616 = vunpack.c.l.b16 %v274
    %v617 = vunpack.c.h.b16 %v274
    %v618 = vunpack.c.l.b16 %v275
    %v619 = vunpack.c.h.b16 %v275
    %v620 = vunpack.c.l.b16 %v276
    %v621 = vunpack.c.h.b16 %v276
    %v622 = vunpack.c.l.b16 %v277
    %v623 = vunpack.c.h.b16 %v277
    %v624 = vunpack.c.l.b16 %v278
    %v625 = vunpack.c.h.b16 %v278
    %v626 = vunpack.c.l.b16 %v279
    %v627 = vunpack.c.h.b16 %v279
    %v628 = vunpack.c.l.b16 %v280
    %v629 = vunpack.c.h.b16 %v280
    %v630 = vunpack.c.l.b16 %v281
    %v631 = vunpack.c.h.b16 %v281
    %v632 = vunpack.c.l.b16 %v282
    %v633 = vunpack.c.h.b16 %v282
    %v634 = vunpack.c.l.b16 %v283
    %v635 = vunpack.c.h.b16 %v283
    %v636 = vunpack.c.l.b16 %v284
    %v637 = vunpack.c.h.b16 %v284
    %v638 = vunpack.c.l.b16 %v285
    %v639 = vunpack.c.h.b16 %v285
    %v640 = vunpack.c.l.b16 %v286
    %v641 = vunpack.c.h.b16 %v286
    %v642 = vunpack.c.l.b16 %v287
    %v643 = vunpack.c.h.b16 %v287
    %v644 = vunpack.c.l.b16 %v288
    %v645 = vunpack.c.h.b16 %v288
    %v646 = vunpack.c.l.b16 %v289
    %v647 = vunpack.c.h.b16 %v289
    %v648 = vunpack.c.l.b16 %v290
    %v649 = vunpack.c.h.b16 %v290
    %v650 = vunpack.c.l.b16 %v291
    %v651 = vunpack.c.h.b16 %v291
    %v652 = vunpack.c.l.b16 %v292
    %v653 = vunpack.c.h.b16 %v292
    %v654 = vunpack.c.l.b16 %v293
    %v655 = vunpack.c.h.b16 %v293
    %v656 = vunpack.c.l.b16 %v294
    %v657 = vunpack.c.h.b16 %v294
    %v658 = vunpack.c.l.b16 %v295
    %v659 = vunpack.c.h.b16 %v295
    %v660 = vunpack.c.l.b16 %v296
    %v661 = vunpack.c.h.b16 %v296
    %v662 = vunpack.c.l.b16 %v297
    %v663 = vunpack.c.h.b16 %v297
    %v664 = vunpack.c.l.b16 %v298
    %v665 = vunpack.c.h.b16 %v298
    %v666 = vunpack.c.l.b16 %v299
    %v667 = vunpack.c.h.b16 %v299
    %v668 = vunpack.c.l.b16 %v300
    %v669 = vunpack.c.h.b16 %v300
    %v670 = vunpack.c.l.b16 %v301
    %v671 = vunpack.c.h.b16 %v301
    %v672 = vunpack.c.l.b16 %v302
    %v673 = vunpack.c.h.b16 %v302
    %v674 = vunpack.c.l.b16 %v303
    %v675 = vunpack.c.h.b16 %v303
    %v676 = vunpack.c.l.b16 %v304
    %v677 = vunpack.c.h.b16 %v304
    %v678 = vunpack.c.l.b16 %v305
    %v679 = vunpack.c.h.b16 %v305
    %v680 = vunpack.c.l.b16 %v306
    %v681 = vunpack.c.h.b16 %v306
    %v682 = vunpack.c.l.b16 %v307
    %v683 = vunpack.c.h.b16 %v307
    %v684 = vunpack.c.l.b16 %v308
    %v685 = vunpack.c.h.b16 %v308
    %v686 = vunpack.c.l.b16 %v309
    %v687 = vunpack.c.h.b16 %v309
    %v688 = vunpack.c.l.b16 %v310
    %v689 = vunpack.c.h.b16 %v310
    %v690 = vunpack.c.l.b16 %v311
    %v691 = vunpack.c.h.b16 %v311
    %v692 = vunpack.c.l.b16 %v312
    %v693 = vunpack.c.h.b16 %v312
    %v694 = vunpack.c.l.b16 %v313
    %v695 = vunpack.c.h.b16 %v313
    %v696 = vunpack.c.l.b16 %v314
    %v697 = vunpack.c.h.b16 %v314
    %v698 = vunpack.c.l.b16 %v315
    %v699 = vunpack.c.h.b16 %v315
    %v700 = vpack.c.b16 %v446, %v444
    %v701 = vpack.c.b16 %v447, %v445
    %v702 = vpack.c.b16 %v450, %v448
    %v703 = vpack.c.b16 %v451, %v449
    %v704 = vpack.c.b16 %v454, %v452
    %v705 = vpack.c.b16 %v455, %v453
    %v706 = vpack.c.b16 %v458, %v456
    %v707 = vpack.c.b16 %v459, %v457
    %v708 = vpack.c.b16 %v462, %v460
    %v709 = vpack.c.b16 %v463, %v461
    %v710 = vpack.c.b16 %v466, %v464
    %v711 = vpack.c.b16 %v467, %v465
    %v712 = vpack.c.b16 %v470, %v468
    %v713 = vpack.c.b16 %v471, %v469
    %v714 = vpack.c.b16 %v474, %v472
    %v715 = vpack.c.b16 %v475, %v473
    %v716 = vpack.c.b16 %v478, %v476
    %v717 = vpack.c.b16 %v479, %v477
    %v718 = vpack.c.b16 %v482, %v480
    %v719 = vpack.c.b16 %v483, %v481
    %v720 = vpack.c.b16 %v486, %v484
    %v721 = vpack.c.b16 %v487, %v485
    %v722 = vpack.c.b16 %v490, %v488
    %v723 = vpack.c.b16 %v491, %v489
    %v724 = vpack.c.b16 %v494, %v492
    %v725 = vpack.c.b16 %v495, %v493
    %v726 = vpack.c.b16 %v498, %v496
    %v727 = vpack.c.b16 %v499, %v497
    %v728 = vpack.c.b16 %v502, %v500
    %v729 = vpack.c.b16 %v503, %v501
    %v730 = vpack.c.b16 %v506, %v504
    %v731 = vpack.c.b16 %v507, %v505
    %v732 = vpack.c.b16 %v510, %v508
    %v733 = vpack.c.b16 %v511, %v509
    %v734 = vpack.c.b16 %v514, %v512
    %v735 = vpack.c.b16 %v515, %v513
    %v736 = vpack.c.b16 %v518, %v516
    %v737 = vpack.c.b16 %v519, %v517
    %v738 = vpack.c.b16 %v522, %v520
    %v739 = vpack.c.b16 %v523, %v521
    %v740 = vpack.c.b16 %v526, %v524
    %v741 = vpack.c.b16 %v527, %v525
    %v742 = vpack.c.b16 %v530, %v528
    %v743 = vpack.c.b16 %v531, %v529
    %v744 = vpack.c.b16 %v534, %v532
    %v745 = vpack.c.b16 %v535, %v533
    %v746 = vpack.c.b16 %v538, %v536
    %v747 = vpack.c.b16 %v539, %v537
    %v748 = vpack.c.b16 %v542, %v540
    %v749 = vpack.c.b16 %v543, %v541
    %v750 = vpack.c.b16 %v546, %v544
    %v751 = vpack.c.b16 %v547, %v545
    %v752 = vpack.c.b16 %v550, %v548
    %v753 = vpack.c.b16 %v551, %v549
    %v754 = vpack.c.b16 %v554, %v552
    %v755 = vpack.c.b16 %v555, %v553
    %v756 = vpack.c.b16 %v558, %v556
    %v757 = vpack.c.b16 %v559, %v557
    %v758 = vpack.c.b16 %v562, %v560
    %v759 = vpack.c.b16 %v563, %v561
    %v760 = vpack.c.b16 %v566, %v564
    %v761 = vpack.c.b16 %v567, %v565
    %v762 = vpack.c.b16 %v570, %v568
    %v763 = vpack.c.b16 %v571, %v569
    %v764 = vpack.c.b16 %v574, %v572
    %v765 = vpack.c.b16 %v575, %v573
    %v766 = vpack.c.b16 %v578, %v576
    %v767 = vpack.c.b16 %v579, %v577
    %v768 = vpack.c.b16 %v582, %v580
    %v769 = vpack.c.b16 %v583, %v581
    %v770 = vpack.c.b16 %v586, %v584
    %v771 = vpack.c.b16 %v587, %v585
    %v772 = vpack.c.b16 %v590, %v588
    %v773 = vpack.c.b16 %v591, %v589
    %v774 = vpack.c.b16 %v594, %v592
    %v775 = vpack.c.b16 %v595, %v593
    %v776 = vpack.c.b16 %v598, %v596
    %v777 = vpack.c.b16 %v599, %v597
    %v778 = vpack.c.b16 %v602, %v600
    %v779 = vpack.c.b16 %v603, %v601
    %v780 = vpack.c.b16 %v606, %v604
    %v781 = vpack.c.b16 %v607, %v605
    %v782 = vpack.c.b16 %v610, %v608
    %v783 = vpack.c.b16 %v611, %v609
    %v784 = vpack.c.b16 %v614, %v612
    %v785 = vpack.c.b16 %v615, %v613
    %v786 = vpack.c.b16 %v618, %v616
    %v787 = vpack.c.b16 %v619, %v617
    %v788 = vpack.c.b16 %v622, %v620
    %v789 = vpack.c.b16 %v623, %v621
    %v790 = vpack.c.b16 %v626, %v624
    %v791 = vpack.c.b16 %v627, %v625
    %v792 = vpack.c.b16 %v630, %v628
    %v793 = vpack.c.b16 %v631, %v629
    %v794 = vpack.c.b16 %v634, %v632
    %v795 = vpack.c.b16 %v635, %v633
    %v796 = vpack.c.b16 %v638, %v636
    %v797 = vpack.c.b16 %v639, %v637
    %v798 = vpack.c.b16 %v642, %v640
    %v799 = vpack.c.b16 %v643, %v641
    %v800 = vpack.c.b16 %v646, %v644
    %v801 = vpack.c.b16 %v647, %v645
    %v802 = vpack.c.b16 %v650, %v648
    %v803 = vpack.c.b16 %v651, %v649
    %v804 = vpack.c.b16 %v654, %v652
    %v805 = vpack.c.b16 %v655, %v653
    %v806 = vpack.c.b16 %v658, %v656
    %v807 = vpack.c.b16 %v659, %v657
    %v808 = vpack.c.b16 %v662, %v660
    %v809 = vpack.c.b16 %v663, %v661
    %v810 = vpack.c.b16 %v666, %v664
    %v811 = vpack.c.b16 %v667, %v665
    %v812 = vpack.c.b16 %v670, %v668
    %v813 = vpack.c.b16 %v671, %v669
    %v814 = vpack.c.b16 %v674, %v672
    %v815 = vpack.c.b16 %v675, %v673
    %v816 = vpack.c.b16 %v678, %v676
    %v817 = vpack.c.b16 %v679, %v677
    %v818 = vpack.c.b16 %v682, %v680
    %v819 = vpack.c.b16 %v683, %v681
    %v820 = vpack.c.b16 %v686, %v684
    %v821 = vpack.c.b16 %v687, %v685
    %v822 = vpack.c.b16 %v690, %v688
    %v823 = vpack.c.b16 %v691, %v689
    %v824 = vpack.c.b16 %v694, %v692
    %v825 = vpack.c.b16 %v695, %v693
    %v826 = vpack.c.b16 %v698, %v696
    %v827 = vpack.c.b16 %v699, %v697
    %956 = vmatpush.bf16.msra.mxu0 %v714
    %957 = vmatpush.bf16.msra.mxu0 %v712
    %958 = vmatpush.bf16.msra.mxu0 %v710
    %959 = vmatpush.bf16.msra.mxu0 %v708
    %960 = vmatpush.bf16.msra.mxu0 %v706
    %961 = vmatpush.bf16.msra.mxu0 %v704
    %962 = vmatpush.bf16.msra.mxu0 %v702
    %963 = vmatpush.bf16.msra.mxu0 %v700
    %964 = vmatmul.bf16.gmra.mxu0 %v180
    %v965 = vpop.f32.mrf.mxu0
    %v966 = vadd.f32 0.0, %v965
    %v967 = vpop.f32.mrf.mxu0
    %968 = vdwg.mxu0
    %969 = vmatpush.bf16.msra.mxu0 %v730
    %970 = vmatpush.bf16.msra.mxu0 %v728
    %971 = vmatpush.bf16.msra.mxu0 %v726
    %972 = vmatpush.bf16.msra.mxu0 %v724
    %973 = vmatpush.bf16.msra.mxu0 %v722
    %974 = vmatpush.bf16.msra.mxu0 %v720
    %975 = vmatpush.bf16.msra.mxu0 %v718
    %976 = vmatpush.bf16.msra.mxu0 %v716
    %977 = vmatmul.bf16.gmra.mxu0 %v181
    %v978 = vpop.f32.mrf.mxu0
    %v979 = vadd.f32 %v966, %v978
    %v980 = vpop.f32.mrf.mxu0
    %981 = vdwg.mxu0
    %982 = vmatpush.bf16.msra.mxu0 %v746
    %983 = vmatpush.bf16.msra.mxu0 %v744
    %984 = vmatpush.bf16.msra.mxu0 %v742
    %985 = vmatpush.bf16.msra.mxu0 %v740
    %986 = vmatpush.bf16.msra.mxu0 %v738
    %987 = vmatpush.bf16.msra.mxu0 %v736
    %988 = vmatpush.bf16.msra.mxu0 %v734
    %989 = vmatpush.bf16.msra.mxu0 %v732
    %990 = vmatmul.bf16.gmra.mxu0 %v182
    %v991 = vpop.f32.mrf.mxu0
    %v992 = vadd.f32 %v979, %v991
    %v993 = vpop.f32.mrf.mxu0
    %994 = vdwg.mxu0
    %995 = vmatpush.bf16.msra.mxu0 %v762
    %996 = vmatpush.bf16.msra.mxu0 %v760
    %997 = vmatpush.bf16.msra.mxu0 %v758
    %998 = vmatpush.bf16.msra.mxu0 %v756
    %999 = vmatpush.bf16.msra.mxu0 %v754
    %1000 = vmatpush.bf16.msra.mxu0 %v752
    %1001 = vmatpush.bf16.msra.mxu0 %v750
    %1002 = vmatpush.bf16.msra.mxu0 %v748
    %1003 = vmatmul.bf16.gmra.mxu0 %v183
    %v1004 = vpop.f32.mrf.mxu0
    %v1005 = vadd.f32 %v992, %v1004
    %v1006 = vpop.f32.mrf.mxu0
    %1007 = vdwg.mxu0
    %1008 = vmatpush.bf16.msra.mxu0 %v778
    %1009 = vmatpush.bf16.msra.mxu0 %v776
    %1010 = vmatpush.bf16.msra.mxu0 %v774
    %1011 = vmatpush.bf16.msra.mxu0 %v772
    %1012 = vmatpush.bf16.msra.mxu0 %v770
    %1013 = vmatpush.bf16.msra.mxu0 %v768
    %1014 = vmatpush.bf16.msra.mxu0 %v766
    %1015 = vmatpush.bf16.msra.mxu0 %v764
    %1016 = vmatmul.bf16.gmra.mxu0 %v184
    %v1017 = vpop.f32.mrf.mxu0
    %v1018 = vadd.f32 %v1005, %v1017
    %v1019 = vpop.f32.mrf.mxu0
    %1020 = vdwg.mxu0
    %1021 = vmatpush.bf16.msra.mxu0 %v794
    %1022 = vmatpush.bf16.msra.mxu0 %v792
    %1023 = vmatpush.bf16.msra.mxu0 %v790
    %1024 = vmatpush.bf16.msra.mxu0 %v788
    %1025 = vmatpush.bf16.msra.mxu0 %v786
    %1026 = vmatpush.bf16.msra.mxu0 %v784
    %1027 = vmatpush.bf16.msra.mxu0 %v782
    %1028 = vmatpush.bf16.msra.mxu0 %v780
    %1029 = vmatmul.bf16.gmra.mxu0 %v185
    %v1030 = vpop.f32.mrf.mxu0
    %v1031 = vadd.f32 %v1018, %v1030
    %v1032 = vpop.f32.mrf.mxu0
    %1033 = vdwg.mxu0
    %1034 = vmatpush.bf16.msra.mxu0 %v810
    %1035 = vmatpush.bf16.msra.mxu0 %v808
    %1036 = vmatpush.bf16.msra.mxu0 %v806
    %1037 = vmatpush.bf16.msra.mxu0 %v804
    %1038 = vmatpush.bf16.msra.mxu0 %v802
    %1039 = vmatpush.bf16.msra.mxu0 %v800
    %1040 = vmatpush.bf16.msra.mxu0 %v798
    %1041 = vmatpush.bf16.msra.mxu0 %v796
    %1042 = vmatmul.bf16.gmra.mxu0 %v186
    %v1043 = vpop.f32.mrf.mxu0
    %v1044 = vadd.f32 %v1031, %v1043
    %v1045 = vpop.f32.mrf.mxu0
    %1046 = vdwg.mxu0
    %1047 = vmatpush.bf16.msra.mxu0 %v826
    %1048 = vmatpush.bf16.msra.mxu0 %v824
    %1049 = vmatpush.bf16.msra.mxu0 %v822
    %1050 = vmatpush.bf16.msra.mxu0 %v820
    %1051 = vmatpush.bf16.msra.mxu0 %v818
    %1052 = vmatpush.bf16.msra.mxu0 %v816
    %1053 = vmatpush.bf16.msra.mxu0 %v814
    %1054 = vmatpush.bf16.msra.mxu0 %v812
    %1055 = vmatmul.bf16.gmra.mxu0 %v187
    %v1056 = vpop.f32.mrf.mxu0
    %v1057 = vadd.f32 %v1044, %v1056
    %v1058 = vpop.f32.mrf.mxu0
    %1059 = vdwg.mxu0
    %1060 = vmatpush.bf16.msra.mxu0 %v715
    %1061 = vmatpush.bf16.msra.mxu0 %v713
    %1062 = vmatpush.bf16.msra.mxu0 %v711
    %1063 = vmatpush.bf16.msra.mxu0 %v709
    %1064 = vmatpush.bf16.msra.mxu0 %v707
    %1065 = vmatpush.bf16.msra.mxu0 %v705
    %1066 = vmatpush.bf16.msra.mxu0 %v703
    %1067 = vmatpush.bf16.msra.mxu0 %v701
    %1068 = vmatmul.bf16.gmra.mxu0 %v180
    %v1069 = vpop.f32.mrf.mxu0
    %v1070 = vadd.f32 0.0, %v1069
    %v1071 = vpop.f32.mrf.mxu0
    %1072 = vdwg.mxu0
    %1073 = vmatpush.bf16.msra.mxu0 %v731
    %1074 = vmatpush.bf16.msra.mxu0 %v729
    %1075 = vmatpush.bf16.msra.mxu0 %v727
    %1076 = vmatpush.bf16.msra.mxu0 %v725
    %1077 = vmatpush.bf16.msra.mxu0 %v723
    %1078 = vmatpush.bf16.msra.mxu0 %v721
    %1079 = vmatpush.bf16.msra.mxu0 %v719
    %1080 = vmatpush.bf16.msra.mxu0 %v717
    %1081 = vmatmul.bf16.gmra.mxu0 %v181
    %v1082 = vpop.f32.mrf.mxu0
    %v1083 = vadd.f32 %v1070, %v1082
    %v1084 = vpop.f32.mrf.mxu0
    %1085 = vdwg.mxu0
    %1086 = vmatpush.bf16.msra.mxu0 %v747
    %1087 = vmatpush.bf16.msra.mxu0 %v745
    %1088 = vmatpush.bf16.msra.mxu0 %v743
    %1089 = vmatpush.bf16.msra.mxu0 %v741
    %1090 = vmatpush.bf16.msra.mxu0 %v739
    %1091 = vmatpush.bf16.msra.mxu0 %v737
    %1092 = vmatpush.bf16.msra.mxu0 %v735
    %1093 = vmatpush.bf16.msra.mxu0 %v733
    %1094 = vmatmul.bf16.gmra.mxu0 %v182
    %v1095 = vpop.f32.mrf.mxu0
    %v1096 = vadd.f32 %v1083, %v1095
    %v1097 = vpop.f32.mrf.mxu0
    %1098 = vdwg.mxu0
    %1099 = vmatpush.bf16.msra.mxu0 %v763
    %1100 = vmatpush.bf16.msra.mxu0 %v761
    %1101 = vmatpush.bf16.msra.mxu0 %v759
    %1102 = vmatpush.bf16.msra.mxu0 %v757
    %1103 = vmatpush.bf16.msra.mxu0 %v755
    %1104 = vmatpush.bf16.msra.mxu0 %v753
    %1105 = vmatpush.bf16.msra.mxu0 %v751
    %1106 = vmatpush.bf16.msra.mxu0 %v749
    %1107 = vmatmul.bf16.gmra.mxu0 %v183
    %v1108 = vpop.f32.mrf.mxu0
    %v1109 = vadd.f32 %v1096, %v1108
    %v1110 = vpop.f32.mrf.mxu0
    %1111 = vdwg.mxu0
    %1112 = vmatpush.bf16.msra.mxu0 %v779
    %1113 = vmatpush.bf16.msra.mxu0 %v777
    %1114 = vmatpush.bf16.msra.mxu0 %v775
    %1115 = vmatpush.bf16.msra.mxu0 %v773
    %1116 = vmatpush.bf16.msra.mxu0 %v771
    %1117 = vmatpush.bf16.msra.mxu0 %v769
    %1118 = vmatpush.bf16.msra.mxu0 %v767
    %1119 = vmatpush.bf16.msra.mxu0 %v765
    %1120 = vmatmul.bf16.gmra.mxu0 %v184
    %v1121 = vpop.f32.mrf.mxu0
    %v1122 = vadd.f32 %v1109, %v1121
    %v1123 = vpop.f32.mrf.mxu0
    %1124 = vdwg.mxu0
    %1125 = vmatpush.bf16.msra.mxu0 %v795
    %1126 = vmatpush.bf16.msra.mxu0 %v793
    %1127 = vmatpush.bf16.msra.mxu0 %v791
    %1128 = vmatpush.bf16.msra.mxu0 %v789
    %1129 = vmatpush.bf16.msra.mxu0 %v787
    %1130 = vmatpush.bf16.msra.mxu0 %v785
    %1131 = vmatpush.bf16.msra.mxu0 %v783
    %1132 = vmatpush.bf16.msra.mxu0 %v781
    %1133 = vmatmul.bf16.gmra.mxu0 %v185
    %v1134 = vpop.f32.mrf.mxu0
    %v1135 = vadd.f32 %v1122, %v1134
    %v1136 = vpop.f32.mrf.mxu0
    %1137 = vdwg.mxu0
    %1138 = vmatpush.bf16.msra.mxu0 %v811
    %1139 = vmatpush.bf16.msra.mxu0 %v809
    %1140 = vmatpush.bf16.msra.mxu0 %v807
    %1141 = vmatpush.bf16.msra.mxu0 %v805
    %1142 = vmatpush.bf16.msra.mxu0 %v803
    %1143 = vmatpush.bf16.msra.mxu0 %v801
    %1144 = vmatpush.bf16.msra.mxu0 %v799
    %1145 = vmatpush.bf16.msra.mxu0 %v797
    %1146 = vmatmul.bf16.gmra.mxu0 %v186
    %v1147 = vpop.f32.mrf.mxu0
    %v1148 = vadd.f32 %v1135, %v1147
    %v1149 = vpop.f32.mrf.mxu0
    %1150 = vdwg.mxu0
    %1151 = vmatpush.bf16.msra.mxu0 %v827
    %1152 = vmatpush.bf16.msra.mxu0 %v825
    %1153 = vmatpush.bf16.msra.mxu0 %v823
    %1154 = vmatpush.bf16.msra.mxu0 %v821
    %1155 = vmatpush.bf16.msra.mxu0 %v819
    %1156 = vmatpush.bf16.msra.mxu0 %v817
    %1157 = vmatpush.bf16.msra.mxu0 %v815
    %1158 = vmatpush.bf16.msra.mxu0 %v813
    %1159 = vmatmul.bf16.gmra.mxu0 %v187
    %v1160 = vpop.f32.mrf.mxu0
    %v1161 = vadd.f32 %v1148, %v1160
    %v1162 = vpop.f32.mrf.mxu0
    %1163 = vdwg.mxu0
    %v1164 = vadd.f32 %v131, %v1057
    %v1165 = vadd.f32 %v132, %v1161
    %1166 = vst [vmem:[#allocation2] sm:$0xff] %v1164
    %1167 = vst [vmem:[#allocation2 + $0x8] sm:$0xff] %v1165
    // Predicated region
    $region66: #{fused_s0.1} parent=1 // pred_check
      %p1168 = pneg %p125
    $region67: #{fused_s0.1} parent=1 // pred_check_branch
      %1170 = sbr.rel (%p1168) target = $region69
    $region68: #{fused_s0.1} parent=1 // pred_region
      %v1171 = vld [vmem:[#allocation2] sm:$0xff]
      %v1172 = vld [vmem:[#allocation2 + $0x8] sm:$0xff]
      %v1173 = vld [vmem:[#allocation8] sm:$0x3]
      %v1175 = vperm.slane %v1173, 0
      %v1176 = vperm.slane %v1173, 1
      %v1179 = vadd.f32 %v1171, %v1175
      %v1180 = vadd.f32 %v1172, %v1176
      %v1181 = vtanh.pop %v1179
      %v1182 = vtanh.pop %v1180
      %v1183 = vpack.c.bf16 %v1181, %v1181
      %v1184 = vpack.c.bf16 %v1182, %v1182
      %v1185 = vld [vmem:[#allocation9] sm:$0xf]
      %v1186 = vld [vmem:[#allocation9 + $0x4] sm:$0xf]
      %v1187 = vld [vmem:[#allocation9 + $0x8] sm:$0xf]
      %v1188 = vld [vmem:[#allocation9 + $0xc] sm:$0xf]
      %v1189 = vld [vmem:[#allocation9 + $0x10] sm:$0xf]
      %v1190 = vld [vmem:[#allocation9 + $0x14] sm:$0xf]
      %v1191 = vld [vmem:[#allocation9 + $0x18] sm:$0xf]
      %v1192 = vld [vmem:[#allocation9 + $0x1c] sm:$0xf]
      %v1193 = vld [vmem:[#allocation9 + $0x20] sm:$0xf]
      %v1194 = vld [vmem:[#allocation9 + $0x24] sm:$0xf]
      %v1195 = vld [vmem:[#allocation9 + $0x28] sm:$0xf]
      %v1196 = vld [vmem:[#allocation9 + $0x2c] sm:$0xf]
      %v1197 = vld [vmem:[#allocation9 + $0x30] sm:$0xf]
      %v1198 = vld [vmem:[#allocation9 + $0x34] sm:$0xf]
      %v1199 = vld [vmem:[#allocation9 + $0x38] sm:$0xf]
      %v1200 = vld [vmem:[#allocation9 + $0x3c] sm:$0xf]
      %v1201 = vld [vmem:[#allocation9 + $0x40] sm:$0xf]
      %v1202 = vld [vmem:[#allocation9 + $0x44] sm:$0xf]
      %v1203 = vld [vmem:[#allocation9 + $0x48] sm:$0xf]
      %v1204 = vld [vmem:[#allocation9 + $0x4c] sm:$0xf]
      %v1205 = vld [vmem:[#allocation9 + $0x50] sm:$0xf]
      %v1206 = vld [vmem:[#allocation9 + $0x54] sm:$0xf]
      %v1207 = vld [vmem:[#allocation9 + $0x58] sm:$0xf]
      %v1208 = vld [vmem:[#allocation9 + $0x5c] sm:$0xf]
      %v1209 = vld [vmem:[#allocation9 + $0x60] sm:$0xf]
      %v1210 = vld [vmem:[#allocation9 + $0x64] sm:$0xf]
      %v1211 = vld [vmem:[#allocation9 + $0x68] sm:$0xf]
      %v1212 = vld [vmem:[#allocation9 + $0x6c] sm:$0xf]
      %v1213 = vld [vmem:[#allocation9 + $0x70] sm:$0xf]
      %v1214 = vld [vmem:[#allocation9 + $0x74] sm:$0xf]
      %v1215 = vld [vmem:[#allocation9 + $0x78] sm:$0xf]
      %v1216 = vld [vmem:[#allocation9 + $0x7c] sm:$0xf]
      %v1217 = vld [vmem:[%s4] sm:$0x1]
      %v1219 = vperm.slane %v1217, 0
      %v1253 = vunpack.c.l.b16 %v1185
      %v1254 = vunpack.c.l.b16 %v1186
      %v1255 = vunpack.c.l.b16 %v1187
      %v1256 = vunpack.c.l.b16 %v1188
      %v1257 = vunpack.c.l.b16 %v1189
      %v1258 = vunpack.c.l.b16 %v1190
      %v1259 = vunpack.c.l.b16 %v1191
      %v1260 = vunpack.c.l.b16 %v1192
      %v1261 = vunpack.c.l.b16 %v1193
      %v1262 = vunpack.c.l.b16 %v1194
      %v1263 = vunpack.c.l.b16 %v1195
      %v1264 = vunpack.c.l.b16 %v1196
      %v1265 = vunpack.c.l.b16 %v1197
      %v1266 = vunpack.c.l.b16 %v1198
      %v1267 = vunpack.c.l.b16 %v1199
      %v1268 = vunpack.c.l.b16 %v1200
      %v1269 = vunpack.c.l.b16 %v1201
      %v1270 = vunpack.c.l.b16 %v1202
      %v1271 = vunpack.c.l.b16 %v1203
      %v1272 = vunpack.c.l.b16 %v1204
      %v1273 = vunpack.c.l.b16 %v1205
      %v1274 = vunpack.c.l.b16 %v1206
      %v1275 = vunpack.c.l.b16 %v1207
      %v1276 = vunpack.c.l.b16 %v1208
      %v1277 = vunpack.c.l.b16 %v1209
      %v1278 = vunpack.c.l.b16 %v1210
      %v1279 = vunpack.c.l.b16 %v1211
      %v1280 = vunpack.c.l.b16 %v1212
      %v1281 = vunpack.c.l.b16 %v1213
      %v1282 = vunpack.c.l.b16 %v1214
      %v1283 = vunpack.c.l.b16 %v1215
      %v1284 = vunpack.c.l.b16 %v1216
      %v1285 = vpack.c.b16 %v1254, %v1253
      %v1286 = vpack.c.b16 %v1256, %v1255
      %v1287 = vpack.c.b16 %v1258, %v1257
      %v1288 = vpack.c.b16 %v1260, %v1259
      %v1289 = vpack.c.b16 %v1262, %v1261
      %v1290 = vpack.c.b16 %v1264, %v1263
      %v1291 = vpack.c.b16 %v1266, %v1265
      %v1292 = vpack.c.b16 %v1268, %v1267
      %v1293 = vpack.c.b16 %v1270, %v1269
      %v1294 = vpack.c.b16 %v1272, %v1271
      %v1295 = vpack.c.b16 %v1274, %v1273
      %v1296 = vpack.c.b16 %v1276, %v1275
      %v1297 = vpack.c.b16 %v1278, %v1277
      %v1298 = vpack.c.b16 %v1280, %v1279
      %v1299 = vpack.c.b16 %v1282, %v1281
      %v1300 = vpack.c.b16 %v1284, %v1283
      %1317 = vmatpush.bf16.msra.mxu0 %v1292
      %1318 = vmatpush.bf16.msra.mxu0 %v1291
      %1319 = vmatpush.bf16.msra.mxu0 %v1290
      %1320 = vmatpush.bf16.msra.mxu0 %v1289
      %1321 = vmatpush.bf16.msra.mxu0 %v1288
      %1322 = vmatpush.bf16.msra.mxu0 %v1287
      %1323 = vmatpush.bf16.msra.mxu0 %v1286
      %1324 = vmatpush.bf16.msra.mxu0 %v1285
      %1325 = vmatmul.bf16.gmra.mxu0 %v1183
      %v1326 = vpop.f32.mrf.mxu0
      %v1327 = vadd.f32 %v1219, %v1326
      %v1328 = vpop.f32.mrf.mxu0
      %1329 = vdwg.mxu0
      %1330 = vmatpush.bf16.msra.mxu0 %v1300
      %1331 = vmatpush.bf16.msra.mxu0 %v1299
      %1332 = vmatpush.bf16.msra.mxu0 %v1298
      %1333 = vmatpush.bf16.msra.mxu0 %v1297
      %1334 = vmatpush.bf16.msra.mxu0 %v1296
      %1335 = vmatpush.bf16.msra.mxu0 %v1295
      %1336 = vmatpush.bf16.msra.mxu0 %v1294
      %1337 = vmatpush.bf16.msra.mxu0 %v1293
      %1338 = vmatmul.bf16.gmra.mxu0 %v1184
      %v1339 = vpop.f32.mrf.mxu0
      %v1340 = vadd.f32 %v1327, %v1339
      %v1341 = vpop.f32.mrf.mxu0
      %1342 = vdwg.mxu0
      %v1343 = vpack.c.bf16 %v1340, %v1340
      %v1344 = vld [vmem:[#allocation11] sm:$0xff]
      %v1345 = vld [vmem:[#allocation11 + $0x8] sm:$0xff]
      %v1346 = vld [vmem:[#allocation11 + $0x10] sm:$0xff]
      %v1347 = vld [vmem:[#allocation11 + $0x18] sm:$0xff]
      %v1348 = vld [vmem:[#allocation11 + $0x20] sm:$0xff]
      %v1349 = vld [vmem:[#allocation11 + $0x28] sm:$0xff]
      %v1350 = vld [vmem:[#allocation11 + $0x30] sm:$0xff]
      %v1351 = vld [vmem:[#allocation11 + $0x38] sm:$0xff]
      %v1352 = vld [vmem:[#allocation11 + $0x40] sm:$0xff]
      %v1353 = vld [vmem:[#allocation11 + $0x48] sm:$0xff]
      %v1354 = vld [vmem:[#allocation11 + $0x50] sm:$0xff]
      %v1355 = vld [vmem:[#allocation11 + $0x58] sm:$0xff]
      %v1356 = vld [vmem:[#allocation11 + $0x60] sm:$0xff]
      %v1357 = vld [vmem:[#allocation11 + $0x68] sm:$0xff]
      %v1358 = vld [vmem:[#allocation11 + $0x70] sm:$0xff]
      %v1359 = vld [vmem:[#allocation11 + $0x78] sm:$0xff]
      %v1360 = vld [vmem:[%s6] sm:$0x3]
      %v1362 = vperm.slane %v1360, 0
      %v1363 = vperm.slane %v1360, 1
      %v1382 = vunpack.c.l.b16 %v1344
      %v1383 = vunpack.c.h.b16 %v1344
      %v1384 = vunpack.c.l.b16 %v1345
      %v1385 = vunpack.c.h.b16 %v1345
      %v1386 = vunpack.c.l.b16 %v1346
      %v1387 = vunpack.c.h.b16 %v1346
      %v1388 = vunpack.c.l.b16 %v1347
      %v1389 = vunpack.c.h.b16 %v1347
      %v1390 = vunpack.c.l.b16 %v1348
      %v1391 = vunpack.c.h.b16 %v1348
      %v1392 = vunpack.c.l.b16 %v1349
      %v1393 = vunpack.c.h.b16 %v1349
      %v1394 = vunpack.c.l.b16 %v1350
      %v1395 = vunpack.c.h.b16 %v1350
      %v1396 = vunpack.c.l.b16 %v1351
      %v1397 = vunpack.c.h.b16 %v1351
      %v1398 = vunpack.c.l.b16 %v1352
      %v1399 = vunpack.c.h.b16 %v1352
      %v1400 = vunpack.c.l.b16 %v1353
      %v1401 = vunpack.c.h.b16 %v1353
      %v1402 = vunpack.c.l.b16 %v1354
      %v1403 = vunpack.c.h.b16 %v1354
      %v1404 = vunpack.c.l.b16 %v1355
      %v1405 = vunpack.c.h.b16 %v1355
      %v1406 = vunpack.c.l.b16 %v1356
      %v1407 = vunpack.c.h.b16 %v1356
      %v1408 = vunpack.c.l.b16 %v1357
      %v1409 = vunpack.c.h.b16 %v1357
      %v1410 = vunpack.c.l.b16 %v1358
      %v1411 = vunpack.c.h.b16 %v1358
      %v1412 = vunpack.c.l.b16 %v1359
      %v1413 = vunpack.c.h.b16 %v1359
      %v1414 = vpack.c.b16 %v1384, %v1382
      %v1415 = vpack.c.b16 %v1385, %v1383
      %v1416 = vpack.c.b16 %v1388, %v1386
      %v1417 = vpack.c.b16 %v1389, %v1387
      %v1418 = vpack.c.b16 %v1392, %v1390
      %v1419 = vpack.c.b16 %v1393, %v1391
      %v1420 = vpack.c.b16 %v1396, %v1394
      %v1421 = vpack.c.b16 %v1397, %v1395
      %v1422 = vpack.c.b16 %v1400, %v1398
      %v1423 = vpack.c.b16 %v1401, %v1399
      %v1424 = vpack.c.b16 %v1404, %v1402
      %v1425 = vpack.c.b16 %v1405, %v1403
      %v1426 = vpack.c.b16 %v1408, %v1406
      %v1427 = vpack.c.b16 %v1409, %v1407
      %v1428 = vpack.c.b16 %v1412, %v1410
      %v1429 = vpack.c.b16 %v1413, %v1411
      %1446 = vmatpush.bf16.msra.mxu0 %v1428
      %1447 = vmatpush.bf16.msra.mxu0 %v1426
      %1448 = vmatpush.bf16.msra.mxu0 %v1424
      %1449 = vmatpush.bf16.msra.mxu0 %v1422
      %1450 = vmatpush.bf16.msra.mxu0 %v1420
      %1451 = vmatpush.bf16.msra.mxu0 %v1418
      %1452 = vmatpush.bf16.msra.mxu0 %v1416
      %1453 = vmatpush.bf16.msra.mxu0 %v1414
      %1454 = vmatmul.bf16.gmra.mxu0 %v1343
      %v1455 = vpop.f32.mrf.mxu0
      %v1456 = vadd.f32 %v1362, %v1455
      %v1457 = vpop.f32.mrf.mxu0
      %1458 = vdwg.mxu0
      %1459 = vmatpush.bf16.msra.mxu0 %v1429
      %1460 = vmatpush.bf16.msra.mxu0 %v1427
      %1461 = vmatpush.bf16.msra.mxu0 %v1425
      %1462 = vmatpush.bf16.msra.mxu0 %v1423
      %1463 = vmatpush.bf16.msra.mxu0 %v1421
      %1464 = vmatpush.bf16.msra.mxu0 %v1419
      %1465 = vmatpush.bf16.msra.mxu0 %v1417
      %1466 = vmatpush.bf16.msra.mxu0 %v1415
      %1467 = vmatmul.bf16.gmra.mxu0 %v1343
      %v1468 = vpop.f32.mrf.mxu0
      %v1469 = vadd.f32 %v1363, %v1468
      %v1470 = vpop.f32.mrf.mxu0
      %1471 = vdwg.mxu0
      %v1472 = vtanh.pop %v1456
      %v1473 = vtanh.pop %v1469
      %v1474 = vpack.c.bf16 %v1472, %v1472
      %v1475 = vpack.c.bf16 %v1473, %v1473
      %v1476 = vld [vmem:[#allocation12] sm:$0xf]
      %v1477 = vld [vmem:[#allocation12 + $0x4] sm:$0xf]
      %v1478 = vld [vmem:[#allocation12 + $0x8] sm:$0xf]
      %v1479 = vld [vmem:[#allocation12 + $0xc] sm:$0xf]
      %v1480 = vld [vmem:[#allocation12 + $0x10] sm:$0xf]
      %v1481 = vld [vmem:[#allocation12 + $0x14] sm:$0xf]
      %v1482 = vld [vmem:[#allocation12 + $0x18] sm:$0xf]
      %v1483 = vld [vmem:[#allocation12 + $0x1c] sm:$0xf]
      %v1484 = vld [vmem:[#allocation12 + $0x20] sm:$0xf]
      %v1485 = vld [vmem:[#allocation12 + $0x24] sm:$0xf]
      %v1486 = vld [vmem:[#allocation12 + $0x28] sm:$0xf]
      %v1487 = vld [vmem:[#allocation12 + $0x2c] sm:$0xf]
      %v1488 = vld [vmem:[#allocation12 + $0x30] sm:$0xf]
      %v1489 = vld [vmem:[#allocation12 + $0x34] sm:$0xf]
      %v1490 = vld [vmem:[#allocation12 + $0x38] sm:$0xf]
      %v1491 = vld [vmem:[#allocation12 + $0x3c] sm:$0xf]
      %v1492 = vld [vmem:[#allocation12 + $0x40] sm:$0xf]
      %v1493 = vld [vmem:[#allocation12 + $0x44] sm:$0xf]
      %v1494 = vld [vmem:[#allocation12 + $0x48] sm:$0xf]
      %v1495 = vld [vmem:[#allocation12 + $0x4c] sm:$0xf]
      %v1496 = vld [vmem:[#allocation12 + $0x50] sm:$0xf]
      %v1497 = vld [vmem:[#allocation12 + $0x54] sm:$0xf]
      %v1498 = vld [vmem:[#allocation12 + $0x58] sm:$0xf]
      %v1499 = vld [vmem:[#allocation12 + $0x5c] sm:$0xf]
      %v1500 = vld [vmem:[#allocation12 + $0x60] sm:$0xf]
      %v1501 = vld [vmem:[#allocation12 + $0x64] sm:$0xf]
      %v1502 = vld [vmem:[#allocation12 + $0x68] sm:$0xf]
      %v1503 = vld [vmem:[#allocation12 + $0x6c] sm:$0xf]
      %v1504 = vld [vmem:[#allocation12 + $0x70] sm:$0xf]
      %v1505 = vld [vmem:[#allocation12 + $0x74] sm:$0xf]
      %v1506 = vld [vmem:[#allocation12 + $0x78] sm:$0xf]
      %v1507 = vld [vmem:[#allocation12 + $0x7c] sm:$0xf]
      %v1508 = vld [vmem:[%s8] sm:$0x1]
      %v1510 = vperm.slane %v1508, 0
      %v1544 = vunpack.c.l.b16 %v1476
      %v1545 = vunpack.c.l.b16 %v1477
      %v1546 = vunpack.c.l.b16 %v1478
      %v1547 = vunpack.c.l.b16 %v1479
      %v1548 = vunpack.c.l.b16 %v1480
      %v1549 = vunpack.c.l.b16 %v1481
      %v1550 = vunpack.c.l.b16 %v1482
      %v1551 = vunpack.c.l.b16 %v1483
      %v1552 = vunpack.c.l.b16 %v1484
      %v1553 = vunpack.c.l.b16 %v1485
      %v1554 = vunpack.c.l.b16 %v1486
      %v1555 = vunpack.c.l.b16 %v1487
      %v1556 = vunpack.c.l.b16 %v1488
      %v1557 = vunpack.c.l.b16 %v1489
      %v1558 = vunpack.c.l.b16 %v1490
      %v1559 = vunpack.c.l.b16 %v1491
      %v1560 = vunpack.c.l.b16 %v1492
      %v1561 = vunpack.c.l.b16 %v1493
      %v1562 = vunpack.c.l.b16 %v1494
      %v1563 = vunpack.c.l.b16 %v1495
      %v1564 = vunpack.c.l.b16 %v1496
      %v1565 = vunpack.c.l.b16 %v1497
      %v1566 = vunpack.c.l.b16 %v1498
      %v1567 = vunpack.c.l.b16 %v1499
      %v1568 = vunpack.c.l.b16 %v1500
      %v1569 = vunpack.c.l.b16 %v1501
      %v1570 = vunpack.c.l.b16 %v1502
      %v1571 = vunpack.c.l.b16 %v1503
      %v1572 = vunpack.c.l.b16 %v1504
      %v1573 = vunpack.c.l.b16 %v1505
      %v1574 = vunpack.c.l.b16 %v1506
      %v1575 = vunpack.c.l.b16 %v1507
      %v1576 = vpack.c.b16 %v1545, %v1544
      %v1577 = vpack.c.b16 %v1547, %v1546
      %v1578 = vpack.c.b16 %v1549, %v1548
      %v1579 = vpack.c.b16 %v1551, %v1550
      %v1580 = vpack.c.b16 %v1553, %v1552
      %v1581 = vpack.c.b16 %v1555, %v1554
      %v1582 = vpack.c.b16 %v1557, %v1556
      %v1583 = vpack.c.b16 %v1559, %v1558
      %v1584 = vpack.c.b16 %v1561, %v1560
      %v1585 = vpack.c.b16 %v1563, %v1562
      %v1586 = vpack.c.b16 %v1565, %v1564
      %v1587 = vpack.c.b16 %v1567, %v1566
      %v1588 = vpack.c.b16 %v1569, %v1568
      %v1589 = vpack.c.b16 %v1571, %v1570
      %v1590 = vpack.c.b16 %v1573, %v1572
      %v1591 = vpack.c.b16 %v1575, %v1574
      %1608 = vmatpush.bf16.msra.mxu0 %v1583
      %1609 = vmatpush.bf16.msra.mxu0 %v1582
      %1610 = vmatpush.bf16.msra.mxu0 %v1581
      %1611 = vmatpush.bf16.msra.mxu0 %v1580
      %1612 = vmatpush.bf16.msra.mxu0 %v1579
      %1613 = vmatpush.bf16.msra.mxu0 %v1578
      %1614 = vmatpush.bf16.msra.mxu0 %v1577
      %1615 = vmatpush.bf16.msra.mxu0 %v1576
      %1616 = vmatmul.bf16.gmra.mxu0 %v1474
      %v1617 = vpop.f32.mrf.mxu0
      %v1618 = vadd.f32 %v1510, %v1617
      %v1619 = vpop.f32.mrf.mxu0
      %1620 = vdwg.mxu0
      %1621 = vmatpush.bf16.msra.mxu0 %v1591
      %1622 = vmatpush.bf16.msra.mxu0 %v1590
      %1623 = vmatpush.bf16.msra.mxu0 %v1589
      %1624 = vmatpush.bf16.msra.mxu0 %v1588
      %1625 = vmatpush.bf16.msra.mxu0 %v1587
      %1626 = vmatpush.bf16.msra.mxu0 %v1586
      %1627 = vmatpush.bf16.msra.mxu0 %v1585
      %1628 = vmatpush.bf16.msra.mxu0 %v1584
      %1629 = vmatmul.bf16.gmra.mxu0 %v1475
      %v1630 = vpop.f32.mrf.mxu0
      %v1631 = vadd.f32 %v1618, %v1630
      %v1632 = vpop.f32.mrf.mxu0
      %1633 = vdwg.mxu0
      %1634 = vst [vmem:[#allocation14] sm:$0xff] %v1631
    $region69: #{fused_s0.1} parent=1 // pred_fallthru
      _
    // Predicated region
    $region70: #{fused_s0.1} parent=1 // pred_check
      _
    $region71: #{fused_s0.1} parent=1 // pred_check_branch
      %1636 = sbr.rel (0) target = $region73
    $region72: #{fused_s0.1} parent=1 // pred_region
      %1638 = vsyncadd [#allocation5], 96
      %s1639 = sshll.u32 [#allocation14], 4
      %s1640 = int_to_ptr.vmem [resolvable:$true] %s1639
      %s1641 = sshll.u32 %s9, 4
      %s1642 = int_to_ptr.hbm [resolvable:$true] %s1641
      %1647 = dma.vmem_to_hbm [thread:$0]  %s1640, 32, %s1642, [#allocation5], 32, 32, 2
    $region73: #{fused_s0.1} parent=1 // pred_fallthru
      _
    // Predicated region
    $region74: #{fused_s0.1} parent=1 // pred_check
      _
    $region75: #{fused_s0.1} parent=1 // pred_check_branch
      %1649 = sbr.rel (0) target = $region77
    $region76: #{fused_s0.1} parent=1 // pred_region
      %1651 = dma.done [#allocation5], 128
    $region77: #{fused_s0.1} parent=1 // pred_fallthru
      _
    %1652 = vsyncpa [#allocation4], 1
    %1653 = vsyncpa [#allocation7], 1
    %1654 = vsyncpa [#allocation10], 1
    %1655 = vsyncpa [#allocation13], 1
    %1656 = vsyncpa [#allocation5], 1

</llo_original>
